<compile_context>
chip_gen: v6e
topology: v6e:2x2x1
jax: 0.10.0
libtpu: 0.0.40
codegen_flags: <defaults>
</compile_context>

<pallas_src>
import functools

import jax
import jax.numpy as jnp
from jax import lax
from jax.experimental import pallas as pl
from jax.experimental.pallas import tpu as pltpu


def _round_up(x, m):
    return (x + m - 1) // m * m


def _sigmoid(x):
    # sigmoid via tanh: exact, stays on the EUP, no VPU divide.
    return 0.5 * (jnp.tanh(0.5 * x) + 1.0)


def _vmem_limit_bytes():
    """75% of physical VMEM (96 MiB on v5e/v6e, 48 MiB on v7x); safe fallback."""
    try:
        cap = int(pltpu.get_tpu_info().vmem_capacity_bytes)
    except Exception:
        cap = 64 << 20
    return cap * 3 // 4


def _make_gru_attn_concat_kernel(n_layers, hp, s_real):
    """GRU (one step, n_layers) + dot attention + tanh(concat Linear)."""

    def kernel(emb_ref, h0_ref, enc_ref, enct_ref,
               w_ih_ref, w_hh_ref, b_ih_ref, b_hh_ref,
               w_ca_ref, w_cb_ref, b_cat_ref,
               concat_ref, hnew_ref):
        # ---- multi-layer GRU, one time step (torch gate order [r; z; n]) ----
        x = emb_ref[...]                                          # (Bp, Hp) bf16
        for l in range(n_layers):                                 # static unroll
            h_prev = h0_ref[l]                                    # (Bp, Hp) f32
            x_b = x.astype(jnp.bfloat16)
            h_b = h_prev.astype(jnp.bfloat16)

            def gate_pair(g):
                # hp is a multiple of 128 -> gate slices are tile-aligned.
                sl = slice(g * hp, (g + 1) * hp)
                gi = jnp.dot(x_b, w_ih_ref[l, :, sl],
                             preferred_element_type=jnp.float32) + b_ih_ref[l, :, sl]
                gh = jnp.dot(h_b, w_hh_ref[l, :, sl],
                             preferred_element_type=jnp.float32) + b_hh_ref[l, :, sl]
                return gi, gh

            gi_r, gh_r = gate_pair(0)
            r = _sigmoid(gi_r + gh_r)
            gi_z, gh_z = gate_pair(1)
            z = _sigmoid(gi_z + gh_z)
            gi_n, gh_n = gate_pair(2)
            n = jnp.tanh(gi_n + r * gh_n)
            h_new = (1.0 - z) * n + z * h_prev
            hnew_ref[l] = h_new
            x = h_new                                             # next layer input
        rnn_out = x                                               # (Bp, Hp) f32

        # ---- "dot" attention on the MXU (lane-dense K via pre-transposed enc)
        q = rnn_out.astype(jnp.bfloat16)[:, None, :]              # (Bp, 1, Hp)
        scores = jnp.einsum('bqh,bhs->bqs', q, enct_ref[...],
                            preferred_element_type=jnp.float32)   # (Bp, 1, Sp)
        if s_real < scores.shape[-1]:                             # mask padded S
            s_ids = lax.broadcasted_iota(jnp.int32, scores.shape, 2)
            scores = jnp.where(s_ids < s_real, scores, -1e30)
        scores = scores - jnp.max(scores, axis=-1, keepdims=True)
        e = jnp.exp(scores)
        attn = e / jnp.sum(e, axis=-1, keepdims=True)             # exact; (Bp,1,1) denom
        context = jnp.einsum('bqs,bsh->bqh', attn.astype(jnp.bfloat16),
                             enc_ref[...],
                             preferred_element_type=jnp.float32)[:, 0, :]

        # ---- concat -> tanh(Linear), split halves (no lane-axis concat) -----
        concat = jnp.tanh(
            jnp.dot(rnn_out.astype(jnp.bfloat16), w_ca_ref[...],
                    preferred_element_type=jnp.float32)
            + jnp.dot(context.astype(jnp.bfloat16), w_cb_ref[...],
                      preferred_element_type=jnp.float32)
            + b_cat_ref[...])
        concat_ref[...] = concat.astype(jnp.bfloat16)

    return kernel


def _proj_kernel(concat_ref, w_out_ref, b_out_ref, logits_ref):
    # (Bp,Hp) bf16 x (Hp,Vt) bf16 -> f32 logits tile (lane-dense).
    logits_ref[...] = (jnp.dot(concat_ref[...], w_out_ref[...],
                               preferred_element_type=jnp.float32)
                       + b_out_ref[...])


def prepare_params(p, hidden_size, output_size):
    """One-time TPU layout prep: pad to tiles, pre-transpose, split the concat
    linear into (rnn, context) halves, store weights bf16 (biases f32), and pad
    w_out/b_out so the vocab dim is a multiple of the projection tile Vt."""
    H, V = hidden_size, output_size
    L = p['w_ih'].shape[0]
    Hp = _round_up(H, 128)
    Vt = min(2048, _round_up(V, 128))     # same rule re-derived in decoder_forward
    Vp = _round_up(V, Vt)
    wdt = jnp.bfloat16

    def pad2(x, rows, cols):
        return jnp.pad(x, ((0, rows - x.shape[0]), (0, cols - x.shape[1])))

    def prep_gru_w(w):                    # (L, 3H, H) -> (L, Hp, 3Hp), per-gate padded
        w = w.reshape(L, 3, H, H)
        w = jnp.pad(w, ((0, 0), (0, 0), (0, Hp - H), (0, Hp - H)))
        return jnp.transpose(w, (0, 3, 1, 2)).reshape(L, Hp, 3 * Hp).astype(wdt)

    def prep_gru_b(b):                    # (L, 1, 3H) -> (L, 1, 3Hp), kept f32
        b = b.reshape(L, 3, H)
        b = jnp.pad(b, ((0, 0), (0, 0), (0, Hp - H)))
        return b.reshape(L, 1, 3 * Hp).astype(jnp.float32)

    w_cat = p['w_concat']                 # (H, 2H): [rnn | context] input halves
    return {
        'embedding': jnp.pad(p['embedding'], ((0, 0), (0, Hp - H))).astype(wdt),
        'w_ih': prep_gru_w(p['w_ih']),
        'w_hh': prep_gru_w(p['w_hh']),
        'b_ih': prep_gru_b(p['b_ih']),
        'b_hh': prep_gru_b(p['b_hh']),
        'w_ca': pad2(w_cat[:, :H].T, Hp, Hp).astype(wdt),
        'w_cb': pad2(w_cat[:, H:].T, Hp, Hp).astype(wdt),
        'b_cat': jnp.pad(p['b_concat'], ((0, 0), (0, Hp - H))).astype(jnp.float32),
        'w_out': pad2(p['w_out'].T, Hp, Vp).astype(wdt),
        'b_out': jnp.pad(p['b_out'], ((0, 0), (0, Vp - V))).astype(jnp.float32),
    }


def prepare_encoder(encoder_outputs, prepped):
    """Hoisted once-per-sequence encoder layout: (S,B,H) -> padded bf16
    (Bp,Sp,Hp) plus its (Bp,Hp,Sp) transpose (lane-dense K for the scores dot).
    Reuse the result for every decode step of the sequence."""
    S, B, H = encoder_outputs.shape
    Hp = prepped['w_ca'].shape[0]
    Bp = _round_up(B, 8)
    Sp = _round_up(S, 8)
    enc = jnp.transpose(encoder_outputs, (1, 0, 2))                 # (B, S, H)
    enc = jnp.pad(enc, ((0, Bp - B), (0, Sp - S), (0, Hp - H))).astype(jnp.bfloat16)
    enc_t = jnp.transpose(enc, (0, 2, 1))                           # (Bp, Hp, Sp)
    return enc, enc_t


@functools.partial(jax.jit, static_argnames=('output_size', 'seq_len'))
def decoder_forward(input_step, last_hidden, enc, enc_t, prepped, *,
                    output_size, seq_len):
    """input_step: (1,B) int32; last_hidden: (L,B,H) f32; enc/enc_t from
    prepare_encoder. Returns (softmax probs (B,V), new hidden (L,B,H))."""
    L, B, H = last_hidden.shape
    V = output_size
    Hp = prepped['w_ca'].shape[0]
    Vp = prepped['w_out'].shape[1]
    Vt = min(2048, Vp)                     # matches prepare_params' choice
    assert Vp % Vt == 0
    Bp, Sp = enc.shape[0], enc.shape[1]
    vmem_limit = _vmem_limit_bytes()

    # Embedding lookup (+ eval-mode dropout == identity) is wrapper glue.
    emb = jnp.take(prepped['embedding'], input_step[0], axis=0)         # (B, Hp) bf16
    emb = jnp.pad(emb, ((0, Bp - B), (0, 0)))
    h0 = jnp.pad(last_hidden, ((0, 0), (0, Bp - B), (0, Hp - H)))

    # ---- call 1: GRU + attention + concat (single invocation, all resident) --
    gru_kernel = _make_gru_attn_concat_kernel(L, Hp, seq_len)
    gru_flops = 12 * L * Bp * Hp * Hp + 4 * Bp * Sp * Hp + 4 * Bp * Hp * Hp
    gru_bytes = (2 * (emb.size + enc.size + enc_t.size + prepped['w_ih'].size
                      + prepped['w_hh'].size + prepped['w_ca'].size
                      + prepped['w_cb'].size + Bp * Hp)
                 + 4 * (h0.size + prepped['b_ih'].size + prepped['b_hh'].size
                        + prepped['b_cat'].size + L * Bp * Hp))

    concat_act, h_new = pl.pallas_call(
        gru_kernel,
        out_shape=(jax.ShapeDtypeStruct((Bp, Hp), jnp.bfloat16),
                   jax.ShapeDtypeStruct((L, Bp, Hp), jnp.float32)),
        grid_spec=pltpu.PrefetchScalarGridSpec(
            num_scalar_prefetch=0,
            grid=(1,),
            in_specs=[
                pl.BlockSpec((Bp, Hp), lambda i: (0, 0)),              # embedded
                pl.BlockSpec((L, Bp, Hp), lambda i: (0, 0, 0)),        # last_hidden
                pl.BlockSpec((Bp, Sp, Hp), lambda i: (0, 0, 0)),       # enc
                pl.BlockSpec((Bp, Hp, Sp), lambda i: (0, 0, 0)),       # enc^T
                pl.BlockSpec((L, Hp, 3 * Hp), lambda i: (0, 0, 0)),    # w_ih (pre-T)
                pl.BlockSpec((L, Hp, 3 * Hp), lambda i: (0, 0, 0)),    # w_hh (pre-T)
                pl.BlockSpec((L, 1, 3 * Hp), lambda i: (0, 0, 0)),     # b_ih (f32)
                pl.BlockSpec((L, 1, 3 * Hp), lambda i: (0, 0, 0)),     # b_hh (f32)
                pl.BlockSpec((Hp, Hp), lambda i: (0, 0)),              # w_concat rnn half
                pl.BlockSpec((Hp, Hp), lambda i: (0, 0)),              # w_concat ctx half
                pl.BlockSpec((1, Hp), lambda i: (0, 0)),               # b_concat (f32)
            ],
            out_specs=(pl.BlockSpec((Bp, Hp), lambda i: (0, 0)),       # concat act
                       pl.BlockSpec((L, Bp, Hp), lambda i: (0, 0, 0)))),
        compiler_params=pltpu.CompilerParams(
            dimension_semantics=("arbitrary",),
            vmem_limit_bytes=vmem_limit),
        cost_estimate=pl.CostEstimate(
            flops=gru_flops,
            transcendentals=Bp * (3 * L * Hp + Sp + Hp),
            bytes_accessed=gru_bytes),
    )(emb, h0, enc, enc_t,
      prepped['w_ih'], prepped['w_hh'], prepped['b_ih'], prepped['b_hh'],
      prepped['w_ca'], prepped['w_cb'], prepped['b_cat'])

    # ---- call 2: vocab projection, V-tiled + megacore-parallel ---------------
    proj_flops = 2 * Bp * Hp * Vp
    proj_bytes = 2 * (Bp * Hp + Hp * Vp) + 4 * (Vp + Bp * Vp)
    logits = pl.pallas_call(
        _proj_kernel,
        out_shape=jax.ShapeDtypeStruct((Bp, Vp), jnp.float32),
        grid_spec=pltpu.PrefetchScalarGridSpec(
            num_scalar_prefetch=0,
            grid=(Vp // Vt,),
            in_specs=[
                pl.BlockSpec((Bp, Hp), lambda j: (0, 0)),              # concat act (bf16)
                pl.BlockSpec((Hp, Vt), lambda j: (0, j)),              # w_out V-tile (bf16)
                pl.BlockSpec((1, Vt), lambda j: (0, j)),               # b_out V-tile (f32)
            ],
            out_specs=pl.BlockSpec((Bp, Vt), lambda j: (0, j))),       # lane-dense logits
        compiler_params=pltpu.CompilerParams(
            dimension_semantics=("parallel",),
            vmem_limit_bytes=vmem_limit),
        cost_estimate=pl.CostEstimate(flops=proj_flops, transcendentals=0,
                                      bytes_accessed=proj_bytes),
    )(concat_act, prepped['w_out'], prepped['b_out'])

    # Exact softmax over the real vocab on the sliced, unpadded logits.
    output = jax.nn.softmax(logits[:B, :V], axis=1)
    return output, h_new[:, :B, :H]


def decoder_reference(input_step, last_hidden, encoder_outputs, p):
    """Pure-JAX f32 reference mirroring the PyTorch forward (eval mode)."""
    x = jnp.take(p['embedding'], input_step[0], axis=0)
    H = x.shape[1]
    hs = []
    for l in range(last_hidden.shape[0]):
        h = last_hidden[l]
        gi = x @ p['w_ih'][l].T + p['b_ih'][l, 0]
        gh = h @ p['w_hh'][l].T + p['b_hh'][l, 0]
        r = jax.nn.sigmoid(gi[:, :H] + gh[:, :H])
        z = jax.nn.sigmoid(gi[:, H:2 * H] + gh[:, H:2 * H])
        n = jnp.tanh(gi[:, 2 * H:] + r * gh[:, 2 * H:])
        h_new = (1.0 - z) * n + z * h
        hs.append(h_new)
        x = h_new
    rnn_out = x
    scores = jnp.einsum('bh,sbh->bs', rnn_out, encoder_outputs)
    attn = jax.nn.softmax(scores, axis=1)
    context = jnp.einsum('bs,sbh->bh', attn, encoder_outputs)
    cat = jnp.concatenate([rnn_out, context], axis=1)
    co = jnp.tanh(cat @ p['w_concat'].T + p['b_concat'][0])
    logits = co @ p['w_out'].T + p['b_out'][0]
    return jax.nn.softmax(logits, axis=1), jnp.stack(hs)


def init_params(key, vocab, hidden, n_layers, output_size):
    ks = jax.random.split(key, 10)
    s = 0.1
    return {
        'embedding': jax.random.normal(ks[0], (vocab, hidden), jnp.float32) * s,
        'w_ih': jax.random.normal(ks[1], (n_layers, 3 * hidden, hidden), jnp.float32) * s,
        'w_hh': jax.random.normal(ks[2], (n_layers, 3 * hidden, hidden), jnp.float32) * s,
        'b_ih': jax.random.normal(ks[3], (n_layers, 1, 3 * hidden), jnp.float32) * s,
        'b_hh': jax.random.normal(ks[4], (n_layers, 1, 3 * hidden), jnp.float32) * s,
        'w_concat': jax.random.normal(ks[5], (hidden, 2 * hidden), jnp.float32) * s,
        'b_concat': jax.random.normal(ks[6], (1, hidden), jnp.float32) * s,
        'w_out': jax.random.normal(ks[7], (output_size, hidden), jnp.float32) * s,
        'b_out': jax.random.normal(ks[8], (1, output_size), jnp.float32) * s,
    }


if __name__ == "__main__":
    B, H, L, S, VOCAB, V = 2, 32, 2, 8, 20, 16

    key = jax.random.PRNGKey(0)
    kp, k1, k2, k3 = jax.random.split(key, 4)
    params = init_params(kp, VOCAB, H, L, V)

    input_step = jax.random.randint(k1, (1, B), 0, VOCAB, dtype=jnp.int32)     # (1, B)
    last_hidden = jax.random.normal(k2, (L, B, H), jnp.float32)                # (L, B, H)
    encoder_outputs = jax.random.normal(k3, (S, B, H), jnp.float32)            # (S, B, H)

    prepped = prepare_params(params, H, V)                  # once per model
    enc, enc_t = prepare_encoder(encoder_outputs, prepped)  # once per sequence
    # NOTE: batch multiple decode streams/beams into one call where possible —
    # the projection is w_out-bandwidth bound, so extra batch rows are ~free.

    out, hidden = decoder_forward(input_step, last_hidden, enc, enc_t, prepped,
                                  output_size=V, seq_len=S)
    jax.block_until_ready((out, hidden))

    ref_out, ref_hidden = decoder_reference(input_step, last_hidden, encoder_outputs, params)
    assert out.shape == (B, V) and hidden.shape == (L, B, H)
    # bf16 weights + bf16-cast activations on the MXU (f32 accumulation) vs the
    # f32 reference: expected deviation ~1e-3..5e-3. Semantic errors (wrong gate
    # order, missing r on W_hn h, bad attention) would be O(0.1), so this still
    # catches them.
    assert jnp.allclose(hidden, ref_hidden, atol=2e-2, rtol=2e-2), "hidden mismatch"
    assert jnp.allclose(out, ref_out, atol=2e-2, rtol=2e-2), "output mismatch"

    print("KERNEL_OK")
</pallas_src>

<mosaic_0001>
module attributes {stable_mosaic.version = 11 : i64} {
  func.func @_proj_kernel(%arg0: i32, %arg1: memref<8x128xbf16, #tpu.memory_space<vmem>>, %arg2: memref<128x128xbf16, #tpu.memory_space<vmem>>, %arg3: memref<1x128xf32, #tpu.memory_space<vmem>>, %arg4: memref<8x128xf32, #tpu.memory_space<vmem>>) attributes {dimension_semantics = [#tpu.dimension_semantics<parallel>], iteration_bounds = array<i64: 1>, scalar_prefetch = 0 : i64, scratch_operands = 0 : i64, tpu.core_type = #tpu.core_type<tc>, window_params = [{pipeline_mode = #tpu.pipeline_mode<synchronous>, transform_indices = @transform_0, window_bounds = array<i64: 8, 128>}, {transform_indices = @transform_1, window_bounds = array<i64: 128, 128>}, {transform_indices = @transform_2, window_bounds = array<i64: 1, 128>}, {transform_indices = @transform_3, window_bounds = array<i64: 8, 128>}]} {
    %c0 = arith.constant 0 : index
    %c0_0 = arith.constant 0 : index
    %0 = vector.load %arg1[%c0, %c0_0] : memref<8x128xbf16, #tpu.memory_space<vmem>>, vector<8x128xbf16>
    %c0_1 = arith.constant 0 : index
    %c0_2 = arith.constant 0 : index
    %1 = vector.load %arg2[%c0_1, %c0_2] : memref<128x128xbf16, #tpu.memory_space<vmem>>, vector<128x128xbf16>
    %cst = arith.constant dense<0.000000e+00> : vector<8x128xf32>
    %2 = tpu.matmul %0, %1, %cst {dimension_numbers = #tpu.dot_dimension_numbers<[1], [0], [0], [1], [0, 0, 1, 1], [], []>} : vector<8x128xbf16>, vector<128x128xbf16>, vector<8x128xf32> -> vector<8x128xf32>
    %c0_3 = arith.constant 0 : index
    %c0_4 = arith.constant 0 : index
    %3 = vector.load %arg3[%c0_3, %c0_4] : memref<1x128xf32, #tpu.memory_space<vmem>>, vector<1x128xf32>
    %4 = vector.broadcast %3 : vector<1x128xf32> to vector<8x128xf32>
    %5 = arith.addf %2, %4 : vector<8x128xf32>
    %c0_5 = arith.constant 0 : index
    %c0_6 = arith.constant 0 : index
    %6 = vector.load %arg4[%c0_5, %c0_6] : memref<8x128xf32, #tpu.memory_space<vmem>>, vector<8x128xf32>
    tpu.vector_store %arg4[%c0_5, %c0_6], %5 {strides = array<i32>} : memref<8x128xf32, #tpu.memory_space<vmem>>, vector<8x128xf32>,
    return
  }
  func.func @transform_0(%arg0: i32) -> (i32, i32) {
    %c0_i32 = arith.constant 0 : i32
    %c0_i32_0 = arith.constant 0 : i32
    %c0_i32_1 = arith.constant 0 : i32
    return %c0_i32, %c0_i32_0 : i32, i32
  }
  func.func @transform_1(%arg0: i32) -> (i32, i32) {
    %c0_i32 = arith.constant 0 : i32
    %c0_i32_0 = arith.constant 0 : i32
    return %c0_i32, %arg0 : i32, i32
  }
  func.func @transform_2(%arg0: i32) -> (i32, i32) {
    %c0_i32 = arith.constant 0 : i32
    %c0_i32_0 = arith.constant 0 : i32
    return %c0_i32, %arg0 : i32, i32
  }
  func.func @transform_3(%arg0: i32) -> (i32, i32) {
    %c0_i32 = arith.constant 0 : i32
    %c0_i32_0 = arith.constant 0 : i32
    return %c0_i32, %arg0 : i32, i32
  }
}

module attributes {stable_mosaic.version = 11 : i64} {
  func.func @kernel(%arg0: i32, %arg1: memref<8x128xbf16, #tpu.memory_space<vmem>>, %arg2: memref<2x8x128xf32, #tpu.memory_space<vmem>>, %arg3: memref<8x8x128xbf16, #tpu.memory_space<vmem>>, %arg4: memref<8x128x8xbf16, #tpu.memory_space<vmem>>, %arg5: memref<2x128x384xbf16, #tpu.memory_space<vmem>>, %arg6: memref<2x128x384xbf16, #tpu.memory_space<vmem>>, %arg7: memref<2x1x384xf32, #tpu.memory_space<vmem>>, %arg8: memref<2x1x384xf32, #tpu.memory_space<vmem>>, %arg9: memref<128x128xbf16, #tpu.memory_space<vmem>>, %arg10: memref<128x128xbf16, #tpu.memory_space<vmem>>, %arg11: memref<1x128xf32, #tpu.memory_space<vmem>>, %arg12: memref<8x128xbf16, #tpu.memory_space<vmem>>, %arg13: memref<2x8x128xf32, #tpu.memory_space<vmem>>) attributes {dimension_semantics = [#tpu.dimension_semantics<arbitrary>], iteration_bounds = array<i64: 1>, scalar_prefetch = 0 : i64, scratch_operands = 0 : i64, tpu.core_type = #tpu.core_type<tc>, window_params = [{pipeline_mode = #tpu.pipeline_mode<synchronous>, transform_indices = @transform_0, window_bounds = array<i64: 8, 128>}, {pipeline_mode = #tpu.pipeline_mode<synchronous>, transform_indices = @transform_1, window_bounds = array<i64: 2, 8, 128>}, {pipeline_mode = #tpu.pipeline_mode<synchronous>, transform_indices = @transform_2, window_bounds = array<i64: 8, 8, 128>}, {pipeline_mode = #tpu.pipeline_mode<synchronous>, transform_indices = @transform_3, window_bounds = array<i64: 8, 128, 8>}, {pipeline_mode = #tpu.pipeline_mode<synchronous>, transform_indices = @transform_4, window_bounds = array<i64: 2, 128, 384>}, {pipeline_mode = #tpu.pipeline_mode<synchronous>, transform_indices = @transform_5, window_bounds = array<i64: 2, 128, 384>}, {pipeline_mode = #tpu.pipeline_mode<synchronous>, transform_indices = @transform_6, window_bounds = array<i64: 2, 1, 384>}, {pipeline_mode = #tpu.pipeline_mode<synchronous>, transform_indices = @transform_7, window_bounds = array<i64: 2, 1, 384>}, {pipeline_mode = #tpu.pipeline_mode<synchronous>, transform_indices = @transform_8, window_bounds = array<i64: 128, 128>}, {pipeline_mode = #tpu.pipeline_mode<synchronous>, transform_indices = @transform_9, window_bounds = array<i64: 128, 128>}, {pipeline_mode = #tpu.pipeline_mode<synchronous>, transform_indices = @transform_10, window_bounds = array<i64: 1, 128>}, {pipeline_mode = #tpu.pipeline_mode<synchronous>, transform_indices = @transform_11, window_bounds = array<i64: 8, 128>}, {pipeline_mode = #tpu.pipeline_mode<synchronous>, transform_indices = @transform_12, window_bounds = array<i64: 2, 8, 128>}]} {
    %c0 = arith.constant 0 : index
    %c0_0 = arith.constant 0 : index
    %0 = vector.load %arg1[%c0, %c0_0] : memref<8x128xbf16, #tpu.memory_space<vmem>>, vector<8x128xbf16>
    %c0_1 = arith.constant 0 : index
    %c0_2 = arith.constant 0 : index
    %c0_3 = arith.constant 0 : index
    %1 = vector.load %arg2[%c0_1, %c0_2, %c0_3] : memref<2x8x128xf32, #tpu.memory_space<vmem>>, vector<1x8x128xf32>
    %2 = vector.shape_cast %1 : vector<1x8x128xf32> to vector<8x128xf32>
    %3 = arith.truncf %2 : vector<8x128xf32> to vector<8x128xbf16>
    %c0_4 = arith.constant 0 : index
    %c0_5 = arith.constant 0 : index
    %c0_6 = arith.constant 0 : index
    %4 = vector.load %arg5[%c0_4, %c0_5, %c0_6] : memref<2x128x384xbf16, #tpu.memory_space<vmem>>, vector<1x128x128xbf16>
    %5 = vector.shape_cast %4 : vector<1x128x128xbf16> to vector<128x128xbf16>
    %cst = arith.constant dense<0.000000e+00> : vector<8x128xf32>
    %6 = tpu.matmul %0, %5, %cst {dimension_numbers = #tpu.dot_dimension_numbers<[1], [0], [0], [1], [0, 0, 1, 1], [], []>} : vector<8x128xbf16>, vector<128x128xbf16>, vector<8x128xf32> -> vector<8x128xf32>
    %c0_7 = arith.constant 0 : index
    %c0_8 = arith.constant 0 : index
    %c0_9 = arith.constant 0 : index
    %7 = vector.load %arg7[%c0_7, %c0_8, %c0_9] : memref<2x1x384xf32, #tpu.memory_space<vmem>>, vector<1x1x128xf32>
    %8 = vector.shape_cast %7 : vector<1x1x128xf32> to vector<1x128xf32>
    %9 = vector.broadcast %8 : vector<1x128xf32> to vector<8x128xf32>
    %10 = arith.addf %6, %9 : vector<8x128xf32>
    %c0_10 = arith.constant 0 : index
    %c0_11 = arith.constant 0 : index
    %c0_12 = arith.constant 0 : index
    %11 = vector.load %arg6[%c0_10, %c0_11, %c0_12] : memref<2x128x384xbf16, #tpu.memory_space<vmem>>, vector<1x128x128xbf16>
    %12 = vector.shape_cast %11 : vector<1x128x128xbf16> to vector<128x128xbf16>
    %cst_13 = arith.constant dense<0.000000e+00> : vector<8x128xf32>
    %13 = tpu.matmul %3, %12, %cst_13 {dimension_numbers = #tpu.dot_dimension_numbers<[1], [0], [0], [1], [0, 0, 1, 1], [], []>} : vector<8x128xbf16>, vector<128x128xbf16>, vector<8x128xf32> -> vector<8x128xf32>
    %c0_14 = arith.constant 0 : index
    %c0_15 = arith.constant 0 : index
    %c0_16 = arith.constant 0 : index
    %14 = vector.load %arg8[%c0_14, %c0_15, %c0_16] : memref<2x1x384xf32, #tpu.memory_space<vmem>>, vector<1x1x128xf32>
    %15 = vector.shape_cast %14 : vector<1x1x128xf32> to vector<1x128xf32>
    %16 = vector.broadcast %15 : vector<1x128xf32> to vector<8x128xf32>
    %17 = arith.addf %13, %16 : vector<8x128xf32>
    %18 = arith.addf %10, %17 : vector<8x128xf32>
    %cst_17 = arith.constant 5.000000e-01 : f32
    %19 = vector.broadcast %cst_17 : f32 to vector<8x128xf32>
    %20 = arith.mulf %19, %18 : vector<8x128xf32>
    %21 = math.tanh %20 : vector<8x128xf32>
    %cst_18 = arith.constant 1.000000e+00 : f32
    %22 = vector.broadcast %cst_18 : f32 to vector<8x128xf32>
    %23 = arith.addf %21, %22 : vector<8x128xf32>
    %cst_19 = arith.constant 5.000000e-01 : f32
    %24 = vector.broadcast %cst_19 : f32 to vector<8x128xf32>
    %25 = arith.mulf %24, %23 : vector<8x128xf32>
    %c0_20 = arith.constant 0 : index
    %c0_21 = arith.constant 0 : index
    %c128 = arith.constant 128 : index
    %26 = vector.load %arg5[%c0_20, %c0_21, %c128] : memref<2x128x384xbf16, #tpu.memory_space<vmem>>, vector<1x128x128xbf16>
    %27 = vector.shape_cast %26 : vector<1x128x128xbf16> to vector<128x128xbf16>
    %cst_22 = arith.constant dense<0.000000e+00> : vector<8x128xf32>
    %28 = tpu.matmul %0, %27, %cst_22 {dimension_numbers = #tpu.dot_dimension_numbers<[1], [0], [0], [1], [0, 0, 1, 1], [], []>} : vector<8x128xbf16>, vector<128x128xbf16>, vector<8x128xf32> -> vector<8x128xf32>
    %c0_23 = arith.constant 0 : index
    %c0_24 = arith.constant 0 : index
    %c128_25 = arith.constant 128 : index
    %29 = vector.load %arg7[%c0_23, %c0_24, %c128_25] : memref<2x1x384xf32, #tpu.memory_space<vmem>>, vector<1x1x128xf32>
    %30 = vector.shape_cast %29 : vector<1x1x128xf32> to vector<1x128xf32>
    %31 = vector.broadcast %30 : vector<1x128xf32> to vector<8x128xf32>
    %32 = arith.addf %28, %31 : vector<8x128xf32>
    %c0_26 = arith.constant 0 : index
    %c0_27 = arith.constant 0 : index
    %c128_28 = arith.constant 128 : index
    %33 = vector.load %arg6[%c0_26, %c0_27, %c128_28] : memref<2x128x384xbf16, #tpu.memory_space<vmem>>, vector<1x128x128xbf16>
    %34 = vector.shape_cast %33 : vector<1x128x128xbf16> to vector<128x128xbf16>
    %cst_29 = arith.constant dense<0.000000e+00> : vector<8x128xf32>
    %35 = tpu.matmul %3, %34, %cst_29 {dimension_numbers = #tpu.dot_dimension_numbers<[1], [0], [0], [1], [0, 0, 1, 1], [], []>} : vector<8x128xbf16>, vector<128x128xbf16>, vector<8x128xf32> -> vector<8x128xf32>
    %c0_30 = arith.constant 0 : index
    %c0_31 = arith.constant 0 : index
    %c128_32 = arith.constant 128 : index
    %36 = vector.load %arg8[%c0_30, %c0_31, %c128_32] : memref<2x1x384xf32, #tpu.memory_space<vmem>>, vector<1x1x128xf32>
    %37 = vector.shape_cast %36 : vector<1x1x128xf32> to vector<1x128xf32>
    %38 = vector.broadcast %37 : vector<1x128xf32> to vector<8x128xf32>
    %39 = arith.addf %35, %38 : vector<8x128xf32>
    %40 = arith.addf %32, %39 : vector<8x128xf32>
    %cst_33 = arith.constant 5.000000e-01 : f32
    %41 = vector.broadcast %cst_33 : f32 to vector<8x128xf32>
    %42 = arith.mulf %41, %40 : vector<8x128xf32>
    %43 = math.tanh %42 : vector<8x128xf32>
    %cst_34 = arith.constant 1.000000e+00 : f32
    %44 = vector.broadcast %cst_34 : f32 to vector<8x128xf32>
    %45 = arith.addf %43, %44 : vector<8x128xf32>
    %cst_35 = arith.constant 5.000000e-01 : f32
    %46 = vector.broadcast %cst_35 : f32 to vector<8x128xf32>
    %47 = arith.mulf %46, %45 : vector<8x128xf32>
    %c0_36 = arith.constant 0 : index
    %c0_37 = arith.constant 0 : index
    %c256 = arith.constant 256 : index
    %48 = vector.load %arg5[%c0_36, %c0_37, %c256] : memref<2x128x384xbf16, #tpu.memory_space<vmem>>, vector<1x128x128xbf16>
    %49 = vector.shape_cast %48 : vector<1x128x128xbf16> to vector<128x128xbf16>
    %cst_38 = arith.constant dense<0.000000e+00> : vector<8x128xf32>
    %50 = tpu.matmul %0, %49, %cst_38 {dimension_numbers = #tpu.dot_dimension_numbers<[1], [0], [0], [1], [0, 0, 1, 1], [], []>} : vector<8x128xbf16>, vector<128x128xbf16>, vector<8x128xf32> -> vector<8x128xf32>
    %c0_39 = arith.constant 0 : index
    %c0_40 = arith.constant 0 : index
    %c256_41 = arith.constant 256 : index
    %51 = vector.load %arg7[%c0_39, %c0_40, %c256_41] : memref<2x1x384xf32, #tpu.memory_space<vmem>>, vector<1x1x128xf32>
    %52 = vector.shape_cast %51 : vector<1x1x128xf32> to vector<1x128xf32>
    %53 = vector.broadcast %52 : vector<1x128xf32> to vector<8x128xf32>
    %54 = arith.addf %50, %53 : vector<8x128xf32>
    %c0_42 = arith.constant 0 : index
    %c0_43 = arith.constant 0 : index
    %c256_44 = arith.constant 256 : index
    %55 = vector.load %arg6[%c0_42, %c0_43, %c256_44] : memref<2x128x384xbf16, #tpu.memory_space<vmem>>, vector<1x128x128xbf16>
    %56 = vector.shape_cast %55 : vector<1x128x128xbf16> to vector<128x128xbf16>
    %cst_45 = arith.constant dense<0.000000e+00> : vector<8x128xf32>
    %57 = tpu.matmul %3, %56, %cst_45 {dimension_numbers = #tpu.dot_dimension_numbers<[1], [0], [0], [1], [0, 0, 1, 1], [], []>} : vector<8x128xbf16>, vector<128x128xbf16>, vector<8x128xf32> -> vector<8x128xf32>
    %c0_46 = arith.constant 0 : index
    %c0_47 = arith.constant 0 : index
    %c256_48 = arith.constant 256 : index
    %58 = vector.load %arg8[%c0_46, %c0_47, %c256_48] : memref<2x1x384xf32, #tpu.memory_space<vmem>>, vector<1x1x128xf32>
    %59 = vector.shape_cast %58 : vector<1x1x128xf32> to vector<1x128xf32>
    %60 = vector.broadcast %59 : vector<1x128xf32> to vector<8x128xf32>
    %61 = arith.addf %57, %60 : vector<8x128xf32>
    %62 = arith.mulf %25, %61 : vector<8x128xf32>
    %63 = arith.addf %54, %62 : vector<8x128xf32>
    %64 = math.tanh %63 : vector<8x128xf32>
    %cst_49 = arith.constant 1.000000e+00 : f32
    %65 = vector.broadcast %cst_49 : f32 to vector<8x128xf32>
    %66 = arith.subf %65, %47 : vector<8x128xf32>
    %67 = arith.mulf %66, %64 : vector<8x128xf32>
    %68 = arith.mulf %47, %2 : vector<8x128xf32>
    %69 = arith.addf %67, %68 : vector<8x128xf32>
    %c0_50 = arith.constant 0 : index
    %c0_51 = arith.constant 0 : index
    %c0_52 = arith.constant 0 : index
    %70 = vector.load %arg13[%c0_50, %c0_51, %c0_52] : memref<2x8x128xf32, #tpu.memory_space<vmem>>, vector<1x8x128xf32>
    %71 = vector.shape_cast %70 : vector<1x8x128xf32> to vector<8x128xf32>
    %72 = vector.shape_cast %69 : vector<8x128xf32> to vector<1x8x128xf32>
    tpu.vector_store %arg13[%c0_50, %c0_51, %c0_52], %72 {strides = array<i32>} : memref<2x8x128xf32, #tpu.memory_space<vmem>>, vector<1x8x128xf32>,
    %c1 = arith.constant 1 : index
    %c0_53 = arith.constant 0 : index
    %c0_54 = arith.constant 0 : index
    %73 = vector.load %arg2[%c1, %c0_53, %c0_54] : memref<2x8x128xf32, #tpu.memory_space<vmem>>, vector<1x8x128xf32>
    %74 = vector.shape_cast %73 : vector<1x8x128xf32> to vector<8x128xf32>
    %75 = arith.truncf %69 : vector<8x128xf32> to vector<8x128xbf16>
    %76 = arith.truncf %74 : vector<8x128xf32> to vector<8x128xbf16>
    %c1_55 = arith.constant 1 : index
    %c0_56 = arith.constant 0 : index
    %c0_57 = arith.constant 0 : index
    %77 = vector.load %arg5[%c1_55, %c0_56, %c0_57] : memref<2x128x384xbf16, #tpu.memory_space<vmem>>, vector<1x128x128xbf16>
    %78 = vector.shape_cast %77 : vector<1x128x128xbf16> to vector<128x128xbf16>
    %cst_58 = arith.constant dense<0.000000e+00> : vector<8x128xf32>
    %79 = tpu.matmul %75, %78, %cst_58 {dimension_numbers = #tpu.dot_dimension_numbers<[1], [0], [0], [1], [0, 0, 1, 1], [], []>} : vector<8x128xbf16>, vector<128x128xbf16>, vector<8x128xf32> -> vector<8x128xf32>
    %c1_59 = arith.constant 1 : index
    %c0_60 = arith.constant 0 : index
    %c0_61 = arith.constant 0 : index
    %80 = vector.load %arg7[%c1_59, %c0_60, %c0_61] : memref<2x1x384xf32, #tpu.memory_space<vmem>>, vector<1x1x128xf32>
    %81 = vector.shape_cast %80 : vector<1x1x128xf32> to vector<1x128xf32>
    %82 = vector.broadcast %81 : vector<1x128xf32> to vector<8x128xf32>
    %83 = arith.addf %79, %82 : vector<8x128xf32>
    %c1_62 = arith.constant 1 : index
    %c0_63 = arith.constant 0 : index
    %c0_64 = arith.constant 0 : index
    %84 = vector.load %arg6[%c1_62, %c0_63, %c0_64] : memref<2x128x384xbf16, #tpu.memory_space<vmem>>, vector<1x128x128xbf16>
    %85 = vector.shape_cast %84 : vector<1x128x128xbf16> to vector<128x128xbf16>
    %cst_65 = arith.constant dense<0.000000e+00> : vector<8x128xf32>
    %86 = tpu.matmul %76, %85, %cst_65 {dimension_numbers = #tpu.dot_dimension_numbers<[1], [0], [0], [1], [0, 0, 1, 1], [], []>} : vector<8x128xbf16>, vector<128x128xbf16>, vector<8x128xf32> -> vector<8x128xf32>
    %c1_66 = arith.constant 1 : index
    %c0_67 = arith.constant 0 : index
    %c0_68 = arith.constant 0 : index
    %87 = vector.load %arg8[%c1_66, %c0_67, %c0_68] : memref<2x1x384xf32, #tpu.memory_space<vmem>>, vector<1x1x128xf32>
    %88 = vector.shape_cast %87 : vector<1x1x128xf32> to vector<1x128xf32>
    %89 = vector.broadcast %88 : vector<1x128xf32> to vector<8x128xf32>
    %90 = arith.addf %86, %89 : vector<8x128xf32>
    %91 = arith.addf %83, %90 : vector<8x128xf32>
    %cst_69 = arith.constant 5.000000e-01 : f32
    %92 = vector.broadcast %cst_69 : f32 to vector<8x128xf32>
    %93 = arith.mulf %92, %91 : vector<8x128xf32>
    %94 = math.tanh %93 : vector<8x128xf32>
    %cst_70 = arith.constant 1.000000e+00 : f32
    %95 = vector.broadcast %cst_70 : f32 to vector<8x128xf32>
    %96 = arith.addf %94, %95 : vector<8x128xf32>
    %cst_71 = arith.constant 5.000000e-01 : f32
    %97 = vector.broadcast %cst_71 : f32 to vector<8x128xf32>
    %98 = arith.mulf %97, %96 : vector<8x128xf32>
    %c1_72 = arith.constant 1 : index
    %c0_73 = arith.constant 0 : index
    %c128_74 = arith.constant 128 : index
    %99 = vector.load %arg5[%c1_72, %c0_73, %c128_74] : memref<2x128x384xbf16, #tpu.memory_space<vmem>>, vector<1x128x128xbf16>
    %100 = vector.shape_cast %99 : vector<1x128x128xbf16> to vector<128x128xbf16>
    %cst_75 = arith.constant dense<0.000000e+00> : vector<8x128xf32>
    %101 = tpu.matmul %75, %100, %cst_75 {dimension_numbers = #tpu.dot_dimension_numbers<[1], [0], [0], [1], [0, 0, 1, 1], [], []>} : vector<8x128xbf16>, vector<128x128xbf16>, vector<8x128xf32> -> vector<8x128xf32>
    %c1_76 = arith.constant 1 : index
    %c0_77 = arith.constant 0 : index
    %c128_78 = arith.constant 128 : index
    %102 = vector.load %arg7[%c1_76, %c0_77, %c128_78] : memref<2x1x384xf32, #tpu.memory_space<vmem>>, vector<1x1x128xf32>
    %103 = vector.shape_cast %102 : vector<1x1x128xf32> to vector<1x128xf32>
    %104 = vector.broadcast %103 : vector<1x128xf32> to vector<8x128xf32>
    %105 = arith.addf %101, %104 : vector<8x128xf32>
    %c1_79 = arith.constant 1 : index
    %c0_80 = arith.constant 0 : index
    %c128_81 = arith.constant 128 : index
    %106 = vector.load %arg6[%c1_79, %c0_80, %c128_81] : memref<2x128x384xbf16, #tpu.memory_space<vmem>>, vector<1x128x128xbf16>
    %107 = vector.shape_cast %106 : vector<1x128x128xbf16> to vector<128x128xbf16>
    %cst_82 = arith.constant dense<0.000000e+00> : vector<8x128xf32>
    %108 = tpu.matmul %76, %107, %cst_82 {dimension_numbers = #tpu.dot_dimension_numbers<[1], [0], [0], [1], [0, 0, 1, 1], [], []>} : vector<8x128xbf16>, vector<128x128xbf16>, vector<8x128xf32> -> vector<8x128xf32>
    %c1_83 = arith.constant 1 : index
    %c0_84 = arith.constant 0 : index
    %c128_85 = arith.constant 128 : index
    %109 = vector.load %arg8[%c1_83, %c0_84, %c128_85] : memref<2x1x384xf32, #tpu.memory_space<vmem>>, vector<1x1x128xf32>
    %110 = vector.shape_cast %109 : vector<1x1x128xf32> to vector<1x128xf32>
    %111 = vector.broadcast %110 : vector<1x128xf32> to vector<8x128xf32>
    %112 = arith.addf %108, %111 : vector<8x128xf32>
    %113 = arith.addf %105, %112 : vector<8x128xf32>
    %cst_86 = arith.constant 5.000000e-01 : f32
    %114 = vector.broadcast %cst_86 : f32 to vector<8x128xf32>
    %115 = arith.mulf %114, %113 : vector<8x128xf32>
    %116 = math.tanh %115 : vector<8x128xf32>
    %cst_87 = arith.constant 1.000000e+00 : f32
    %117 = vector.broadcast %cst_87 : f32 to vector<8x128xf32>
    %118 = arith.addf %116, %117 : vector<8x128xf32>
    %cst_88 = arith.constant 5.000000e-01 : f32
    %119 = vector.broadcast %cst_88 : f32 to vector<8x128xf32>
    %120 = arith.mulf %119, %118 : vector<8x128xf32>
    %c1_89 = arith.constant 1 : index
    %c0_90 = arith.constant 0 : index
    %c256_91 = arith.constant 256 : index
    %121 = vector.load %arg5[%c1_89, %c0_90, %c256_91] : memref<2x128x384xbf16, #tpu.memory_space<vmem>>, vector<1x128x128xbf16>
    %122 = vector.shape_cast %121 : vector<1x128x128xbf16> to vector<128x128xbf16>
    %cst_92 = arith.constant dense<0.000000e+00> : vector<8x128xf32>
    %123 = tpu.matmul %75, %122, %cst_92 {dimension_numbers = #tpu.dot_dimension_numbers<[1], [0], [0], [1], [0, 0, 1, 1], [], []>} : vector<8x128xbf16>, vector<128x128xbf16>, vector<8x128xf32> -> vector<8x128xf32>
    %c1_93 = arith.constant 1 : index
    %c0_94 = arith.constant 0 : index
    %c256_95 = arith.constant 256 : index
    %124 = vector.load %arg7[%c1_93, %c0_94, %c256_95] : memref<2x1x384xf32, #tpu.memory_space<vmem>>, vector<1x1x128xf32>
    %125 = vector.shape_cast %124 : vector<1x1x128xf32> to vector<1x128xf32>
    %126 = vector.broadcast %125 : vector<1x128xf32> to vector<8x128xf32>
    %127 = arith.addf %123, %126 : vector<8x128xf32>
    %c1_96 = arith.constant 1 : index
    %c0_97 = arith.constant 0 : index
    %c256_98 = arith.constant 256 : index
    %128 = vector.load %arg6[%c1_96, %c0_97, %c256_98] : memref<2x128x384xbf16, #tpu.memory_space<vmem>>, vector<1x128x128xbf16>
    %129 = vector.shape_cast %128 : vector<1x128x128xbf16> to vector<128x128xbf16>
    %cst_99 = arith.constant dense<0.000000e+00> : vector<8x128xf32>
    %130 = tpu.matmul %76, %129, %cst_99 {dimension_numbers = #tpu.dot_dimension_numbers<[1], [0], [0], [1], [0, 0, 1, 1], [], []>} : vector<8x128xbf16>, vector<128x128xbf16>, vector<8x128xf32> -> vector<8x128xf32>
    %c1_100 = arith.constant 1 : index
    %c0_101 = arith.constant 0 : index
    %c256_102 = arith.constant 256 : index
    %131 = vector.load %arg8[%c1_100, %c0_101, %c256_102] : memref<2x1x384xf32, #tpu.memory_space<vmem>>, vector<1x1x128xf32>
    %132 = vector.shape_cast %131 : vector<1x1x128xf32> to vector<1x128xf32>
    %133 = vector.broadcast %132 : vector<1x128xf32> to vector<8x128xf32>
    %134 = arith.addf %130, %133 : vector<8x128xf32>
    %135 = arith.mulf %98, %134 : vector<8x128xf32>
    %136 = arith.addf %127, %135 : vector<8x128xf32>
    %137 = math.tanh %136 : vector<8x128xf32>
    %cst_103 = arith.constant 1.000000e+00 : f32
    %138 = vector.broadcast %cst_103 : f32 to vector<8x128xf32>
    %139 = arith.subf %138, %120 : vector<8x128xf32>
    %140 = arith.mulf %139, %137 : vector<8x128xf32>
    %141 = arith.mulf %120, %74 : vector<8x128xf32>
    %142 = arith.addf %140, %141 : vector<8x128xf32>
    %c1_104 = arith.constant 1 : index
    %c0_105 = arith.constant 0 : index
    %c0_106 = arith.constant 0 : index
    %143 = vector.load %arg13[%c1_104, %c0_105, %c0_106] : memref<2x8x128xf32, #tpu.memory_space<vmem>>, vector<1x8x128xf32>
    %144 = vector.shape_cast %143 : vector<1x8x128xf32> to vector<8x128xf32>
    %145 = vector.shape_cast %142 : vector<8x128xf32> to vector<1x8x128xf32>
    tpu.vector_store %arg13[%c1_104, %c0_105, %c0_106], %145 {strides = array<i32>} : memref<2x8x128xf32, #tpu.memory_space<vmem>>, vector<1x8x128xf32>,
    %146 = arith.truncf %142 : vector<8x128xf32> to vector<8x128xbf16>
    %147 = vector.shape_cast %146 : vector<8x128xbf16> to vector<8x1x128xbf16>
    %c0_107 = arith.constant 0 : index
    %c0_108 = arith.constant 0 : index
    %c0_109 = arith.constant 0 : index
    %148 = vector.load %arg4[%c0_107, %c0_108, %c0_109] : memref<8x128x8xbf16, #tpu.memory_space<vmem>>, vector<8x128x8xbf16>
    "tpu.trace_start"() <{level = 10 : i32, message = "bqh,bhs->bqs"}> : () -> ()
    %cst_110 = arith.constant dense<0.000000e+00> : vector<8x1x8xf32>
    %149 = tpu.matmul %147, %148, %cst_110 {dimension_numbers = #tpu.dot_dimension_numbers<[2], [1], [1], [2], [0, 0, 0, 1, 1, 2], [0], [0]>} : vector<8x1x128xbf16>, vector<8x128x8xbf16>, vector<8x1x8xf32> -> vector<8x1x8xf32>
    "tpu.trace_stop"() : () -> ()
    %cst_111 = arith.constant dense<0xFF800000> : vector<8x1xf32>
    %150 = vector.multi_reduction <maximumf>, %149, %cst_111 [2] : vector<8x1x8xf32> to vector<8x1xf32>
    %151 = vector.shape_cast %150 : vector<8x1xf32> to vector<8x1x1xf32>
    %152 = vector.broadcast %151 : vector<8x1x1xf32> to vector<8x1x8xf32>
    %153 = arith.subf %149, %152 : vector<8x1x8xf32>
    %154 = math.exp %153 : vector<8x1x8xf32>
    %cst_112 = arith.constant dense<0.000000e+00> : vector<8x1xf32>
    %155 = vector.multi_reduction <add>, %154, %cst_112 [2] : vector<8x1x8xf32> to vector<8x1xf32>
    %156 = vector.shape_cast %155 : vector<8x1xf32> to vector<8x1x1xf32>
    %157 = vector.broadcast %156 : vector<8x1x1xf32> to vector<8x1x8xf32>
    %158 = arith.divf %154, %157 : vector<8x1x8xf32>
    %159 = arith.truncf %158 : vector<8x1x8xf32> to vector<8x1x8xbf16>
    %c0_113 = arith.constant 0 : index
    %c0_114 = arith.constant 0 : index
    %c0_115 = arith.constant 0 : index
    %160 = vector.load %arg3[%c0_113, %c0_114, %c0_115] : memref<8x8x128xbf16, #tpu.memory_space<vmem>>, vector<8x8x128xbf16>
    "tpu.trace_start"() <{level = 10 : i32, message = "bqs,bsh->bqh"}> : () -> ()
    %cst_116 = arith.constant dense<0.000000e+00> : vector<8x1x128xf32>
    %161 = tpu.matmul %159, %160, %cst_116 {dimension_numbers = #tpu.dot_dimension_numbers<[2], [1], [1], [2], [0, 0, 0, 1, 1, 2], [0], [0]>} : vector<8x1x8xbf16>, vector<8x8x128xbf16>, vector<8x1x128xf32> -> vector<8x1x128xf32>
    "tpu.trace_stop"() : () -> ()
    %162 = vector.shape_cast %161 : vector<8x1x128xf32> to vector<8x128xf32>
    %163 = arith.truncf %142 : vector<8x128xf32> to vector<8x128xbf16>
    %c0_117 = arith.constant 0 : index
    %c0_118 = arith.constant 0 : index
    %164 = vector.load %arg9[%c0_117, %c0_118] : memref<128x128xbf16, #tpu.memory_space<vmem>>, vector<128x128xbf16>
    %cst_119 = arith.constant dense<0.000000e+00> : vector<8x128xf32>
    %165 = tpu.matmul %163, %164, %cst_119 {dimension_numbers = #tpu.dot_dimension_numbers<[1], [0], [0], [1], [0, 0, 1, 1], [], []>} : vector<8x128xbf16>, vector<128x128xbf16>, vector<8x128xf32> -> vector<8x128xf32>
    %166 = arith.truncf %162 : vector<8x128xf32> to vector<8x128xbf16>
    %c0_120 = arith.constant 0 : index
    %c0_121 = arith.constant 0 : index
    %167 = vector.load %arg10[%c0_120, %c0_121] : memref<128x128xbf16, #tpu.memory_space<vmem>>, vector<128x128xbf16>
    %cst_122 = arith.constant dense<0.000000e+00> : vector<8x128xf32>
    %168 = tpu.matmul %166, %167, %cst_122 {dimension_numbers = #tpu.dot_dimension_numbers<[1], [0], [0], [1], [0, 0, 1, 1], [], []>} : vector<8x128xbf16>, vector<128x128xbf16>, vector<8x128xf32> -> vector<8x128xf32>
    %169 = arith.addf %165, %168 : vector<8x128xf32>
    %c0_123 = arith.constant 0 : index
    %c0_124 = arith.constant 0 : index
    %170 = vector.load %arg11[%c0_123, %c0_124] : memref<1x128xf32, #tpu.memory_space<vmem>>, vector<1x128xf32>
    %171 = vector.broadcast %170 : vector<1x128xf32> to vector<8x128xf32>
    %172 = arith.addf %169, %171 : vector<8x128xf32>
    %173 = math.tanh %172 : vector<8x128xf32>
    %174 = arith.truncf %173 : vector<8x128xf32> to vector<8x128xbf16>
    %c0_125 = arith.constant 0 : index
    %c0_126 = arith.constant 0 : index
    %175 = vector.load %arg12[%c0_125, %c0_126] : memref<8x128xbf16, #tpu.memory_space<vmem>>, vector<8x128xbf16>
    tpu.vector_store %arg12[%c0_125, %c0_126], %174 {strides = array<i32>} : memref<8x128xbf16, #tpu.memory_space<vmem>>, vector<8x128xbf16>,
    return
  }
  func.func @transform_0(%arg0: i32) -> (i32, i32) {
    %c0_i32 = arith.constant 0 : i32
    %c0_i32_0 = arith.constant 0 : i32
    %c0_i32_1 = arith.constant 0 : i32
    return %c0_i32, %c0_i32_0 : i32, i32
  }
  func.func @transform_1(%arg0: i32) -> (i32, i32, i32) {
    %c0_i32 = arith.constant 0 : i32
    %c0_i32_0 = arith.constant 0 : i32
    %c0_i32_1 = arith.constant 0 : i32
    %c0_i32_2 = arith.constant 0 : i32
    return %c0_i32, %c0_i32_0, %c0_i32_1 : i32, i32, i32
  }
  func.func @transform_2(%arg0: i32) -> (i32, i32, i32) {
    %c0_i32 = arith.constant 0 : i32
    %c0_i32_0 = arith.constant 0 : i32
    %c0_i32_1 = arith.constant 0 : i32
    %c0_i32_2 = arith.constant 0 : i32
    return %c0_i32, %c0_i32_0, %c0_i32_1 : i32, i32, i32
  }
  func.func @transform_3(%arg0: i32) -> (i32, i32, i32) {
    %c0_i32 = arith.constant 0 : i32
    %c0_i32_0 = arith.constant 0 : i32
    %c0_i32_1 = arith.constant 0 : i32
    %c0_i32_2 = arith.constant 0 : i32
    return %c0_i32, %c0_i32_0, %c0_i32_1 : i32, i32, i32
  }
  func.func @transform_4(%arg0: i32) -> (i32, i32, i32) {
    %c0_i32 = arith.constant 0 : i32
    %c0_i32_0 = arith.constant 0 : i32
    %c0_i32_1 = arith.constant 0 : i32
    %c0_i32_2 = arith.constant 0 : i32
    return %c0_i32, %c0_i32_0, %c0_i32_1 : i32, i32, i32
  }
  func.func @transform_5(%arg0: i32) -> (i32, i32, i32) {
    %c0_i32 = arith.constant 0 : i32
    %c0_i32_0 = arith.constant 0 : i32
    %c0_i32_1 = arith.constant 0 : i32
    %c0_i32_2 = arith.constant 0 : i32
    return %c0_i32, %c0_i32_0, %c0_i32_1 : i32, i32, i32
  }
  func.func @transform_6(%arg0: i32) -> (i32, i32, i32) {
    %c0_i32 = arith.constant 0 : i32
    %c0_i32_0 = arith.constant 0 : i32
    %c0_i32_1 = arith.constant 0 : i32
    %c0_i32_2 = arith.constant 0 : i32
    return %c0_i32, %c0_i32_0, %c0_i32_1 : i32, i32, i32
  }
  func.func @transform_7(%arg0: i32) -> (i32, i32, i32) {
    %c0_i32 = arith.constant 0 : i32
    %c0_i32_0 = arith.constant 0 : i32
    %c0_i32_1 = arith.constant 0 : i32
    %c0_i32_2 = arith.constant 0 : i32
    return %c0_i32, %c0_i32_0, %c0_i32_1 : i32, i32, i32
  }
  func.func @transform_8(%arg0: i32) -> (i32, i32) {
    %c0_i32 = arith.constant 0 : i32
    %c0_i32_0 = arith.constant 0 : i32
    %c0_i32_1 = arith.constant 0 : i32
    return %c0_i32, %c0_i32_0 : i32, i32
  }
  func.func @transform_9(%arg0: i32) -> (i32, i32) {
    %c0_i32 = arith.constant 0 : i32
    %c0_i32_0 = arith.constant 0 : i32
    %c0_i32_1 = arith.constant 0 : i32
    return %c0_i32, %c0_i32_0 : i32, i32
  }
  func.func @transform_10(%arg0: i32) -> (i32, i32) {
    %c0_i32 = arith.constant 0 : i32
    %c0_i32_0 = arith.constant 0 : i32
    %c0_i32_1 = arith.constant 0 : i32
    return %c0_i32, %c0_i32_0 : i32, i32
  }
  func.func @transform_11(%arg0: i32) -> (i32, i32) {
    %c0_i32 = arith.constant 0 : i32
    %c0_i32_0 = arith.constant 0 : i32
    %c0_i32_1 = arith.constant 0 : i32
    return %c0_i32, %c0_i32_0 : i32, i32
  }
  func.func @transform_12(%arg0: i32) -> (i32, i32, i32) {
    %c0_i32 = arith.constant 0 : i32
    %c0_i32_0 = arith.constant 0 : i32
    %c0_i32_1 = arith.constant 0 : i32
    %c0_i32_2 = arith.constant 0 : i32
    return %c0_i32, %c0_i32_0, %c0_i32_1 : i32, i32, i32
  }
}

</mosaic_0001>

<llo_original>
// kernel: decoder_forward.3
$region0: #{decoder_forward.3}
  #allocation0 [shape = 'u32[]', space=smem, size = 0x4, offset = 0x4, fixed_abs, tag = 'smem constant byte address 0x4 - core index']
  #allocation1 [shape = 'u32[144,128]{1,0:T(1,128)}', space=vmem, size = 0x12000, scoped, tag = 'internal scratch']
  %s0 = inlined_call_operand.vmem [shape: bf16[8,128], index: 0, kind: input, shape index: {}]
  %s1 = inlined_call_operand.vmem [shape: bf16[128,128], index: 1, kind: input, shape index: {}]
  %s2 = inlined_call_operand.vmem [shape: f32[1,128], index: 2, kind: input, shape index: {}]
  %s3 = inlined_call_operand.vmem [shape: f32[8,128], index: 3, kind: output, shape index: {}]
  %s4 = sld [smem:[#allocation0]]
  $region22: #{decoder_forward.3} parent=0
    _
  %s6 = ssub.s32 1, %s4
  %s7 = scalar_select 0, %s6, %s4
  // Predicated region
  $region2: #{decoder_forward.3} parent=0 // pred_check
    _
  $region3: #{decoder_forward.3} parent=0 // pred_check_branch
    %9 = sbr.rel (0) target = $region5
  $region4: #{decoder_forward.3} parent=0 // pred_region
    _
  $region5: #{decoder_forward.3} parent=0 // pred_fallthru
    _
  // Predicated region
  $region6: #{decoder_forward.3} parent=0 // pred_check
    _
  $region7: #{decoder_forward.3} parent=0 // pred_check_branch
    %11 = sbr.rel (0) target = $region9
  $region8: #{decoder_forward.3} parent=0 // pred_region
    _
  $region9: #{decoder_forward.3} parent=0 // pred_fallthru
    _
  // Predicated region
  $region10: #{decoder_forward.3} parent=0 // pred_check
    _
  $region11: #{decoder_forward.3} parent=0 // pred_check_branch
    %13 = sbr.rel (0) target = $region13
  $region12: #{decoder_forward.3} parent=0 // pred_region
    _
  $region13: #{decoder_forward.3} parent=0 // pred_fallthru
    _
  %v15 = vld [vmem:[%s0] sm:$0xf]
  %v16 = vld [vmem:[%s1] sm:$0xf]
  %v17 = vld [vmem:[%s1 + $0x4] sm:$0xf]
  %v18 = vld [vmem:[%s1 + $0x8] sm:$0xf]
  %v19 = vld [vmem:[%s1 + $0xc] sm:$0xf]
  %v20 = vld [vmem:[%s1 + $0x10] sm:$0xf]
  %v21 = vld [vmem:[%s1 + $0x14] sm:$0xf]
  %v22 = vld [vmem:[%s1 + $0x18] sm:$0xf]
  %v23 = vld [vmem:[%s1 + $0x1c] sm:$0xf]
  %v24 = vld [vmem:[%s1 + $0x20] sm:$0xf]
  %v25 = vld [vmem:[%s1 + $0x24] sm:$0xf]
  %v26 = vld [vmem:[%s1 + $0x28] sm:$0xf]
  %v27 = vld [vmem:[%s1 + $0x2c] sm:$0xf]
  %v28 = vld [vmem:[%s1 + $0x30] sm:$0xf]
  %v29 = vld [vmem:[%s1 + $0x34] sm:$0xf]
  %v30 = vld [vmem:[%s1 + $0x38] sm:$0xf]
  %v31 = vld [vmem:[%s1 + $0x3c] sm:$0xf]
  %v32 = vld [vmem:[%s2] sm:$0x1]
  %v34 = vlaneseq
  %v35 = vshrl.u32 %v34, 7
  %v36 = vsub.s32 0, %v35
  %v37 = vrot.slane %v32, %v36
  %v55 = vunpack.c.l.b16 %v16
  %v56 = vunpack.c.l.b16 %v17
  %v57 = vunpack.c.l.b16 %v18
  %v58 = vunpack.c.l.b16 %v19
  %v59 = vunpack.c.l.b16 %v20
  %v60 = vunpack.c.l.b16 %v21
  %v61 = vunpack.c.l.b16 %v22
  %v62 = vunpack.c.l.b16 %v23
  %v63 = vunpack.c.l.b16 %v24
  %v64 = vunpack.c.l.b16 %v25
  %v65 = vunpack.c.l.b16 %v26
  %v66 = vunpack.c.l.b16 %v27
  %v67 = vunpack.c.l.b16 %v28
  %v68 = vunpack.c.l.b16 %v29
  %v69 = vunpack.c.l.b16 %v30
  %v70 = vunpack.c.l.b16 %v31
  %v71 = vpack.c.b16 %v56, %v55
  %v72 = vpack.c.b16 %v58, %v57
  %v73 = vpack.c.b16 %v60, %v59
  %v74 = vpack.c.b16 %v62, %v61
  %v75 = vpack.c.b16 %v64, %v63
  %v76 = vpack.c.b16 %v66, %v65
  %v77 = vpack.c.b16 %v68, %v67
  %v78 = vpack.c.b16 %v70, %v69
  %87 = vmatprep.subr.bf16.mxu0 0
  %88 = vmatpush1.bf16.msra.mxu0 %v78
  %89 = vmatprep.subr.bf16.mxu0 0
  %90 = vmatpush1.bf16.msra.mxu0 %v77
  %91 = vmatprep.subr.bf16.mxu0 0
  %92 = vmatpush1.bf16.msra.mxu0 %v76
  %93 = vmatprep.subr.bf16.mxu0 0
  %94 = vmatpush1.bf16.msra.mxu0 %v75
  %95 = vmatprep.subr.bf16.mxu0 0
  %96 = vmatpush1.bf16.msra.mxu0 %v74
  %97 = vmatprep.subr.bf16.mxu0 0
  %98 = vmatpush1.bf16.msra.mxu0 %v73
  %99 = vmatprep.subr.bf16.mxu0 0
  %100 = vmatpush1.bf16.msra.mxu0 %v72
  %101 = vmatprep.subr.bf16.mxu0 0
  %102 = vmatpush1.bf16.msra.mxu0 %v71
  %103 = vmatprep.subr.bf16.mxu0 0
  %104 = vmatpush2.bf16.msra.mxu0 0
  %105 = vmatprep.subr.bf16.mxu0 0
  %106 = vmatpush2.bf16.msra.mxu0 0
  %107 = vmatprep.subr.bf16.mxu0 0
  %108 = vmatpush2.bf16.msra.mxu0 0
  %109 = vmatprep.subr.bf16.mxu0 0
  %110 = vmatpush2.bf16.msra.mxu0 0
  %111 = vmatprep.subr.bf16.mxu0 0
  %112 = vmatpush2.bf16.msra.mxu0 0
  %113 = vmatprep.subr.bf16.mxu0 0
  %114 = vmatpush2.bf16.msra.mxu0 0
  %115 = vmatprep.subr.bf16.mxu0 0
  %116 = vmatpush2.bf16.msra.mxu0 0
  %117 = vmatprep.subr.bf16.mxu0 0
  %118 = vmatpush2.bf16.msra.mxu0 0
  %119 = vmatprep.mubr.bf16.mxu0 0
  %120 = vmatmul.mubr.bf16.gmra.mxu0 %v15
  %v121 = vpop.f32.mrf.mxu0
  %v122 = vadd.f32 %v37, %v121
  %v123 = vpop.f32.mrf.mxu0
  %v124 = vpop.f32.mrf.mxu0
  %v125 = vpop.f32.mrf.mxu0
  %126 = vdwg.mxu0
  %127 = vst [vmem:[%s3] sm:$0xff] %v122
  // Predicated region
  $region14: #{decoder_forward.3} parent=0 // pred_check
    _
  $region15: #{decoder_forward.3} parent=0 // pred_check_branch
    %129 = sbr.rel (0) target = $region17
  $region16: #{decoder_forward.3} parent=0 // pred_region
    _
  $region17: #{decoder_forward.3} parent=0 // pred_fallthru
    _
  // Predicated region
  $region18: #{decoder_forward.3} parent=0 // pred_check
    _
  $region19: #{decoder_forward.3} parent=0 // pred_check_branch
    %131 = sbr.rel (0) target = $region21
  $region20: #{decoder_forward.3} parent=0 // pred_region
    _
  $region21: #{decoder_forward.3} parent=0 // pred_fallthru
    _

// kernel: decoder_forward.2
$region0: #{decoder_forward.2}
  #allocation0 [shape = 'u32[]', space=smem, size = 0x4, offset = 0x4, fixed_abs, tag = 'smem constant byte address 0x4 - core index']
  #allocation1 [shape = 'u32[144,128]{1,0:T(1,128)}', space=vmem, size = 0x12000, scoped, tag = 'internal scratch']
  %s0 = inlined_call_operand.vmem [shape: bf16[8,128], index: 0, kind: input, shape index: {}]
  %s1 = inlined_call_operand.vmem [shape: f32[2,8,128], index: 1, kind: input, shape index: {}]
  %s2 = inlined_call_operand.vmem [shape: bf16[8,8,128], index: 2, kind: input, shape index: {}]
  %s3 = inlined_call_operand.vmem [shape: bf16[8,128,8], index: 3, kind: input, shape index: {}]
  %s4 = inlined_call_operand.vmem [shape: bf16[2,128,384], index: 4, kind: input, shape index: {}]
  %s5 = inlined_call_operand.hbm [shape: bf16[2,128,384], index: 5, kind: input, shape index: {}]
  %s6 = inlined_call_operand.vmem [shape: f32[2,1,384], index: 6, kind: input, shape index: {}]
  %s7 = inlined_call_operand.vmem [shape: f32[2,1,384], index: 7, kind: input, shape index: {}]
  %s8 = inlined_call_operand.vmem [shape: bf16[128,128], index: 8, kind: input, shape index: {}]
  %s9 = inlined_call_operand.vmem [shape: bf16[128,128], index: 9, kind: input, shape index: {}]
  %s10 = inlined_call_operand.vmem [shape: f32[1,128], index: 10, kind: input, shape index: {}]
  %s11 = inlined_call_operand.vmem [shape: bf16[8,128], index: 11, kind: output, shape index: {0}]
  %s12 = inlined_call_operand.vmem [shape: f32[2,8,128], index: 12, kind: output, shape index: {1}]
  %13 = xla_tuple %s11, %s12
  %s14 = sld [smem:[#allocation0]]
  $region66: #{decoder_forward.2} parent=0
    _
  %s16 = ssub.s32 1, %s14
  %s17 = scalar_select 0, %s16, %s14
  $region1: #{decoder_forward.2} parent=0
    #allocation2 [shape = 'u8[196608]{0}', space=vmem, size = 0x30000, scoped, tag = 'input window, operand 5, single buffered']
    #allocation3 [shape = 's32[1]{0}', space=sflag, size = 0x4, scoped, tag = 'scoped memory for decoder_forward.2']
    %18 = vsyncpa [#allocation3], 0
    // Predicated region
    $region2: #{decoder_forward.2} parent=1 // pred_check
      _
    $region3: #{decoder_forward.2} parent=1 // pred_check_branch
      %20 = sbr.rel (0) target = $region5
    $region4: #{decoder_forward.2} parent=1 // pred_region
      _
    $region5: #{decoder_forward.2} parent=1 // pred_fallthru
      _
    // Predicated region
    $region6: #{decoder_forward.2} parent=1 // pred_check
      _
    $region7: #{decoder_forward.2} parent=1 // pred_check_branch
      %22 = sbr.rel (0) target = $region9
    $region8: #{decoder_forward.2} parent=1 // pred_region
      _
    $region9: #{decoder_forward.2} parent=1 // pred_fallthru
      _
    // Predicated region
    $region10: #{decoder_forward.2} parent=1 // pred_check
      _
    $region11: #{decoder_forward.2} parent=1 // pred_check_branch
      %24 = sbr.rel (0) target = $region13
    $region12: #{decoder_forward.2} parent=1 // pred_region
      _
    $region13: #{decoder_forward.2} parent=1 // pred_fallthru
      _
    // Predicated region
    $region14: #{decoder_forward.2} parent=1 // pred_check
      _
    $region15: #{decoder_forward.2} parent=1 // pred_check_branch
      %26 = sbr.rel (0) target = $region17
    $region16: #{decoder_forward.2} parent=1 // pred_region
      _
    $region17: #{decoder_forward.2} parent=1 // pred_fallthru
      _
    // Predicated region
    $region18: #{decoder_forward.2} parent=1 // pred_check
      _
    $region19: #{decoder_forward.2} parent=1 // pred_check_branch
      %28 = sbr.rel (0) target = $region21
    $region20: #{decoder_forward.2} parent=1 // pred_region
      _
    $region21: #{decoder_forward.2} parent=1 // pred_fallthru
      _
    // Predicated region
    $region22: #{decoder_forward.2} parent=1 // pred_check
      _
    $region23: #{decoder_forward.2} parent=1 // pred_check_branch
      %30 = sbr.rel (0) target = $region25
    $region24: #{decoder_forward.2} parent=1 // pred_region
      %s32 = ssub.s32 6144, 6144
      %33 = vsyncadd [#allocation3], %s32
      %s34 = sshll.u32 [#allocation2], 4
      %s35 = int_to_ptr.vmem [resolvable:$true] %s34
      %40 = dma.hbm_to_vmem [thread:$0]  %s5, 6144, %s35, [#allocation3], 192, 192, 12
    $region25: #{decoder_forward.2} parent=1 // pred_fallthru
      _
    // Predicated region
    $region26: #{decoder_forward.2} parent=1 // pred_check
      _
    $region27: #{decoder_forward.2} parent=1 // pred_check_branch
      %42 = sbr.rel (0) target = $region29
    $region28: #{decoder_forward.2} parent=1 // pred_region
      _
    $region29: #{decoder_forward.2} parent=1 // pred_fallthru
      _
    // Predicated region
    $region30: #{decoder_forward.2} parent=1 // pred_check
      _
    $region31: #{decoder_forward.2} parent=1 // pred_check_branch
      %44 = sbr.rel (0) target = $region33
    $region32: #{decoder_forward.2} parent=1 // pred_region
      _
    $region33: #{decoder_forward.2} parent=1 // pred_fallthru
      _
    // Predicated region
    $region34: #{decoder_forward.2} parent=1 // pred_check
      _
    $region35: #{decoder_forward.2} parent=1 // pred_check_branch
      %46 = sbr.rel (0) target = $region37
    $region36: #{decoder_forward.2} parent=1 // pred_region
      _
    $region37: #{decoder_forward.2} parent=1 // pred_fallthru
      _
    // Predicated region
    $region38: #{decoder_forward.2} parent=1 // pred_check
      _
    $region39: #{decoder_forward.2} parent=1 // pred_check_branch
      %48 = sbr.rel (0) target = $region41
    $region40: #{decoder_forward.2} parent=1 // pred_region
      _
    $region41: #{decoder_forward.2} parent=1 // pred_fallthru
      _
    // Predicated region
    $region42: #{decoder_forward.2} parent=1 // pred_check
      _
    $region43: #{decoder_forward.2} parent=1 // pred_check_branch
      %50 = sbr.rel (0) target = $region45
    $region44: #{decoder_forward.2} parent=1 // pred_region
      _
    $region45: #{decoder_forward.2} parent=1 // pred_fallthru
      _
    // Predicated region
    $region46: #{decoder_forward.2} parent=1 // pred_check
      _
    $region47: #{decoder_forward.2} parent=1 // pred_check_branch
      %52 = sbr.rel (0) target = $region49
    $region48: #{decoder_forward.2} parent=1 // pred_region
      %53 = dma.done [#allocation3], 6144
    $region49: #{decoder_forward.2} parent=1 // pred_fallthru
      _
    %v55 = vld [vmem:[%s0] sm:$0xf]
    %v56 = vld [vmem:[%s1] sm:$0xff]
    %v57 = vpack.c.bf16 %v56, %v56
    %v58 = vld [vmem:[%s4] sm:$0xf]
    %v59 = vld [vmem:[%s4 + $0xc] sm:$0xf]
    %v60 = vld [vmem:[%s4 + $0x18] sm:$0xf]
    %v61 = vld [vmem:[%s4 + $0x24] sm:$0xf]
    %v62 = vld [vmem:[%s4 + $0x30] sm:$0xf]
    %v63 = vld [vmem:[%s4 + $0x3c] sm:$0xf]
    %v64 = vld [vmem:[%s4 + $0x48] sm:$0xf]
    %v65 = vld [vmem:[%s4 + $0x54] sm:$0xf]
    %v66 = vld [vmem:[%s4 + $0x60] sm:$0xf]
    %v67 = vld [vmem:[%s4 + $0x6c] sm:$0xf]
    %v68 = vld [vmem:[%s4 + $0x78] sm:$0xf]
    %v69 = vld [vmem:[%s4 + $0x84] sm:$0xf]
    %v70 = vld [vmem:[%s4 + $0x90] sm:$0xf]
    %v71 = vld [vmem:[%s4 + $0x9c] sm:$0xf]
    %v72 = vld [vmem:[%s4 + $0xa8] sm:$0xf]
    %v73 = vld [vmem:[%s4 + $0xb4] sm:$0xf]
    %v74 = vld [vmem:[%s6] sm:$0x1]
    %v76 = vlaneseq
    %v77 = vshrl.u32 %v76, 7
    %v78 = vsub.s32 0, %v77
    %v79 = vrot.slane %v74, %v78
    %v97 = vunpack.c.l.b16 %v58
    %v98 = vunpack.c.l.b16 %v59
    %v99 = vunpack.c.l.b16 %v60
    %v100 = vunpack.c.l.b16 %v61
    %v101 = vunpack.c.l.b16 %v62
    %v102 = vunpack.c.l.b16 %v63
    %v103 = vunpack.c.l.b16 %v64
    %v104 = vunpack.c.l.b16 %v65
    %v105 = vunpack.c.l.b16 %v66
    %v106 = vunpack.c.l.b16 %v67
    %v107 = vunpack.c.l.b16 %v68
    %v108 = vunpack.c.l.b16 %v69
    %v109 = vunpack.c.l.b16 %v70
    %v110 = vunpack.c.l.b16 %v71
    %v111 = vunpack.c.l.b16 %v72
    %v112 = vunpack.c.l.b16 %v73
    %v113 = vpack.c.b16 %v98, %v97
    %v114 = vpack.c.b16 %v100, %v99
    %v115 = vpack.c.b16 %v102, %v101
    %v116 = vpack.c.b16 %v104, %v103
    %v117 = vpack.c.b16 %v106, %v105
    %v118 = vpack.c.b16 %v108, %v107
    %v119 = vpack.c.b16 %v110, %v109
    %v120 = vpack.c.b16 %v112, %v111
    %129 = vmatprep.subr.bf16.mxu0 0
    %130 = vmatpush1.bf16.msra.mxu0 %v120
    %131 = vmatprep.subr.bf16.mxu0 0
    %132 = vmatpush1.bf16.msra.mxu0 %v119
    %133 = vmatprep.subr.bf16.mxu0 0
    %134 = vmatpush1.bf16.msra.mxu0 %v118
    %135 = vmatprep.subr.bf16.mxu0 0
    %136 = vmatpush1.bf16.msra.mxu0 %v117
    %137 = vmatprep.subr.bf16.mxu0 0
    %138 = vmatpush1.bf16.msra.mxu0 %v116
    %139 = vmatprep.subr.bf16.mxu0 0
    %140 = vmatpush1.bf16.msra.mxu0 %v115
    %141 = vmatprep.subr.bf16.mxu0 0
    %142 = vmatpush1.bf16.msra.mxu0 %v114
    %143 = vmatprep.subr.bf16.mxu0 0
    %144 = vmatpush1.bf16.msra.mxu0 %v113
    %145 = vmatprep.subr.bf16.mxu0 0
    %146 = vmatpush2.bf16.msra.mxu0 0
    %147 = vmatprep.subr.bf16.mxu0 0
    %148 = vmatpush2.bf16.msra.mxu0 0
    %149 = vmatprep.subr.bf16.mxu0 0
    %150 = vmatpush2.bf16.msra.mxu0 0
    %151 = vmatprep.subr.bf16.mxu0 0
    %152 = vmatpush2.bf16.msra.mxu0 0
    %153 = vmatprep.subr.bf16.mxu0 0
    %154 = vmatpush2.bf16.msra.mxu0 0
    %155 = vmatprep.subr.bf16.mxu0 0
    %156 = vmatpush2.bf16.msra.mxu0 0
    %157 = vmatprep.subr.bf16.mxu0 0
    %158 = vmatpush2.bf16.msra.mxu0 0
    %159 = vmatprep.subr.bf16.mxu0 0
    %160 = vmatpush2.bf16.msra.mxu0 0
    %161 = vmatprep.mubr.bf16.mxu0 0
    %162 = vmatmul.mubr.bf16.gmra.mxu0 %v55
    %v163 = vpop.f32.mrf.mxu0
    %v164 = vadd.f32 %v79, %v163
    %v165 = vpop.f32.mrf.mxu0
    %v166 = vpop.f32.mrf.mxu0
    %v167 = vpop.f32.mrf.mxu0
    %168 = vdwg.mxu0
    %v169 = vld [vmem:[#allocation2] sm:$0xf]
    %v170 = vld [vmem:[#allocation2 + $0xc] sm:$0xf]
    %v171 = vld [vmem:[#allocation2 + $0x18] sm:$0xf]
    %v172 = vld [vmem:[#allocation2 + $0x24] sm:$0xf]
    %v173 = vld [vmem:[#allocation2 + $0x30] sm:$0xf]
    %v174 = vld [vmem:[#allocation2 + $0x3c] sm:$0xf]
    %v175 = vld [vmem:[#allocation2 + $0x48] sm:$0xf]
    %v176 = vld [vmem:[#allocation2 + $0x54] sm:$0xf]
    %v177 = vld [vmem:[#allocation2 + $0x60] sm:$0xf]
    %v178 = vld [vmem:[#allocation2 + $0x6c] sm:$0xf]
    %v179 = vld [vmem:[#allocation2 + $0x78] sm:$0xf]
    %v180 = vld [vmem:[#allocation2 + $0x84] sm:$0xf]
    %v181 = vld [vmem:[#allocation2 + $0x90] sm:$0xf]
    %v182 = vld [vmem:[#allocation2 + $0x9c] sm:$0xf]
    %v183 = vld [vmem:[#allocation2 + $0xa8] sm:$0xf]
    %v184 = vld [vmem:[#allocation2 + $0xb4] sm:$0xf]
    %v185 = vld [vmem:[%s7] sm:$0x1]
    %v187 = vlaneseq
    %v188 = vshrl.u32 %v187, 7
    %v189 = vsub.s32 0, %v188
    %v190 = vrot.slane %v185, %v189
    %v208 = vunpack.c.l.b16 %v169
    %v209 = vunpack.c.l.b16 %v170
    %v210 = vunpack.c.l.b16 %v171
    %v211 = vunpack.c.l.b16 %v172
    %v212 = vunpack.c.l.b16 %v173
    %v213 = vunpack.c.l.b16 %v174
    %v214 = vunpack.c.l.b16 %v175
    %v215 = vunpack.c.l.b16 %v176
    %v216 = vunpack.c.l.b16 %v177
    %v217 = vunpack.c.l.b16 %v178
    %v218 = vunpack.c.l.b16 %v179
    %v219 = vunpack.c.l.b16 %v180
    %v220 = vunpack.c.l.b16 %v181
    %v221 = vunpack.c.l.b16 %v182
    %v222 = vunpack.c.l.b16 %v183
    %v223 = vunpack.c.l.b16 %v184
    %v224 = vpack.c.b16 %v209, %v208
    %v225 = vpack.c.b16 %v211, %v210
    %v226 = vpack.c.b16 %v213, %v212
    %v227 = vpack.c.b16 %v215, %v214
    %v228 = vpack.c.b16 %v217, %v216
    %v229 = vpack.c.b16 %v219, %v218
    %v230 = vpack.c.b16 %v221, %v220
    %v231 = vpack.c.b16 %v223, %v222
    %240 = vmatprep.subr.bf16.mxu0 0
    %241 = vmatpush1.bf16.msra.mxu0 %v231
    %242 = vmatprep.subr.bf16.mxu0 0
    %243 = vmatpush1.bf16.msra.mxu0 %v230
    %244 = vmatprep.subr.bf16.mxu0 0
    %245 = vmatpush1.bf16.msra.mxu0 %v229
    %246 = vmatprep.subr.bf16.mxu0 0
    %247 = vmatpush1.bf16.msra.mxu0 %v228
    %248 = vmatprep.subr.bf16.mxu0 0
    %249 = vmatpush1.bf16.msra.mxu0 %v227
    %250 = vmatprep.subr.bf16.mxu0 0
    %251 = vmatpush1.bf16.msra.mxu0 %v226
    %252 = vmatprep.subr.bf16.mxu0 0
    %253 = vmatpush1.bf16.msra.mxu0 %v225
    %254 = vmatprep.subr.bf16.mxu0 0
    %255 = vmatpush1.bf16.msra.mxu0 %v224
    %256 = vmatprep.subr.bf16.mxu0 0
    %257 = vmatpush2.bf16.msra.mxu0 0
    %258 = vmatprep.subr.bf16.mxu0 0
    %259 = vmatpush2.bf16.msra.mxu0 0
    %260 = vmatprep.subr.bf16.mxu0 0
    %261 = vmatpush2.bf16.msra.mxu0 0
    %262 = vmatprep.subr.bf16.mxu0 0
    %263 = vmatpush2.bf16.msra.mxu0 0
    %264 = vmatprep.subr.bf16.mxu0 0
    %265 = vmatpush2.bf16.msra.mxu0 0
    %266 = vmatprep.subr.bf16.mxu0 0
    %267 = vmatpush2.bf16.msra.mxu0 0
    %268 = vmatprep.subr.bf16.mxu0 0
    %269 = vmatpush2.bf16.msra.mxu0 0
    %270 = vmatprep.subr.bf16.mxu0 0
    %271 = vmatpush2.bf16.msra.mxu0 0
    %272 = vmatprep.mubr.bf16.mxu0 0
    %273 = vmatmul.mubr.bf16.gmra.mxu0 %v57
    %v274 = vpop.f32.mrf.mxu0
    %v275 = vadd.f32 %v190, %v274
    %v276 = vpop.f32.mrf.mxu0
    %v277 = vpop.f32.mrf.mxu0
    %v278 = vpop.f32.mrf.mxu0
    %279 = vdwg.mxu0
    %v280 = vadd.f32 %v164, %v275
    %v281 = vmul.f32 %v280, 0.5
    %v282 = vtanh.pop %v281
    %v283 = vadd.f32 %v282, 1.0
    %v284 = vmul.f32 %v283, 0.5
    %v285 = vld [vmem:[%s4 + $0x4] sm:$0xf]
    %v286 = vld [vmem:[%s4 + $0x10] sm:$0xf]
    %v287 = vld [vmem:[%s4 + $0x1c] sm:$0xf]
    %v288 = vld [vmem:[%s4 + $0x28] sm:$0xf]
    %v289 = vld [vmem:[%s4 + $0x34] sm:$0xf]
    %v290 = vld [vmem:[%s4 + $0x40] sm:$0xf]
    %v291 = vld [vmem:[%s4 + $0x4c] sm:$0xf]
    %v292 = vld [vmem:[%s4 + $0x58] sm:$0xf]
    %v293 = vld [vmem:[%s4 + $0x64] sm:$0xf]
    %v294 = vld [vmem:[%s4 + $0x70] sm:$0xf]
    %v295 = vld [vmem:[%s4 + $0x7c] sm:$0xf]
    %v296 = vld [vmem:[%s4 + $0x88] sm:$0xf]
    %v297 = vld [vmem:[%s4 + $0x94] sm:$0xf]
    %v298 = vld [vmem:[%s4 + $0xa0] sm:$0xf]
    %v299 = vld [vmem:[%s4 + $0xac] sm:$0xf]
    %v300 = vld [vmem:[%s4 + $0xb8] sm:$0xf]
    %v301 = vld [vmem:[%s6 + $0x1] sm:$0x1]
    %v303 = vlaneseq
    %v304 = vshrl.u32 %v303, 7
    %v305 = vsub.s32 0, %v304
    %v306 = vrot.slane %v301, %v305
    %v324 = vunpack.c.l.b16 %v285
    %v325 = vunpack.c.l.b16 %v286
    %v326 = vunpack.c.l.b16 %v287
    %v327 = vunpack.c.l.b16 %v288
    %v328 = vunpack.c.l.b16 %v289
    %v329 = vunpack.c.l.b16 %v290
    %v330 = vunpack.c.l.b16 %v291
    %v331 = vunpack.c.l.b16 %v292
    %v332 = vunpack.c.l.b16 %v293
    %v333 = vunpack.c.l.b16 %v294
    %v334 = vunpack.c.l.b16 %v295
    %v335 = vunpack.c.l.b16 %v296
    %v336 = vunpack.c.l.b16 %v297
    %v337 = vunpack.c.l.b16 %v298
    %v338 = vunpack.c.l.b16 %v299
    %v339 = vunpack.c.l.b16 %v300
    %v340 = vpack.c.b16 %v325, %v324
    %v341 = vpack.c.b16 %v327, %v326
    %v342 = vpack.c.b16 %v329, %v328
    %v343 = vpack.c.b16 %v331, %v330
    %v344 = vpack.c.b16 %v333, %v332
    %v345 = vpack.c.b16 %v335, %v334
    %v346 = vpack.c.b16 %v337, %v336
    %v347 = vpack.c.b16 %v339, %v338
    %356 = vmatprep.subr.bf16.mxu0 0
    %357 = vmatpush1.bf16.msra.mxu0 %v347
    %358 = vmatprep.subr.bf16.mxu0 0
    %359 = vmatpush1.bf16.msra.mxu0 %v346
    %360 = vmatprep.subr.bf16.mxu0 0
    %361 = vmatpush1.bf16.msra.mxu0 %v345
    %362 = vmatprep.subr.bf16.mxu0 0
    %363 = vmatpush1.bf16.msra.mxu0 %v344
    %364 = vmatprep.subr.bf16.mxu0 0
    %365 = vmatpush1.bf16.msra.mxu0 %v343
    %366 = vmatprep.subr.bf16.mxu0 0
    %367 = vmatpush1.bf16.msra.mxu0 %v342
    %368 = vmatprep.subr.bf16.mxu0 0
    %369 = vmatpush1.bf16.msra.mxu0 %v341
    %370 = vmatprep.subr.bf16.mxu0 0
    %371 = vmatpush1.bf16.msra.mxu0 %v340
    %372 = vmatprep.subr.bf16.mxu0 0
    %373 = vmatpush2.bf16.msra.mxu0 0
    %374 = vmatprep.subr.bf16.mxu0 0
    %375 = vmatpush2.bf16.msra.mxu0 0
    %376 = vmatprep.subr.bf16.mxu0 0
    %377 = vmatpush2.bf16.msra.mxu0 0
    %378 = vmatprep.subr.bf16.mxu0 0
    %379 = vmatpush2.bf16.msra.mxu0 0
    %380 = vmatprep.subr.bf16.mxu0 0
    %381 = vmatpush2.bf16.msra.mxu0 0
    %382 = vmatprep.subr.bf16.mxu0 0
    %383 = vmatpush2.bf16.msra.mxu0 0
    %384 = vmatprep.subr.bf16.mxu0 0
    %385 = vmatpush2.bf16.msra.mxu0 0
    %386 = vmatprep.subr.bf16.mxu0 0
    %387 = vmatpush2.bf16.msra.mxu0 0
    %388 = vmatprep.mubr.bf16.mxu0 0
    %389 = vmatmul.mubr.bf16.gmra.mxu0 %v55
    %v390 = vpop.f32.mrf.mxu0
    %v391 = vadd.f32 %v306, %v390
    %v392 = vpop.f32.mrf.mxu0
    %v393 = vpop.f32.mrf.mxu0
    %v394 = vpop.f32.mrf.mxu0
    %395 = vdwg.mxu0
    %v396 = vld [vmem:[#allocation2 + $0x4] sm:$0xf]
    %v397 = vld [vmem:[#allocation2 + $0x10] sm:$0xf]
    %v398 = vld [vmem:[#allocation2 + $0x1c] sm:$0xf]
    %v399 = vld [vmem:[#allocation2 + $0x28] sm:$0xf]
    %v400 = vld [vmem:[#allocation2 + $0x34] sm:$0xf]
    %v401 = vld [vmem:[#allocation2 + $0x40] sm:$0xf]
    %v402 = vld [vmem:[#allocation2 + $0x4c] sm:$0xf]
    %v403 = vld [vmem:[#allocation2 + $0x58] sm:$0xf]
    %v404 = vld [vmem:[#allocation2 + $0x64] sm:$0xf]
    %v405 = vld [vmem:[#allocation2 + $0x70] sm:$0xf]
    %v406 = vld [vmem:[#allocation2 + $0x7c] sm:$0xf]
    %v407 = vld [vmem:[#allocation2 + $0x88] sm:$0xf]
    %v408 = vld [vmem:[#allocation2 + $0x94] sm:$0xf]
    %v409 = vld [vmem:[#allocation2 + $0xa0] sm:$0xf]
    %v410 = vld [vmem:[#allocation2 + $0xac] sm:$0xf]
    %v411 = vld [vmem:[#allocation2 + $0xb8] sm:$0xf]
    %v412 = vld [vmem:[%s7 + $0x1] sm:$0x1]
    %v414 = vlaneseq
    %v415 = vshrl.u32 %v414, 7
    %v416 = vsub.s32 0, %v415
    %v417 = vrot.slane %v412, %v416
    %v435 = vunpack.c.l.b16 %v396
    %v436 = vunpack.c.l.b16 %v397
    %v437 = vunpack.c.l.b16 %v398
    %v438 = vunpack.c.l.b16 %v399
    %v439 = vunpack.c.l.b16 %v400
    %v440 = vunpack.c.l.b16 %v401
    %v441 = vunpack.c.l.b16 %v402
    %v442 = vunpack.c.l.b16 %v403
    %v443 = vunpack.c.l.b16 %v404
    %v444 = vunpack.c.l.b16 %v405
    %v445 = vunpack.c.l.b16 %v406
    %v446 = vunpack.c.l.b16 %v407
    %v447 = vunpack.c.l.b16 %v408
    %v448 = vunpack.c.l.b16 %v409
    %v449 = vunpack.c.l.b16 %v410
    %v450 = vunpack.c.l.b16 %v411
    %v451 = vpack.c.b16 %v436, %v435
    %v452 = vpack.c.b16 %v438, %v437
    %v453 = vpack.c.b16 %v440, %v439
    %v454 = vpack.c.b16 %v442, %v441
    %v455 = vpack.c.b16 %v444, %v443
    %v456 = vpack.c.b16 %v446, %v445
    %v457 = vpack.c.b16 %v448, %v447
    %v458 = vpack.c.b16 %v450, %v449
    %467 = vmatprep.subr.bf16.mxu0 0
    %468 = vmatpush1.bf16.msra.mxu0 %v458
    %469 = vmatprep.subr.bf16.mxu0 0
    %470 = vmatpush1.bf16.msra.mxu0 %v457
    %471 = vmatprep.subr.bf16.mxu0 0
    %472 = vmatpush1.bf16.msra.mxu0 %v456
    %473 = vmatprep.subr.bf16.mxu0 0
    %474 = vmatpush1.bf16.msra.mxu0 %v455
    %475 = vmatprep.subr.bf16.mxu0 0
    %476 = vmatpush1.bf16.msra.mxu0 %v454
    %477 = vmatprep.subr.bf16.mxu0 0
    %478 = vmatpush1.bf16.msra.mxu0 %v453
    %479 = vmatprep.subr.bf16.mxu0 0
    %480 = vmatpush1.bf16.msra.mxu0 %v452
    %481 = vmatprep.subr.bf16.mxu0 0
    %482 = vmatpush1.bf16.msra.mxu0 %v451
    %483 = vmatprep.subr.bf16.mxu0 0
    %484 = vmatpush2.bf16.msra.mxu0 0
    %485 = vmatprep.subr.bf16.mxu0 0
    %486 = vmatpush2.bf16.msra.mxu0 0
    %487 = vmatprep.subr.bf16.mxu0 0
    %488 = vmatpush2.bf16.msra.mxu0 0
    %489 = vmatprep.subr.bf16.mxu0 0
    %490 = vmatpush2.bf16.msra.mxu0 0
    %491 = vmatprep.subr.bf16.mxu0 0
    %492 = vmatpush2.bf16.msra.mxu0 0
    %493 = vmatprep.subr.bf16.mxu0 0
    %494 = vmatpush2.bf16.msra.mxu0 0
    %495 = vmatprep.subr.bf16.mxu0 0
    %496 = vmatpush2.bf16.msra.mxu0 0
    %497 = vmatprep.subr.bf16.mxu0 0
    %498 = vmatpush2.bf16.msra.mxu0 0
    %499 = vmatprep.mubr.bf16.mxu0 0
    %500 = vmatmul.mubr.bf16.gmra.mxu0 %v57
    %v501 = vpop.f32.mrf.mxu0
    %v502 = vadd.f32 %v417, %v501
    %v503 = vpop.f32.mrf.mxu0
    %v504 = vpop.f32.mrf.mxu0
    %v505 = vpop.f32.mrf.mxu0
    %506 = vdwg.mxu0
    %v507 = vadd.f32 %v391, %v502
    %v508 = vmul.f32 %v507, 0.5
    %v509 = vtanh.pop %v508
    %v510 = vadd.f32 %v509, 1.0
    %v511 = vmul.f32 %v510, 0.5
    %v512 = vld [vmem:[%s4 + $0x8] sm:$0xf]
    %v513 = vld [vmem:[%s4 + $0x14] sm:$0xf]
    %v514 = vld [vmem:[%s4 + $0x20] sm:$0xf]
    %v515 = vld [vmem:[%s4 + $0x2c] sm:$0xf]
    %v516 = vld [vmem:[%s4 + $0x38] sm:$0xf]
    %v517 = vld [vmem:[%s4 + $0x44] sm:$0xf]
    %v518 = vld [vmem:[%s4 + $0x50] sm:$0xf]
    %v519 = vld [vmem:[%s4 + $0x5c] sm:$0xf]
    %v520 = vld [vmem:[%s4 + $0x68] sm:$0xf]
    %v521 = vld [vmem:[%s4 + $0x74] sm:$0xf]
    %v522 = vld [vmem:[%s4 + $0x80] sm:$0xf]
    %v523 = vld [vmem:[%s4 + $0x8c] sm:$0xf]
    %v524 = vld [vmem:[%s4 + $0x98] sm:$0xf]
    %v525 = vld [vmem:[%s4 + $0xa4] sm:$0xf]
    %v526 = vld [vmem:[%s4 + $0xb0] sm:$0xf]
    %v527 = vld [vmem:[%s4 + $0xbc] sm:$0xf]
    %v528 = vld [vmem:[%s6 + $0x2] sm:$0x1]
    %v530 = vlaneseq
    %v531 = vshrl.u32 %v530, 7
    %v532 = vsub.s32 0, %v531
    %v533 = vrot.slane %v528, %v532
    %v551 = vunpack.c.l.b16 %v512
    %v552 = vunpack.c.l.b16 %v513
    %v553 = vunpack.c.l.b16 %v514
    %v554 = vunpack.c.l.b16 %v515
    %v555 = vunpack.c.l.b16 %v516
    %v556 = vunpack.c.l.b16 %v517
    %v557 = vunpack.c.l.b16 %v518
    %v558 = vunpack.c.l.b16 %v519
    %v559 = vunpack.c.l.b16 %v520
    %v560 = vunpack.c.l.b16 %v521
    %v561 = vunpack.c.l.b16 %v522
    %v562 = vunpack.c.l.b16 %v523
    %v563 = vunpack.c.l.b16 %v524
    %v564 = vunpack.c.l.b16 %v525
    %v565 = vunpack.c.l.b16 %v526
    %v566 = vunpack.c.l.b16 %v527
    %v567 = vpack.c.b16 %v552, %v551
    %v568 = vpack.c.b16 %v554, %v553
    %v569 = vpack.c.b16 %v556, %v555
    %v570 = vpack.c.b16 %v558, %v557
    %v571 = vpack.c.b16 %v560, %v559
    %v572 = vpack.c.b16 %v562, %v561
    %v573 = vpack.c.b16 %v564, %v563
    %v574 = vpack.c.b16 %v566, %v565
    %583 = vmatprep.subr.bf16.mxu0 0
    %584 = vmatpush1.bf16.msra.mxu0 %v574
    %585 = vmatprep.subr.bf16.mxu0 0
    %586 = vmatpush1.bf16.msra.mxu0 %v573
    %587 = vmatprep.subr.bf16.mxu0 0
    %588 = vmatpush1.bf16.msra.mxu0 %v572
    %589 = vmatprep.subr.bf16.mxu0 0
    %590 = vmatpush1.bf16.msra.mxu0 %v571
    %591 = vmatprep.subr.bf16.mxu0 0
    %592 = vmatpush1.bf16.msra.mxu0 %v570
    %593 = vmatprep.subr.bf16.mxu0 0
    %594 = vmatpush1.bf16.msra.mxu0 %v569
    %595 = vmatprep.subr.bf16.mxu0 0
    %596 = vmatpush1.bf16.msra.mxu0 %v568
    %597 = vmatprep.subr.bf16.mxu0 0
    %598 = vmatpush1.bf16.msra.mxu0 %v567
    %599 = vmatprep.subr.bf16.mxu0 0
    %600 = vmatpush2.bf16.msra.mxu0 0
    %601 = vmatprep.subr.bf16.mxu0 0
    %602 = vmatpush2.bf16.msra.mxu0 0
    %603 = vmatprep.subr.bf16.mxu0 0
    %604 = vmatpush2.bf16.msra.mxu0 0
    %605 = vmatprep.subr.bf16.mxu0 0
    %606 = vmatpush2.bf16.msra.mxu0 0
    %607 = vmatprep.subr.bf16.mxu0 0
    %608 = vmatpush2.bf16.msra.mxu0 0
    %609 = vmatprep.subr.bf16.mxu0 0
    %610 = vmatpush2.bf16.msra.mxu0 0
    %611 = vmatprep.subr.bf16.mxu0 0
    %612 = vmatpush2.bf16.msra.mxu0 0
    %613 = vmatprep.subr.bf16.mxu0 0
    %614 = vmatpush2.bf16.msra.mxu0 0
    %615 = vmatprep.mubr.bf16.mxu0 0
    %616 = vmatmul.mubr.bf16.gmra.mxu0 %v55
    %v617 = vpop.f32.mrf.mxu0
    %v618 = vadd.f32 %v533, %v617
    %v619 = vpop.f32.mrf.mxu0
    %v620 = vpop.f32.mrf.mxu0
    %v621 = vpop.f32.mrf.mxu0
    %622 = vdwg.mxu0
    %v623 = vld [vmem:[#allocation2 + $0x8] sm:$0xf]
    %v624 = vld [vmem:[#allocation2 + $0x14] sm:$0xf]
    %v625 = vld [vmem:[#allocation2 + $0x20] sm:$0xf]
    %v626 = vld [vmem:[#allocation2 + $0x2c] sm:$0xf]
    %v627 = vld [vmem:[#allocation2 + $0x38] sm:$0xf]
    %v628 = vld [vmem:[#allocation2 + $0x44] sm:$0xf]
    %v629 = vld [vmem:[#allocation2 + $0x50] sm:$0xf]
    %v630 = vld [vmem:[#allocation2 + $0x5c] sm:$0xf]
    %v631 = vld [vmem:[#allocation2 + $0x68] sm:$0xf]
    %v632 = vld [vmem:[#allocation2 + $0x74] sm:$0xf]
    %v633 = vld [vmem:[#allocation2 + $0x80] sm:$0xf]
    %v634 = vld [vmem:[#allocation2 + $0x8c] sm:$0xf]
    %v635 = vld [vmem:[#allocation2 + $0x98] sm:$0xf]
    %v636 = vld [vmem:[#allocation2 + $0xa4] sm:$0xf]
    %v637 = vld [vmem:[#allocation2 + $0xb0] sm:$0xf]
    %v638 = vld [vmem:[#allocation2 + $0xbc] sm:$0xf]
    %v639 = vld [vmem:[%s7 + $0x2] sm:$0x1]
    %v641 = vlaneseq
    %v642 = vshrl.u32 %v641, 7
    %v643 = vsub.s32 0, %v642
    %v644 = vrot.slane %v639, %v643
    %v662 = vunpack.c.l.b16 %v623
    %v663 = vunpack.c.l.b16 %v624
    %v664 = vunpack.c.l.b16 %v625
    %v665 = vunpack.c.l.b16 %v626
    %v666 = vunpack.c.l.b16 %v627
    %v667 = vunpack.c.l.b16 %v628
    %v668 = vunpack.c.l.b16 %v629
    %v669 = vunpack.c.l.b16 %v630
    %v670 = vunpack.c.l.b16 %v631
    %v671 = vunpack.c.l.b16 %v632
    %v672 = vunpack.c.l.b16 %v633
    %v673 = vunpack.c.l.b16 %v634
    %v674 = vunpack.c.l.b16 %v635
    %v675 = vunpack.c.l.b16 %v636
    %v676 = vunpack.c.l.b16 %v637
    %v677 = vunpack.c.l.b16 %v638
    %v678 = vpack.c.b16 %v663, %v662
    %v679 = vpack.c.b16 %v665, %v664
    %v680 = vpack.c.b16 %v667, %v666
    %v681 = vpack.c.b16 %v669, %v668
    %v682 = vpack.c.b16 %v671, %v670
    %v683 = vpack.c.b16 %v673, %v672
    %v684 = vpack.c.b16 %v675, %v674
    %v685 = vpack.c.b16 %v677, %v676
    %694 = vmatprep.subr.bf16.mxu0 0
    %695 = vmatpush1.bf16.msra.mxu0 %v685
    %696 = vmatprep.subr.bf16.mxu0 0
    %697 = vmatpush1.bf16.msra.mxu0 %v684
    %698 = vmatprep.subr.bf16.mxu0 0
    %699 = vmatpush1.bf16.msra.mxu0 %v683
    %700 = vmatprep.subr.bf16.mxu0 0
    %701 = vmatpush1.bf16.msra.mxu0 %v682
    %702 = vmatprep.subr.bf16.mxu0 0
    %703 = vmatpush1.bf16.msra.mxu0 %v681
    %704 = vmatprep.subr.bf16.mxu0 0
    %705 = vmatpush1.bf16.msra.mxu0 %v680
    %706 = vmatprep.subr.bf16.mxu0 0
    %707 = vmatpush1.bf16.msra.mxu0 %v679
    %708 = vmatprep.subr.bf16.mxu0 0
    %709 = vmatpush1.bf16.msra.mxu0 %v678
    %710 = vmatprep.subr.bf16.mxu0 0
    %711 = vmatpush2.bf16.msra.mxu0 0
    %712 = vmatprep.subr.bf16.mxu0 0
    %713 = vmatpush2.bf16.msra.mxu0 0
    %714 = vmatprep.subr.bf16.mxu0 0
    %715 = vmatpush2.bf16.msra.mxu0 0
    %716 = vmatprep.subr.bf16.mxu0 0
    %717 = vmatpush2.bf16.msra.mxu0 0
    %718 = vmatprep.subr.bf16.mxu0 0
    %719 = vmatpush2.bf16.msra.mxu0 0
    %720 = vmatprep.subr.bf16.mxu0 0
    %721 = vmatpush2.bf16.msra.mxu0 0
    %722 = vmatprep.subr.bf16.mxu0 0
    %723 = vmatpush2.bf16.msra.mxu0 0
    %724 = vmatprep.subr.bf16.mxu0 0
    %725 = vmatpush2.bf16.msra.mxu0 0
    %726 = vmatprep.mubr.bf16.mxu0 0
    %727 = vmatmul.mubr.bf16.gmra.mxu0 %v57
    %v728 = vpop.f32.mrf.mxu0
    %v729 = vadd.f32 %v644, %v728
    %v730 = vpop.f32.mrf.mxu0
    %v731 = vpop.f32.mrf.mxu0
    %v732 = vpop.f32.mrf.mxu0
    %733 = vdwg.mxu0
    %v734 = vmul.f32 %v284, %v729
    %v735 = vadd.f32 %v618, %v734
    %v736 = vtanh.pop %v735
    %v737 = vsub.f32 1.0, %v511
    %v738 = vmul.f32 %v737, %v736
    %v739 = vmul.f32 %v511, %v56
    %v740 = vadd.f32 %v738, %v739
    %741 = vst [vmem:[%s12] sm:$0xff] %v740
    %s742 = scalar_lea.vmem %s1, 8
    %v743 = vld [vmem:[%s742] sm:$0xff]
    %v744 = vpack.c.bf16 %v740, %v740
    %v745 = vpack.c.bf16 %v743, %v743
    %s746 = scalar_lea.vmem %s4, 192
    %v747 = vld [vmem:[%s746] sm:$0xf]
    %v748 = vld [vmem:[%s746 + $0xc] sm:$0xf]
    %v749 = vld [vmem:[%s746 + $0x18] sm:$0xf]
    %v750 = vld [vmem:[%s746 + $0x24] sm:$0xf]
    %v751 = vld [vmem:[%s746 + $0x30] sm:$0xf]
    %v752 = vld [vmem:[%s746 + $0x3c] sm:$0xf]
    %v753 = vld [vmem:[%s746 + $0x48] sm:$0xf]
    %v754 = vld [vmem:[%s746 + $0x54] sm:$0xf]
    %v755 = vld [vmem:[%s746 + $0x60] sm:$0xf]
    %v756 = vld [vmem:[%s746 + $0x6c] sm:$0xf]
    %v757 = vld [vmem:[%s746 + $0x78] sm:$0xf]
    %v758 = vld [vmem:[%s746 + $0x84] sm:$0xf]
    %v759 = vld [vmem:[%s746 + $0x90] sm:$0xf]
    %v760 = vld [vmem:[%s746 + $0x9c] sm:$0xf]
    %v761 = vld [vmem:[%s746 + $0xa8] sm:$0xf]
    %v762 = vld [vmem:[%s746 + $0xb4] sm:$0xf]
    %s763 = scalar_lea.vmem %s6, 3
    %v764 = vld [vmem:[%s763] sm:$0x1]
    %v766 = vlaneseq
    %v767 = vshrl.u32 %v766, 7
    %v768 = vsub.s32 0, %v767
    %v769 = vrot.slane %v764, %v768
    %v787 = vunpack.c.l.b16 %v747
    %v788 = vunpack.c.l.b16 %v748
    %v789 = vunpack.c.l.b16 %v749
    %v790 = vunpack.c.l.b16 %v750
    %v791 = vunpack.c.l.b16 %v751
    %v792 = vunpack.c.l.b16 %v752
    %v793 = vunpack.c.l.b16 %v753
    %v794 = vunpack.c.l.b16 %v754
    %v795 = vunpack.c.l.b16 %v755
    %v796 = vunpack.c.l.b16 %v756
    %v797 = vunpack.c.l.b16 %v757
    %v798 = vunpack.c.l.b16 %v758
    %v799 = vunpack.c.l.b16 %v759
    %v800 = vunpack.c.l.b16 %v760
    %v801 = vunpack.c.l.b16 %v761
    %v802 = vunpack.c.l.b16 %v762
    %v803 = vpack.c.b16 %v788, %v787
    %v804 = vpack.c.b16 %v790, %v789
    %v805 = vpack.c.b16 %v792, %v791
    %v806 = vpack.c.b16 %v794, %v793
    %v807 = vpack.c.b16 %v796, %v795
    %v808 = vpack.c.b16 %v798, %v797
    %v809 = vpack.c.b16 %v800, %v799
    %v810 = vpack.c.b16 %v802, %v801
    %819 = vmatprep.subr.bf16.mxu0 0
    %820 = vmatpush1.bf16.msra.mxu0 %v810
    %821 = vmatprep.subr.bf16.mxu0 0
    %822 = vmatpush1.bf16.msra.mxu0 %v809
    %823 = vmatprep.subr.bf16.mxu0 0
    %824 = vmatpush1.bf16.msra.mxu0 %v808
    %825 = vmatprep.subr.bf16.mxu0 0
    %826 = vmatpush1.bf16.msra.mxu0 %v807
    %827 = vmatprep.subr.bf16.mxu0 0
    %828 = vmatpush1.bf16.msra.mxu0 %v806
    %829 = vmatprep.subr.bf16.mxu0 0
    %830 = vmatpush1.bf16.msra.mxu0 %v805
    %831 = vmatprep.subr.bf16.mxu0 0
    %832 = vmatpush1.bf16.msra.mxu0 %v804
    %833 = vmatprep.subr.bf16.mxu0 0
    %834 = vmatpush1.bf16.msra.mxu0 %v803
    %835 = vmatprep.subr.bf16.mxu0 0
    %836 = vmatpush2.bf16.msra.mxu0 0
    %837 = vmatprep.subr.bf16.mxu0 0
    %838 = vmatpush2.bf16.msra.mxu0 0
    %839 = vmatprep.subr.bf16.mxu0 0
    %840 = vmatpush2.bf16.msra.mxu0 0
    %841 = vmatprep.subr.bf16.mxu0 0
    %842 = vmatpush2.bf16.msra.mxu0 0
    %843 = vmatprep.subr.bf16.mxu0 0
    %844 = vmatpush2.bf16.msra.mxu0 0
    %845 = vmatprep.subr.bf16.mxu0 0
    %846 = vmatpush2.bf16.msra.mxu0 0
    %847 = vmatprep.subr.bf16.mxu0 0
    %848 = vmatpush2.bf16.msra.mxu0 0
    %849 = vmatprep.subr.bf16.mxu0 0
    %850 = vmatpush2.bf16.msra.mxu0 0
    %851 = vmatprep.mubr.bf16.mxu0 0
    %852 = vmatmul.mubr.bf16.gmra.mxu0 %v744
    %v853 = vpop.f32.mrf.mxu0
    %v854 = vadd.f32 %v769, %v853
    %v855 = vpop.f32.mrf.mxu0
    %v856 = vpop.f32.mrf.mxu0
    %v857 = vpop.f32.mrf.mxu0
    %858 = vdwg.mxu0
    %s859 = scalar_lea.vmem [#allocation2], 192
    %v860 = vld [vmem:[%s859] sm:$0xf]
    %v861 = vld [vmem:[%s859 + $0xc] sm:$0xf]
    %v862 = vld [vmem:[%s859 + $0x18] sm:$0xf]
    %v863 = vld [vmem:[%s859 + $0x24] sm:$0xf]
    %v864 = vld [vmem:[%s859 + $0x30] sm:$0xf]
    %v865 = vld [vmem:[%s859 + $0x3c] sm:$0xf]
    %v866 = vld [vmem:[%s859 + $0x48] sm:$0xf]
    %v867 = vld [vmem:[%s859 + $0x54] sm:$0xf]
    %v868 = vld [vmem:[%s859 + $0x60] sm:$0xf]
    %v869 = vld [vmem:[%s859 + $0x6c] sm:$0xf]
    %v870 = vld [vmem:[%s859 + $0x78] sm:$0xf]
    %v871 = vld [vmem:[%s859 + $0x84] sm:$0xf]
    %v872 = vld [vmem:[%s859 + $0x90] sm:$0xf]
    %v873 = vld [vmem:[%s859 + $0x9c] sm:$0xf]
    %v874 = vld [vmem:[%s859 + $0xa8] sm:$0xf]
    %v875 = vld [vmem:[%s859 + $0xb4] sm:$0xf]
    %s876 = scalar_lea.vmem %s7, 3
    %v877 = vld [vmem:[%s876] sm:$0x1]
    %v879 = vlaneseq
    %v880 = vshrl.u32 %v879, 7
    %v881 = vsub.s32 0, %v880
    %v882 = vrot.slane %v877, %v881
    %v900 = vunpack.c.l.b16 %v860
    %v901 = vunpack.c.l.b16 %v861
    %v902 = vunpack.c.l.b16 %v862
    %v903 = vunpack.c.l.b16 %v863
    %v904 = vunpack.c.l.b16 %v864
    %v905 = vunpack.c.l.b16 %v865
    %v906 = vunpack.c.l.b16 %v866
    %v907 = vunpack.c.l.b16 %v867
    %v908 = vunpack.c.l.b16 %v868
    %v909 = vunpack.c.l.b16 %v869
    %v910 = vunpack.c.l.b16 %v870
    %v911 = vunpack.c.l.b16 %v871
    %v912 = vunpack.c.l.b16 %v872
    %v913 = vunpack.c.l.b16 %v873
    %v914 = vunpack.c.l.b16 %v874
    %v915 = vunpack.c.l.b16 %v875
    %v916 = vpack.c.b16 %v901, %v900
    %v917 = vpack.c.b16 %v903, %v902
    %v918 = vpack.c.b16 %v905, %v904
    %v919 = vpack.c.b16 %v907, %v906
    %v920 = vpack.c.b16 %v909, %v908
    %v921 = vpack.c.b16 %v911, %v910
    %v922 = vpack.c.b16 %v913, %v912
    %v923 = vpack.c.b16 %v915, %v914
    %932 = vmatprep.subr.bf16.mxu0 0
    %933 = vmatpush1.bf16.msra.mxu0 %v923
    %934 = vmatprep.subr.bf16.mxu0 0
    %935 = vmatpush1.bf16.msra.mxu0 %v922
    %936 = vmatprep.subr.bf16.mxu0 0
    %937 = vmatpush1.bf16.msra.mxu0 %v921
    %938 = vmatprep.subr.bf16.mxu0 0
    %939 = vmatpush1.bf16.msra.mxu0 %v920
    %940 = vmatprep.subr.bf16.mxu0 0
    %941 = vmatpush1.bf16.msra.mxu0 %v919
    %942 = vmatprep.subr.bf16.mxu0 0
    %943 = vmatpush1.bf16.msra.mxu0 %v918
    %944 = vmatprep.subr.bf16.mxu0 0
    %945 = vmatpush1.bf16.msra.mxu0 %v917
    %946 = vmatprep.subr.bf16.mxu0 0
    %947 = vmatpush1.bf16.msra.mxu0 %v916
    %948 = vmatprep.subr.bf16.mxu0 0
    %949 = vmatpush2.bf16.msra.mxu0 0
    %950 = vmatprep.subr.bf16.mxu0 0
    %951 = vmatpush2.bf16.msra.mxu0 0
    %952 = vmatprep.subr.bf16.mxu0 0
    %953 = vmatpush2.bf16.msra.mxu0 0
    %954 = vmatprep.subr.bf16.mxu0 0
    %955 = vmatpush2.bf16.msra.mxu0 0
    %956 = vmatprep.subr.bf16.mxu0 0
    %957 = vmatpush2.bf16.msra.mxu0 0
    %958 = vmatprep.subr.bf16.mxu0 0
    %959 = vmatpush2.bf16.msra.mxu0 0
    %960 = vmatprep.subr.bf16.mxu0 0
    %961 = vmatpush2.bf16.msra.mxu0 0
    %962 = vmatprep.subr.bf16.mxu0 0
    %963 = vmatpush2.bf16.msra.mxu0 0
    %964 = vmatprep.mubr.bf16.mxu0 0
    %965 = vmatmul.mubr.bf16.gmra.mxu0 %v745
    %v966 = vpop.f32.mrf.mxu0
    %v967 = vadd.f32 %v882, %v966
    %v968 = vpop.f32.mrf.mxu0
    %v969 = vpop.f32.mrf.mxu0
    %v970 = vpop.f32.mrf.mxu0
    %971 = vdwg.mxu0
    %v972 = vadd.f32 %v854, %v967
    %v973 = vmul.f32 %v972, 0.5
    %v974 = vtanh.pop %v973
    %v975 = vadd.f32 %v974, 1.0
    %v976 = vmul.f32 %v975, 0.5
    %v977 = vld [vmem:[%s746 + $0x4] sm:$0xf]
    %v978 = vld [vmem:[%s746 + $0x10] sm:$0xf]
    %v979 = vld [vmem:[%s746 + $0x1c] sm:$0xf]
    %v980 = vld [vmem:[%s746 + $0x28] sm:$0xf]
    %v981 = vld [vmem:[%s746 + $0x34] sm:$0xf]
    %v982 = vld [vmem:[%s746 + $0x40] sm:$0xf]
    %v983 = vld [vmem:[%s746 + $0x4c] sm:$0xf]
    %v984 = vld [vmem:[%s746 + $0x58] sm:$0xf]
    %v985 = vld [vmem:[%s746 + $0x64] sm:$0xf]
    %v986 = vld [vmem:[%s746 + $0x70] sm:$0xf]
    %v987 = vld [vmem:[%s746 + $0x7c] sm:$0xf]
    %v988 = vld [vmem:[%s746 + $0x88] sm:$0xf]
    %v989 = vld [vmem:[%s746 + $0x94] sm:$0xf]
    %v990 = vld [vmem:[%s746 + $0xa0] sm:$0xf]
    %v991 = vld [vmem:[%s746 + $0xac] sm:$0xf]
    %v992 = vld [vmem:[%s746 + $0xb8] sm:$0xf]
    %v993 = vld [vmem:[%s763 + $0x1] sm:$0x1]
    %v995 = vlaneseq
    %v996 = vshrl.u32 %v995, 7
    %v997 = vsub.s32 0, %v996
    %v998 = vrot.slane %v993, %v997
    %v1016 = vunpack.c.l.b16 %v977
    %v1017 = vunpack.c.l.b16 %v978
    %v1018 = vunpack.c.l.b16 %v979
    %v1019 = vunpack.c.l.b16 %v980
    %v1020 = vunpack.c.l.b16 %v981
    %v1021 = vunpack.c.l.b16 %v982
    %v1022 = vunpack.c.l.b16 %v983
    %v1023 = vunpack.c.l.b16 %v984
    %v1024 = vunpack.c.l.b16 %v985
    %v1025 = vunpack.c.l.b16 %v986
    %v1026 = vunpack.c.l.b16 %v987
    %v1027 = vunpack.c.l.b16 %v988
    %v1028 = vunpack.c.l.b16 %v989
    %v1029 = vunpack.c.l.b16 %v990
    %v1030 = vunpack.c.l.b16 %v991
    %v1031 = vunpack.c.l.b16 %v992
    %v1032 = vpack.c.b16 %v1017, %v1016
    %v1033 = vpack.c.b16 %v1019, %v1018
    %v1034 = vpack.c.b16 %v1021, %v1020
    %v1035 = vpack.c.b16 %v1023, %v1022
    %v1036 = vpack.c.b16 %v1025, %v1024
    %v1037 = vpack.c.b16 %v1027, %v1026
    %v1038 = vpack.c.b16 %v1029, %v1028
    %v1039 = vpack.c.b16 %v1031, %v1030
    %1048 = vmatprep.subr.bf16.mxu0 0
    %1049 = vmatpush1.bf16.msra.mxu0 %v1039
    %1050 = vmatprep.subr.bf16.mxu0 0
    %1051 = vmatpush1.bf16.msra.mxu0 %v1038
    %1052 = vmatprep.subr.bf16.mxu0 0
    %1053 = vmatpush1.bf16.msra.mxu0 %v1037
    %1054 = vmatprep.subr.bf16.mxu0 0
    %1055 = vmatpush1.bf16.msra.mxu0 %v1036
    %1056 = vmatprep.subr.bf16.mxu0 0
    %1057 = vmatpush1.bf16.msra.mxu0 %v1035
    %1058 = vmatprep.subr.bf16.mxu0 0
    %1059 = vmatpush1.bf16.msra.mxu0 %v1034
    %1060 = vmatprep.subr.bf16.mxu0 0
    %1061 = vmatpush1.bf16.msra.mxu0 %v1033
    %1062 = vmatprep.subr.bf16.mxu0 0
    %1063 = vmatpush1.bf16.msra.mxu0 %v1032
    %1064 = vmatprep.subr.bf16.mxu0 0
    %1065 = vmatpush2.bf16.msra.mxu0 0
    %1066 = vmatprep.subr.bf16.mxu0 0
    %1067 = vmatpush2.bf16.msra.mxu0 0
    %1068 = vmatprep.subr.bf16.mxu0 0
    %1069 = vmatpush2.bf16.msra.mxu0 0
    %1070 = vmatprep.subr.bf16.mxu0 0
    %1071 = vmatpush2.bf16.msra.mxu0 0
    %1072 = vmatprep.subr.bf16.mxu0 0
    %1073 = vmatpush2.bf16.msra.mxu0 0
    %1074 = vmatprep.subr.bf16.mxu0 0
    %1075 = vmatpush2.bf16.msra.mxu0 0
    %1076 = vmatprep.subr.bf16.mxu0 0
    %1077 = vmatpush2.bf16.msra.mxu0 0
    %1078 = vmatprep.subr.bf16.mxu0 0
    %1079 = vmatpush2.bf16.msra.mxu0 0
    %1080 = vmatprep.mubr.bf16.mxu0 0
    %1081 = vmatmul.mubr.bf16.gmra.mxu0 %v744
    %v1082 = vpop.f32.mrf.mxu0
    %v1083 = vadd.f32 %v998, %v1082
    %v1084 = vpop.f32.mrf.mxu0
    %v1085 = vpop.f32.mrf.mxu0
    %v1086 = vpop.f32.mrf.mxu0
    %1087 = vdwg.mxu0
    %v1088 = vld [vmem:[%s859 + $0x4] sm:$0xf]
    %v1089 = vld [vmem:[%s859 + $0x10] sm:$0xf]
    %v1090 = vld [vmem:[%s859 + $0x1c] sm:$0xf]
    %v1091 = vld [vmem:[%s859 + $0x28] sm:$0xf]
    %v1092 = vld [vmem:[%s859 + $0x34] sm:$0xf]
    %v1093 = vld [vmem:[%s859 + $0x40] sm:$0xf]
    %v1094 = vld [vmem:[%s859 + $0x4c] sm:$0xf]
    %v1095 = vld [vmem:[%s859 + $0x58] sm:$0xf]
    %v1096 = vld [vmem:[%s859 + $0x64] sm:$0xf]
    %v1097 = vld [vmem:[%s859 + $0x70] sm:$0xf]
    %v1098 = vld [vmem:[%s859 + $0x7c] sm:$0xf]
    %v1099 = vld [vmem:[%s859 + $0x88] sm:$0xf]
    %v1100 = vld [vmem:[%s859 + $0x94] sm:$0xf]
    %v1101 = vld [vmem:[%s859 + $0xa0] sm:$0xf]
    %v1102 = vld [vmem:[%s859 + $0xac] sm:$0xf]
    %v1103 = vld [vmem:[%s859 + $0xb8] sm:$0xf]
    %v1104 = vld [vmem:[%s876 + $0x1] sm:$0x1]
    %v1106 = vlaneseq
    %v1107 = vshrl.u32 %v1106, 7
    %v1108 = vsub.s32 0, %v1107
    %v1109 = vrot.slane %v1104, %v1108
    %v1127 = vunpack.c.l.b16 %v1088
    %v1128 = vunpack.c.l.b16 %v1089
    %v1129 = vunpack.c.l.b16 %v1090
    %v1130 = vunpack.c.l.b16 %v1091
    %v1131 = vunpack.c.l.b16 %v1092
    %v1132 = vunpack.c.l.b16 %v1093
    %v1133 = vunpack.c.l.b16 %v1094
    %v1134 = vunpack.c.l.b16 %v1095
    %v1135 = vunpack.c.l.b16 %v1096
    %v1136 = vunpack.c.l.b16 %v1097
    %v1137 = vunpack.c.l.b16 %v1098
    %v1138 = vunpack.c.l.b16 %v1099
    %v1139 = vunpack.c.l.b16 %v1100
    %v1140 = vunpack.c.l.b16 %v1101
    %v1141 = vunpack.c.l.b16 %v1102
    %v1142 = vunpack.c.l.b16 %v1103
    %v1143 = vpack.c.b16 %v1128, %v1127
    %v1144 = vpack.c.b16 %v1130, %v1129
    %v1145 = vpack.c.b16 %v1132, %v1131
    %v1146 = vpack.c.b16 %v1134, %v1133
    %v1147 = vpack.c.b16 %v1136, %v1135
    %v1148 = vpack.c.b16 %v1138, %v1137
    %v1149 = vpack.c.b16 %v1140, %v1139
    %v1150 = vpack.c.b16 %v1142, %v1141
    %1159 = vmatprep.subr.bf16.mxu0 0
    %1160 = vmatpush1.bf16.msra.mxu0 %v1150
    %1161 = vmatprep.subr.bf16.mxu0 0
    %1162 = vmatpush1.bf16.msra.mxu0 %v1149
    %1163 = vmatprep.subr.bf16.mxu0 0
    %1164 = vmatpush1.bf16.msra.mxu0 %v1148
    %1165 = vmatprep.subr.bf16.mxu0 0
    %1166 = vmatpush1.bf16.msra.mxu0 %v1147
    %1167 = vmatprep.subr.bf16.mxu0 0
    %1168 = vmatpush1.bf16.msra.mxu0 %v1146
    %1169 = vmatprep.subr.bf16.mxu0 0
    %1170 = vmatpush1.bf16.msra.mxu0 %v1145
    %1171 = vmatprep.subr.bf16.mxu0 0
    %1172 = vmatpush1.bf16.msra.mxu0 %v1144
    %1173 = vmatprep.subr.bf16.mxu0 0
    %1174 = vmatpush1.bf16.msra.mxu0 %v1143
    %1175 = vmatprep.subr.bf16.mxu0 0
    %1176 = vmatpush2.bf16.msra.mxu0 0
    %1177 = vmatprep.subr.bf16.mxu0 0
    %1178 = vmatpush2.bf16.msra.mxu0 0
    %1179 = vmatprep.subr.bf16.mxu0 0
    %1180 = vmatpush2.bf16.msra.mxu0 0
    %1181 = vmatprep.subr.bf16.mxu0 0
    %1182 = vmatpush2.bf16.msra.mxu0 0
    %1183 = vmatprep.subr.bf16.mxu0 0
    %1184 = vmatpush2.bf16.msra.mxu0 0
    %1185 = vmatprep.subr.bf16.mxu0 0
    %1186 = vmatpush2.bf16.msra.mxu0 0
    %1187 = vmatprep.subr.bf16.mxu0 0
    %1188 = vmatpush2.bf16.msra.mxu0 0
    %1189 = vmatprep.subr.bf16.mxu0 0
    %1190 = vmatpush2.bf16.msra.mxu0 0
    %1191 = vmatprep.mubr.bf16.mxu0 0
    %1192 = vmatmul.mubr.bf16.gmra.mxu0 %v745
    %v1193 = vpop.f32.mrf.mxu0
    %v1194 = vadd.f32 %v1109, %v1193
    %v1195 = vpop.f32.mrf.mxu0
    %v1196 = vpop.f32.mrf.mxu0
    %v1197 = vpop.f32.mrf.mxu0
    %1198 = vdwg.mxu0
    %v1199 = vadd.f32 %v1083, %v1194
    %v1200 = vmul.f32 %v1199, 0.5
    %v1201 = vtanh.pop %v1200
    %v1202 = vadd.f32 %v1201, 1.0
    %v1203 = vmul.f32 %v1202, 0.5
    %v1204 = vld [vmem:[%s746 + $0x8] sm:$0xf]
    %v1205 = vld [vmem:[%s746 + $0x14] sm:$0xf]
    %v1206 = vld [vmem:[%s746 + $0x20] sm:$0xf]
    %v1207 = vld [vmem:[%s746 + $0x2c] sm:$0xf]
    %v1208 = vld [vmem:[%s746 + $0x38] sm:$0xf]
    %v1209 = vld [vmem:[%s746 + $0x44] sm:$0xf]
    %v1210 = vld [vmem:[%s746 + $0x50] sm:$0xf]
    %v1211 = vld [vmem:[%s746 + $0x5c] sm:$0xf]
    %v1212 = vld [vmem:[%s746 + $0x68] sm:$0xf]
    %v1213 = vld [vmem:[%s746 + $0x74] sm:$0xf]
    %v1214 = vld [vmem:[%s746 + $0x80] sm:$0xf]
    %v1215 = vld [vmem:[%s746 + $0x8c] sm:$0xf]
    %v1216 = vld [vmem:[%s746 + $0x98] sm:$0xf]
    %v1217 = vld [vmem:[%s746 + $0xa4] sm:$0xf]
    %v1218 = vld [vmem:[%s746 + $0xb0] sm:$0xf]
    %v1219 = vld [vmem:[%s746 + $0xbc] sm:$0xf]
    %v1220 = vld [vmem:[%s763 + $0x2] sm:$0x1]
    %v1222 = vlaneseq
    %v1223 = vshrl.u32 %v1222, 7
    %v1224 = vsub.s32 0, %v1223
    %v1225 = vrot.slane %v1220, %v1224
    %v1243 = vunpack.c.l.b16 %v1204
    %v1244 = vunpack.c.l.b16 %v1205
    %v1245 = vunpack.c.l.b16 %v1206
    %v1246 = vunpack.c.l.b16 %v1207
    %v1247 = vunpack.c.l.b16 %v1208
    %v1248 = vunpack.c.l.b16 %v1209
    %v1249 = vunpack.c.l.b16 %v1210
    %v1250 = vunpack.c.l.b16 %v1211
    %v1251 = vunpack.c.l.b16 %v1212
    %v1252 = vunpack.c.l.b16 %v1213
    %v1253 = vunpack.c.l.b16 %v1214
    %v1254 = vunpack.c.l.b16 %v1215
    %v1255 = vunpack.c.l.b16 %v1216
    %v1256 = vunpack.c.l.b16 %v1217
    %v1257 = vunpack.c.l.b16 %v1218
    %v1258 = vunpack.c.l.b16 %v1219
    %v1259 = vpack.c.b16 %v1244, %v1243
    %v1260 = vpack.c.b16 %v1246, %v1245
    %v1261 = vpack.c.b16 %v1248, %v1247
    %v1262 = vpack.c.b16 %v1250, %v1249
    %v1263 = vpack.c.b16 %v1252, %v1251
    %v1264 = vpack.c.b16 %v1254, %v1253
    %v1265 = vpack.c.b16 %v1256, %v1255
    %v1266 = vpack.c.b16 %v1258, %v1257
    %1275 = vmatprep.subr.bf16.mxu0 0
    %1276 = vmatpush1.bf16.msra.mxu0 %v1266
    %1277 = vmatprep.subr.bf16.mxu0 0
    %1278 = vmatpush1.bf16.msra.mxu0 %v1265
    %1279 = vmatprep.subr.bf16.mxu0 0
    %1280 = vmatpush1.bf16.msra.mxu0 %v1264
    %1281 = vmatprep.subr.bf16.mxu0 0
    %1282 = vmatpush1.bf16.msra.mxu0 %v1263
    %1283 = vmatprep.subr.bf16.mxu0 0
    %1284 = vmatpush1.bf16.msra.mxu0 %v1262
    %1285 = vmatprep.subr.bf16.mxu0 0
    %1286 = vmatpush1.bf16.msra.mxu0 %v1261
    %1287 = vmatprep.subr.bf16.mxu0 0
    %1288 = vmatpush1.bf16.msra.mxu0 %v1260
    %1289 = vmatprep.subr.bf16.mxu0 0
    %1290 = vmatpush1.bf16.msra.mxu0 %v1259
    %1291 = vmatprep.subr.bf16.mxu0 0
    %1292 = vmatpush2.bf16.msra.mxu0 0
    %1293 = vmatprep.subr.bf16.mxu0 0
    %1294 = vmatpush2.bf16.msra.mxu0 0
    %1295 = vmatprep.subr.bf16.mxu0 0
    %1296 = vmatpush2.bf16.msra.mxu0 0
    %1297 = vmatprep.subr.bf16.mxu0 0
    %1298 = vmatpush2.bf16.msra.mxu0 0
    %1299 = vmatprep.subr.bf16.mxu0 0
    %1300 = vmatpush2.bf16.msra.mxu0 0
    %1301 = vmatprep.subr.bf16.mxu0 0
    %1302 = vmatpush2.bf16.msra.mxu0 0
    %1303 = vmatprep.subr.bf16.mxu0 0
    %1304 = vmatpush2.bf16.msra.mxu0 0
    %1305 = vmatprep.subr.bf16.mxu0 0
    %1306 = vmatpush2.bf16.msra.mxu0 0
    %1307 = vmatprep.mubr.bf16.mxu0 0
    %1308 = vmatmul.mubr.bf16.gmra.mxu0 %v744
    %v1309 = vpop.f32.mrf.mxu0
    %v1310 = vadd.f32 %v1225, %v1309
    %v1311 = vpop.f32.mrf.mxu0
    %v1312 = vpop.f32.mrf.mxu0
    %v1313 = vpop.f32.mrf.mxu0
    %1314 = vdwg.mxu0
    %v1315 = vld [vmem:[%s859 + $0x8] sm:$0xf]
    %v1316 = vld [vmem:[%s859 + $0x14] sm:$0xf]
    %v1317 = vld [vmem:[%s859 + $0x20] sm:$0xf]
    %v1318 = vld [vmem:[%s859 + $0x2c] sm:$0xf]
    %v1319 = vld [vmem:[%s859 + $0x38] sm:$0xf]
    %v1320 = vld [vmem:[%s859 + $0x44] sm:$0xf]
    %v1321 = vld [vmem:[%s859 + $0x50] sm:$0xf]
    %v1322 = vld [vmem:[%s859 + $0x5c] sm:$0xf]
    %v1323 = vld [vmem:[%s859 + $0x68] sm:$0xf]
    %v1324 = vld [vmem:[%s859 + $0x74] sm:$0xf]
    %v1325 = vld [vmem:[%s859 + $0x80] sm:$0xf]
    %v1326 = vld [vmem:[%s859 + $0x8c] sm:$0xf]
    %v1327 = vld [vmem:[%s859 + $0x98] sm:$0xf]
    %v1328 = vld [vmem:[%s859 + $0xa4] sm:$0xf]
    %v1329 = vld [vmem:[%s859 + $0xb0] sm:$0xf]
    %v1330 = vld [vmem:[%s859 + $0xbc] sm:$0xf]
    %v1331 = vld [vmem:[%s876 + $0x2] sm:$0x1]
    %v1333 = vlaneseq
    %v1334 = vshrl.u32 %v1333, 7
    %v1335 = vsub.s32 0, %v1334
    %v1336 = vrot.slane %v1331, %v1335
    %v1354 = vunpack.c.l.b16 %v1315
    %v1355 = vunpack.c.l.b16 %v1316
    %v1356 = vunpack.c.l.b16 %v1317
    %v1357 = vunpack.c.l.b16 %v1318
    %v1358 = vunpack.c.l.b16 %v1319
    %v1359 = vunpack.c.l.b16 %v1320
    %v1360 = vunpack.c.l.b16 %v1321
    %v1361 = vunpack.c.l.b16 %v1322
    %v1362 = vunpack.c.l.b16 %v1323
    %v1363 = vunpack.c.l.b16 %v1324
    %v1364 = vunpack.c.l.b16 %v1325
    %v1365 = vunpack.c.l.b16 %v1326
    %v1366 = vunpack.c.l.b16 %v1327
    %v1367 = vunpack.c.l.b16 %v1328
    %v1368 = vunpack.c.l.b16 %v1329
    %v1369 = vunpack.c.l.b16 %v1330
    %v1370 = vpack.c.b16 %v1355, %v1354
    %v1371 = vpack.c.b16 %v1357, %v1356
    %v1372 = vpack.c.b16 %v1359, %v1358
    %v1373 = vpack.c.b16 %v1361, %v1360
    %v1374 = vpack.c.b16 %v1363, %v1362
    %v1375 = vpack.c.b16 %v1365, %v1364
    %v1376 = vpack.c.b16 %v1367, %v1366
    %v1377 = vpack.c.b16 %v1369, %v1368
    %1386 = vmatprep.subr.bf16.mxu0 0
    %1387 = vmatpush1.bf16.msra.mxu0 %v1377
    %1388 = vmatprep.subr.bf16.mxu0 0
    %1389 = vmatpush1.bf16.msra.mxu0 %v1376
    %1390 = vmatprep.subr.bf16.mxu0 0
    %1391 = vmatpush1.bf16.msra.mxu0 %v1375
    %1392 = vmatprep.subr.bf16.mxu0 0
    %1393 = vmatpush1.bf16.msra.mxu0 %v1374
    %1394 = vmatprep.subr.bf16.mxu0 0
    %1395 = vmatpush1.bf16.msra.mxu0 %v1373
    %1396 = vmatprep.subr.bf16.mxu0 0
    %1397 = vmatpush1.bf16.msra.mxu0 %v1372
    %1398 = vmatprep.subr.bf16.mxu0 0
    %1399 = vmatpush1.bf16.msra.mxu0 %v1371
    %1400 = vmatprep.subr.bf16.mxu0 0
    %1401 = vmatpush1.bf16.msra.mxu0 %v1370
    %1402 = vmatprep.subr.bf16.mxu0 0
    %1403 = vmatpush2.bf16.msra.mxu0 0
    %1404 = vmatprep.subr.bf16.mxu0 0
    %1405 = vmatpush2.bf16.msra.mxu0 0
    %1406 = vmatprep.subr.bf16.mxu0 0
    %1407 = vmatpush2.bf16.msra.mxu0 0
    %1408 = vmatprep.subr.bf16.mxu0 0
    %1409 = vmatpush2.bf16.msra.mxu0 0
    %1410 = vmatprep.subr.bf16.mxu0 0
    %1411 = vmatpush2.bf16.msra.mxu0 0
    %1412 = vmatprep.subr.bf16.mxu0 0
    %1413 = vmatpush2.bf16.msra.mxu0 0
    %1414 = vmatprep.subr.bf16.mxu0 0
    %1415 = vmatpush2.bf16.msra.mxu0 0
    %1416 = vmatprep.subr.bf16.mxu0 0
    %1417 = vmatpush2.bf16.msra.mxu0 0
    %1418 = vmatprep.mubr.bf16.mxu0 0
    %1419 = vmatmul.mubr.bf16.gmra.mxu0 %v745
    %v1420 = vpop.f32.mrf.mxu0
    %v1421 = vadd.f32 %v1336, %v1420
    %v1422 = vpop.f32.mrf.mxu0
    %v1423 = vpop.f32.mrf.mxu0
    %v1424 = vpop.f32.mrf.mxu0
    %1425 = vdwg.mxu0
    %v1426 = vmul.f32 %v976, %v1421
    %v1427 = vadd.f32 %v1310, %v1426
    %v1428 = vtanh.pop %v1427
    %v1429 = vsub.f32 1.0, %v1203
    %v1430 = vmul.f32 %v1429, %v1428
    %v1431 = vmul.f32 %v1203, %v743
    %v1432 = vadd.f32 %v1430, %v1431
    %s1433 = scalar_lea.vmem %s12, 8
    %1434 = vst [vmem:[%s1433] sm:$0xff] %v1432
    %v1435 = vpack.c.bf16 %v1432, %v1432
    %v1438 = vunpack.c.l.s4 1966171168
    %v1439 = vunpack.c.0.s8 %v1438
    %v1440 = vlaneseq
    %v1441 = vshrl.u32 %v1440, 7
    %v1442 = vsub.s32 %v1439, %v1441
    %v1443 = vrot.slane %v1435, %v1442
    %v1444 = vcombine.high %v1443, %v1443
    %v1446 = vunpack.c.l.s4 1966171168
    %v1447 = vunpack.c.0.s8 %v1446
    %v1448 = vlaneseq
    %v1449 = vshrl.u32 %v1448, 7
    %v1450 = vsub.s32 %v1447, %v1449
    %v1451 = vrot.slane %v1443, %v1450
    %v1453 = vunpack.c.l.s4 1966171168
    %v1454 = vunpack.c.0.s8 %v1453
    %v1455 = vlaneseq
    %v1456 = vshrl.u32 %v1455, 7
    %v1457 = vsub.s32 %v1454, %v1456
    %v1458 = vrot.slane %v1444, %v1457
    %v1459 = vcombine.high %v1451, %v1451
    %v1460 = vcombine.high %v1458, %v1458
    %v1461 = vunpack.i.l.s16 %v1451
    %v1462 = vunpack.i.h.s16 %v1451
    %v1463 = vunpack.i.l.s16 %v1458
    %v1464 = vunpack.i.h.s16 %v1458
    %v1465 = vunpack.i.l.s16 %v1459
    %v1466 = vunpack.i.h.s16 %v1459
    %v1467 = vunpack.i.l.s16 %v1460
    %v1468 = vunpack.i.h.s16 %v1460
    %v1469 = vld [vmem:[%s3] sm:$0xf]
    %v1470 = vld [vmem:[%s3 + $0x4] sm:$0xf]
    %v1471 = vld [vmem:[%s3 + $0x8] sm:$0xf]
    %v1472 = vld [vmem:[%s3 + $0xc] sm:$0xf]
    %v1473 = vld [vmem:[%s3 + $0x10] sm:$0xf]
    %v1474 = vld [vmem:[%s3 + $0x14] sm:$0xf]
    %v1475 = vld [vmem:[%s3 + $0x18] sm:$0xf]
    %v1476 = vld [vmem:[%s3 + $0x1c] sm:$0xf]
    %v1477 = vld [vmem:[%s3 + $0x20] sm:$0xf]
    %v1478 = vld [vmem:[%s3 + $0x24] sm:$0xf]
    %v1479 = vld [vmem:[%s3 + $0x28] sm:$0xf]
    %v1480 = vld [vmem:[%s3 + $0x2c] sm:$0xf]
    %v1481 = vld [vmem:[%s3 + $0x30] sm:$0xf]
    %v1482 = vld [vmem:[%s3 + $0x34] sm:$0xf]
    %v1483 = vld [vmem:[%s3 + $0x38] sm:$0xf]
    %v1484 = vld [vmem:[%s3 + $0x3c] sm:$0xf]
    %v1485 = vld [vmem:[%s3 + $0x40] sm:$0xf]
    %v1486 = vld [vmem:[%s3 + $0x44] sm:$0xf]
    %v1487 = vld [vmem:[%s3 + $0x48] sm:$0xf]
    %v1488 = vld [vmem:[%s3 + $0x4c] sm:$0xf]
    %v1489 = vld [vmem:[%s3 + $0x50] sm:$0xf]
    %v1490 = vld [vmem:[%s3 + $0x54] sm:$0xf]
    %v1491 = vld [vmem:[%s3 + $0x58] sm:$0xf]
    %v1492 = vld [vmem:[%s3 + $0x5c] sm:$0xf]
    %v1493 = vld [vmem:[%s3 + $0x60] sm:$0xf]
    %v1494 = vld [vmem:[%s3 + $0x64] sm:$0xf]
    %v1495 = vld [vmem:[%s3 + $0x68] sm:$0xf]
    %v1496 = vld [vmem:[%s3 + $0x6c] sm:$0xf]
    %v1497 = vld [vmem:[%s3 + $0x70] sm:$0xf]
    %v1498 = vld [vmem:[%s3 + $0x74] sm:$0xf]
    %v1499 = vld [vmem:[%s3 + $0x78] sm:$0xf]
    %v1500 = vld [vmem:[%s3 + $0x7c] sm:$0xf]
    %v1501 = vld [vmem:[%s3 + $0x80] sm:$0xf]
    %v1502 = vld [vmem:[%s3 + $0x84] sm:$0xf]
    %v1503 = vld [vmem:[%s3 + $0x88] sm:$0xf]
    %v1504 = vld [vmem:[%s3 + $0x8c] sm:$0xf]
    %v1505 = vld [vmem:[%s3 + $0x90] sm:$0xf]
    %v1506 = vld [vmem:[%s3 + $0x94] sm:$0xf]
    %v1507 = vld [vmem:[%s3 + $0x98] sm:$0xf]
    %v1508 = vld [vmem:[%s3 + $0x9c] sm:$0xf]
    %v1509 = vld [vmem:[%s3 + $0xa0] sm:$0xf]
    %v1510 = vld [vmem:[%s3 + $0xa4] sm:$0xf]
    %v1511 = vld [vmem:[%s3 + $0xa8] sm:$0xf]
    %v1512 = vld [vmem:[%s3 + $0xac] sm:$0xf]
    %v1513 = vld [vmem:[%s3 + $0xb0] sm:$0xf]
    %v1514 = vld [vmem:[%s3 + $0xb4] sm:$0xf]
    %v1515 = vld [vmem:[%s3 + $0xb8] sm:$0xf]
    %v1516 = vld [vmem:[%s3 + $0xbc] sm:$0xf]
    %v1517 = vld [vmem:[%s3 + $0xc0] sm:$0xf]
    %v1518 = vld [vmem:[%s3 + $0xc4] sm:$0xf]
    %v1519 = vld [vmem:[%s3 + $0xc8] sm:$0xf]
    %v1520 = vld [vmem:[%s3 + $0xcc] sm:$0xf]
    %v1521 = vld [vmem:[%s3 + $0xd0] sm:$0xf]
    %v1522 = vld [vmem:[%s3 + $0xd4] sm:$0xf]
    %v1523 = vld [vmem:[%s3 + $0xd8] sm:$0xf]
    %v1524 = vld [vmem:[%s3 + $0xdc] sm:$0xf]
    %v1525 = vld [vmem:[%s3 + $0xe0] sm:$0xf]
    %v1526 = vld [vmem:[%s3 + $0xe4] sm:$0xf]
    %v1527 = vld [vmem:[%s3 + $0xe8] sm:$0xf]
    %v1528 = vld [vmem:[%s3 + $0xec] sm:$0xf]
    %v1529 = vld [vmem:[%s3 + $0xf0] sm:$0xf]
    %v1530 = vld [vmem:[%s3 + $0xf4] sm:$0xf]
    %v1531 = vld [vmem:[%s3 + $0xf8] sm:$0xf]
    %v1532 = vld [vmem:[%s3 + $0xfc] sm:$0xf]
    %v1533 = vld [vmem:[%s3 + $0x100] sm:$0xf]
    %v1534 = vld [vmem:[%s3 + $0x104] sm:$0xf]
    %v1535 = vld [vmem:[%s3 + $0x108] sm:$0xf]
    %v1536 = vld [vmem:[%s3 + $0x10c] sm:$0xf]
    %v1537 = vld [vmem:[%s3 + $0x110] sm:$0xf]
    %v1538 = vld [vmem:[%s3 + $0x114] sm:$0xf]
    %v1539 = vld [vmem:[%s3 + $0x118] sm:$0xf]
    %v1540 = vld [vmem:[%s3 + $0x11c] sm:$0xf]
    %v1541 = vld [vmem:[%s3 + $0x120] sm:$0xf]
    %v1542 = vld [vmem:[%s3 + $0x124] sm:$0xf]
    %v1543 = vld [vmem:[%s3 + $0x128] sm:$0xf]
    %v1544 = vld [vmem:[%s3 + $0x12c] sm:$0xf]
    %v1545 = vld [vmem:[%s3 + $0x130] sm:$0xf]
    %v1546 = vld [vmem:[%s3 + $0x134] sm:$0xf]
    %v1547 = vld [vmem:[%s3 + $0x138] sm:$0xf]
    %v1548 = vld [vmem:[%s3 + $0x13c] sm:$0xf]
    %v1549 = vld [vmem:[%s3 + $0x140] sm:$0xf]
    %v1550 = vld [vmem:[%s3 + $0x144] sm:$0xf]
    %v1551 = vld [vmem:[%s3 + $0x148] sm:$0xf]
    %v1552 = vld [vmem:[%s3 + $0x14c] sm:$0xf]
    %v1553 = vld [vmem:[%s3 + $0x150] sm:$0xf]
    %v1554 = vld [vmem:[%s3 + $0x154] sm:$0xf]
    %v1555 = vld [vmem:[%s3 + $0x158] sm:$0xf]
    %v1556 = vld [vmem:[%s3 + $0x15c] sm:$0xf]
    %v1557 = vld [vmem:[%s3 + $0x160] sm:$0xf]
    %v1558 = vld [vmem:[%s3 + $0x164] sm:$0xf]
    %v1559 = vld [vmem:[%s3 + $0x168] sm:$0xf]
    %v1560 = vld [vmem:[%s3 + $0x16c] sm:$0xf]
    %v1561 = vld [vmem:[%s3 + $0x170] sm:$0xf]
    %v1562 = vld [vmem:[%s3 + $0x174] sm:$0xf]
    %v1563 = vld [vmem:[%s3 + $0x178] sm:$0xf]
    %v1564 = vld [vmem:[%s3 + $0x17c] sm:$0xf]
    %v1565 = vld [vmem:[%s3 + $0x180] sm:$0xf]
    %v1566 = vld [vmem:[%s3 + $0x184] sm:$0xf]
    %v1567 = vld [vmem:[%s3 + $0x188] sm:$0xf]
    %v1568 = vld [vmem:[%s3 + $0x18c] sm:$0xf]
    %v1569 = vld [vmem:[%s3 + $0x190] sm:$0xf]
    %v1570 = vld [vmem:[%s3 + $0x194] sm:$0xf]
    %v1571 = vld [vmem:[%s3 + $0x198] sm:$0xf]
    %v1572 = vld [vmem:[%s3 + $0x19c] sm:$0xf]
    %v1573 = vld [vmem:[%s3 + $0x1a0] sm:$0xf]
    %v1574 = vld [vmem:[%s3 + $0x1a4] sm:$0xf]
    %v1575 = vld [vmem:[%s3 + $0x1a8] sm:$0xf]
    %v1576 = vld [vmem:[%s3 + $0x1ac] sm:$0xf]
    %v1577 = vld [vmem:[%s3 + $0x1b0] sm:$0xf]
    %v1578 = vld [vmem:[%s3 + $0x1b4] sm:$0xf]
    %v1579 = vld [vmem:[%s3 + $0x1b8] sm:$0xf]
    %v1580 = vld [vmem:[%s3 + $0x1bc] sm:$0xf]
    %v1581 = vld [vmem:[%s3 + $0x1c0] sm:$0xf]
    %v1582 = vld [vmem:[%s3 + $0x1c4] sm:$0xf]
    %v1583 = vld [vmem:[%s3 + $0x1c8] sm:$0xf]
    %v1584 = vld [vmem:[%s3 + $0x1cc] sm:$0xf]
    %v1585 = vld [vmem:[%s3 + $0x1d0] sm:$0xf]
    %v1586 = vld [vmem:[%s3 + $0x1d4] sm:$0xf]
    %v1587 = vld [vmem:[%s3 + $0x1d8] sm:$0xf]
    %v1588 = vld [vmem:[%s3 + $0x1dc] sm:$0xf]
    %v1589 = vld [vmem:[%s3 + $0x1e0] sm:$0xf]
    %v1590 = vld [vmem:[%s3 + $0x1e4] sm:$0xf]
    %v1591 = vld [vmem:[%s3 + $0x1e8] sm:$0xf]
    %v1592 = vld [vmem:[%s3 + $0x1ec] sm:$0xf]
    %v1593 = vld [vmem:[%s3 + $0x1f0] sm:$0xf]
    %v1594 = vld [vmem:[%s3 + $0x1f4] sm:$0xf]
    %v1595 = vld [vmem:[%s3 + $0x1f8] sm:$0xf]
    %v1596 = vld [vmem:[%s3 + $0x1fc] sm:$0xf]
    %v1597 = vpack.i.b16 %v1461, %v1461
    %v1598 = vlaneseq
    %v1599 = vshrl.u32 %v1598, 7
    %v1600 = vsub.s32 0, %v1599
    %v1601 = vrot.slane %v1597, %v1600
    %v1619 = vunpack.c.l.b16 %v1469
    %v1620 = vunpack.c.l.b16 %v1470
    %v1621 = vunpack.c.l.b16 %v1471
    %v1622 = vunpack.c.l.b16 %v1472
    %v1623 = vunpack.c.l.b16 %v1473
    %v1624 = vunpack.c.l.b16 %v1474
    %v1625 = vunpack.c.l.b16 %v1475
    %v1626 = vunpack.c.l.b16 %v1476
    %v1627 = vunpack.c.l.b16 %v1477
    %v1628 = vunpack.c.l.b16 %v1478
    %v1629 = vunpack.c.l.b16 %v1479
    %v1630 = vunpack.c.l.b16 %v1480
    %v1631 = vunpack.c.l.b16 %v1481
    %v1632 = vunpack.c.l.b16 %v1482
    %v1633 = vunpack.c.l.b16 %v1483
    %v1634 = vunpack.c.l.b16 %v1484
    %v1635 = vpack.c.b16 %v1620, %v1619
    %v1636 = vpack.c.b16 %v1622, %v1621
    %v1637 = vpack.c.b16 %v1624, %v1623
    %v1638 = vpack.c.b16 %v1626, %v1625
    %v1639 = vpack.c.b16 %v1628, %v1627
    %v1640 = vpack.c.b16 %v1630, %v1629
    %v1641 = vpack.c.b16 %v1632, %v1631
    %v1642 = vpack.c.b16 %v1634, %v1633
    %1651 = vmatprep.subr.bf16.mxu0 0
    %1652 = vmatpush1.bf16.msra.mxu0 %v1642
    %1653 = vmatprep.subr.bf16.mxu0 0
    %1654 = vmatpush1.bf16.msra.mxu0 %v1641
    %1655 = vmatprep.subr.bf16.mxu0 0
    %1656 = vmatpush1.bf16.msra.mxu0 %v1640
    %1657 = vmatprep.subr.bf16.mxu0 0
    %1658 = vmatpush1.bf16.msra.mxu0 %v1639
    %1659 = vmatprep.subr.bf16.mxu0 0
    %1660 = vmatpush1.bf16.msra.mxu0 %v1638
    %1661 = vmatprep.subr.bf16.mxu0 0
    %1662 = vmatpush1.bf16.msra.mxu0 %v1637
    %1663 = vmatprep.subr.bf16.mxu0 0
    %1664 = vmatpush1.bf16.msra.mxu0 %v1636
    %1665 = vmatprep.subr.bf16.mxu0 0
    %1666 = vmatpush1.bf16.msra.mxu0 %v1635
    %1667 = vmatprep.subr.bf16.mxu0 0
    %1668 = vmatpush2.bf16.msra.mxu0 0
    %1669 = vmatprep.subr.bf16.mxu0 0
    %1670 = vmatpush2.bf16.msra.mxu0 0
    %1671 = vmatprep.subr.bf16.mxu0 0
    %1672 = vmatpush2.bf16.msra.mxu0 0
    %1673 = vmatprep.subr.bf16.mxu0 0
    %1674 = vmatpush2.bf16.msra.mxu0 0
    %1675 = vmatprep.subr.bf16.mxu0 0
    %1676 = vmatpush2.bf16.msra.mxu0 0
    %1677 = vmatprep.subr.bf16.mxu0 0
    %1678 = vmatpush2.bf16.msra.mxu0 0
    %1679 = vmatprep.subr.bf16.mxu0 0
    %1680 = vmatpush2.bf16.msra.mxu0 0
    %1681 = vmatprep.subr.bf16.mxu0 0
    %1682 = vmatpush2.bf16.msra.mxu0 0
    %1683 = vmatprep.mubr.bf16.mxu0 0
    %1684 = vmatmul.mubr.bf16.gmra.mxu0 %v1601
    %v1685 = vpop.f32.mrf.mxu0
    %v1686 = vadd.f32 0.0, %v1685
    %v1687 = vpop.f32.mrf.mxu0
    %v1688 = vpop.f32.mrf.mxu0
    %v1689 = vpop.f32.mrf.mxu0
    %1690 = vdwg.mxu0
    %v1691 = vpack.i.b16 %v1462, %v1462
    %v1692 = vlaneseq
    %v1693 = vshrl.u32 %v1692, 7
    %v1694 = vsub.s32 0, %v1693
    %v1695 = vrot.slane %v1691, %v1694
    %v1713 = vunpack.c.l.b16 %v1485
    %v1714 = vunpack.c.l.b16 %v1486
    %v1715 = vunpack.c.l.b16 %v1487
    %v1716 = vunpack.c.l.b16 %v1488
    %v1717 = vunpack.c.l.b16 %v1489
    %v1718 = vunpack.c.l.b16 %v1490
    %v1719 = vunpack.c.l.b16 %v1491
    %v1720 = vunpack.c.l.b16 %v1492
    %v1721 = vunpack.c.l.b16 %v1493
    %v1722 = vunpack.c.l.b16 %v1494
    %v1723 = vunpack.c.l.b16 %v1495
    %v1724 = vunpack.c.l.b16 %v1496
    %v1725 = vunpack.c.l.b16 %v1497
    %v1726 = vunpack.c.l.b16 %v1498
    %v1727 = vunpack.c.l.b16 %v1499
    %v1728 = vunpack.c.l.b16 %v1500
    %v1729 = vpack.c.b16 %v1714, %v1713
    %v1730 = vpack.c.b16 %v1716, %v1715
    %v1731 = vpack.c.b16 %v1718, %v1717
    %v1732 = vpack.c.b16 %v1720, %v1719
    %v1733 = vpack.c.b16 %v1722, %v1721
    %v1734 = vpack.c.b16 %v1724, %v1723
    %v1735 = vpack.c.b16 %v1726, %v1725
    %v1736 = vpack.c.b16 %v1728, %v1727
    %1745 = vmatprep.subr.bf16.mxu0 0
    %1746 = vmatpush1.bf16.msra.mxu0 %v1736
    %1747 = vmatprep.subr.bf16.mxu0 0
    %1748 = vmatpush1.bf16.msra.mxu0 %v1735
    %1749 = vmatprep.subr.bf16.mxu0 0
    %1750 = vmatpush1.bf16.msra.mxu0 %v1734
    %1751 = vmatprep.subr.bf16.mxu0 0
    %1752 = vmatpush1.bf16.msra.mxu0 %v1733
    %1753 = vmatprep.subr.bf16.mxu0 0
    %1754 = vmatpush1.bf16.msra.mxu0 %v1732
    %1755 = vmatprep.subr.bf16.mxu0 0
    %1756 = vmatpush1.bf16.msra.mxu0 %v1731
    %1757 = vmatprep.subr.bf16.mxu0 0
    %1758 = vmatpush1.bf16.msra.mxu0 %v1730
    %1759 = vmatprep.subr.bf16.mxu0 0
    %1760 = vmatpush1.bf16.msra.mxu0 %v1729
    %1761 = vmatprep.subr.bf16.mxu0 0
    %1762 = vmatpush2.bf16.msra.mxu0 0
    %1763 = vmatprep.subr.bf16.mxu0 0
    %1764 = vmatpush2.bf16.msra.mxu0 0
    %1765 = vmatprep.subr.bf16.mxu0 0
    %1766 = vmatpush2.bf16.msra.mxu0 0
    %1767 = vmatprep.subr.bf16.mxu0 0
    %1768 = vmatpush2.bf16.msra.mxu0 0
    %1769 = vmatprep.subr.bf16.mxu0 0
    %1770 = vmatpush2.bf16.msra.mxu0 0
    %1771 = vmatprep.subr.bf16.mxu0 0
    %1772 = vmatpush2.bf16.msra.mxu0 0
    %1773 = vmatprep.subr.bf16.mxu0 0
    %1774 = vmatpush2.bf16.msra.mxu0 0
    %1775 = vmatprep.subr.bf16.mxu0 0
    %1776 = vmatpush2.bf16.msra.mxu0 0
    %1777 = vmatprep.mubr.bf16.mxu0 0
    %1778 = vmatmul.mubr.bf16.gmra.mxu0 %v1695
    %v1779 = vpop.f32.mrf.mxu0
    %v1780 = vadd.f32 0.0, %v1779
    %v1781 = vpop.f32.mrf.mxu0
    %v1782 = vpop.f32.mrf.mxu0
    %v1783 = vpop.f32.mrf.mxu0
    %1784 = vdwg.mxu0
    %v1785 = vpack.i.b16 %v1463, %v1463
    %v1786 = vlaneseq
    %v1787 = vshrl.u32 %v1786, 7
    %v1788 = vsub.s32 0, %v1787
    %v1789 = vrot.slane %v1785, %v1788
    %v1807 = vunpack.c.l.b16 %v1501
    %v1808 = vunpack.c.l.b16 %v1502
    %v1809 = vunpack.c.l.b16 %v1503
    %v1810 = vunpack.c.l.b16 %v1504
    %v1811 = vunpack.c.l.b16 %v1505
    %v1812 = vunpack.c.l.b16 %v1506
    %v1813 = vunpack.c.l.b16 %v1507
    %v1814 = vunpack.c.l.b16 %v1508
    %v1815 = vunpack.c.l.b16 %v1509
    %v1816 = vunpack.c.l.b16 %v1510
    %v1817 = vunpack.c.l.b16 %v1511
    %v1818 = vunpack.c.l.b16 %v1512
    %v1819 = vunpack.c.l.b16 %v1513
    %v1820 = vunpack.c.l.b16 %v1514
    %v1821 = vunpack.c.l.b16 %v1515
    %v1822 = vunpack.c.l.b16 %v1516
    %v1823 = vpack.c.b16 %v1808, %v1807
    %v1824 = vpack.c.b16 %v1810, %v1809
    %v1825 = vpack.c.b16 %v1812, %v1811
    %v1826 = vpack.c.b16 %v1814, %v1813
    %v1827 = vpack.c.b16 %v1816, %v1815
    %v1828 = vpack.c.b16 %v1818, %v1817
    %v1829 = vpack.c.b16 %v1820, %v1819
    %v1830 = vpack.c.b16 %v1822, %v1821
    %1839 = vmatprep.subr.bf16.mxu0 0
    %1840 = vmatpush1.bf16.msra.mxu0 %v1830
    %1841 = vmatprep.subr.bf16.mxu0 0
    %1842 = vmatpush1.bf16.msra.mxu0 %v1829
    %1843 = vmatprep.subr.bf16.mxu0 0
    %1844 = vmatpush1.bf16.msra.mxu0 %v1828
    %1845 = vmatprep.subr.bf16.mxu0 0
    %1846 = vmatpush1.bf16.msra.mxu0 %v1827
    %1847 = vmatprep.subr.bf16.mxu0 0
    %1848 = vmatpush1.bf16.msra.mxu0 %v1826
    %1849 = vmatprep.subr.bf16.mxu0 0
    %1850 = vmatpush1.bf16.msra.mxu0 %v1825
    %1851 = vmatprep.subr.bf16.mxu0 0
    %1852 = vmatpush1.bf16.msra.mxu0 %v1824
    %1853 = vmatprep.subr.bf16.mxu0 0
    %1854 = vmatpush1.bf16.msra.mxu0 %v1823
    %1855 = vmatprep.subr.bf16.mxu0 0
    %1856 = vmatpush2.bf16.msra.mxu0 0
    %1857 = vmatprep.subr.bf16.mxu0 0
    %1858 = vmatpush2.bf16.msra.mxu0 0
    %1859 = vmatprep.subr.bf16.mxu0 0
    %1860 = vmatpush2.bf16.msra.mxu0 0
    %1861 = vmatprep.subr.bf16.mxu0 0
    %1862 = vmatpush2.bf16.msra.mxu0 0
    %1863 = vmatprep.subr.bf16.mxu0 0
    %1864 = vmatpush2.bf16.msra.mxu0 0
    %1865 = vmatprep.subr.bf16.mxu0 0
    %1866 = vmatpush2.bf16.msra.mxu0 0
    %1867 = vmatprep.subr.bf16.mxu0 0
    %1868 = vmatpush2.bf16.msra.mxu0 0
    %1869 = vmatprep.subr.bf16.mxu0 0
    %1870 = vmatpush2.bf16.msra.mxu0 0
    %1871 = vmatprep.mubr.bf16.mxu0 0
    %1872 = vmatmul.mubr.bf16.gmra.mxu0 %v1789
    %v1873 = vpop.f32.mrf.mxu0
    %v1874 = vadd.f32 0.0, %v1873
    %v1875 = vpop.f32.mrf.mxu0
    %v1876 = vpop.f32.mrf.mxu0
    %v1877 = vpop.f32.mrf.mxu0
    %1878 = vdwg.mxu0
    %v1879 = vpack.i.b16 %v1464, %v1464
    %v1880 = vlaneseq
    %v1881 = vshrl.u32 %v1880, 7
    %v1882 = vsub.s32 0, %v1881
    %v1883 = vrot.slane %v1879, %v1882
    %v1901 = vunpack.c.l.b16 %v1517
    %v1902 = vunpack.c.l.b16 %v1518
    %v1903 = vunpack.c.l.b16 %v1519
    %v1904 = vunpack.c.l.b16 %v1520
    %v1905 = vunpack.c.l.b16 %v1521
    %v1906 = vunpack.c.l.b16 %v1522
    %v1907 = vunpack.c.l.b16 %v1523
    %v1908 = vunpack.c.l.b16 %v1524
    %v1909 = vunpack.c.l.b16 %v1525
    %v1910 = vunpack.c.l.b16 %v1526
    %v1911 = vunpack.c.l.b16 %v1527
    %v1912 = vunpack.c.l.b16 %v1528
    %v1913 = vunpack.c.l.b16 %v1529
    %v1914 = vunpack.c.l.b16 %v1530
    %v1915 = vunpack.c.l.b16 %v1531
    %v1916 = vunpack.c.l.b16 %v1532
    %v1917 = vpack.c.b16 %v1902, %v1901
    %v1918 = vpack.c.b16 %v1904, %v1903
    %v1919 = vpack.c.b16 %v1906, %v1905
    %v1920 = vpack.c.b16 %v1908, %v1907
    %v1921 = vpack.c.b16 %v1910, %v1909
    %v1922 = vpack.c.b16 %v1912, %v1911
    %v1923 = vpack.c.b16 %v1914, %v1913
    %v1924 = vpack.c.b16 %v1916, %v1915
    %1933 = vmatprep.subr.bf16.mxu0 0
    %1934 = vmatpush1.bf16.msra.mxu0 %v1924
    %1935 = vmatprep.subr.bf16.mxu0 0
    %1936 = vmatpush1.bf16.msra.mxu0 %v1923
    %1937 = vmatprep.subr.bf16.mxu0 0
    %1938 = vmatpush1.bf16.msra.mxu0 %v1922
    %1939 = vmatprep.subr.bf16.mxu0 0
    %1940 = vmatpush1.bf16.msra.mxu0 %v1921
    %1941 = vmatprep.subr.bf16.mxu0 0
    %1942 = vmatpush1.bf16.msra.mxu0 %v1920
    %1943 = vmatprep.subr.bf16.mxu0 0
    %1944 = vmatpush1.bf16.msra.mxu0 %v1919
    %1945 = vmatprep.subr.bf16.mxu0 0
    %1946 = vmatpush1.bf16.msra.mxu0 %v1918
    %1947 = vmatprep.subr.bf16.mxu0 0
    %1948 = vmatpush1.bf16.msra.mxu0 %v1917
    %1949 = vmatprep.subr.bf16.mxu0 0
    %1950 = vmatpush2.bf16.msra.mxu0 0
    %1951 = vmatprep.subr.bf16.mxu0 0
    %1952 = vmatpush2.bf16.msra.mxu0 0
    %1953 = vmatprep.subr.bf16.mxu0 0
    %1954 = vmatpush2.bf16.msra.mxu0 0
    %1955 = vmatprep.subr.bf16.mxu0 0
    %1956 = vmatpush2.bf16.msra.mxu0 0
    %1957 = vmatprep.subr.bf16.mxu0 0
    %1958 = vmatpush2.bf16.msra.mxu0 0
    %1959 = vmatprep.subr.bf16.mxu0 0
    %1960 = vmatpush2.bf16.msra.mxu0 0
    %1961 = vmatprep.subr.bf16.mxu0 0
    %1962 = vmatpush2.bf16.msra.mxu0 0
    %1963 = vmatprep.subr.bf16.mxu0 0
    %1964 = vmatpush2.bf16.msra.mxu0 0
    %1965 = vmatprep.mubr.bf16.mxu0 0
    %1966 = vmatmul.mubr.bf16.gmra.mxu0 %v1883
    %v1967 = vpop.f32.mrf.mxu0
    %v1968 = vadd.f32 0.0, %v1967
    %v1969 = vpop.f32.mrf.mxu0
    %v1970 = vpop.f32.mrf.mxu0
    %v1971 = vpop.f32.mrf.mxu0
    %1972 = vdwg.mxu0
    %v1973 = vpack.i.b16 %v1465, %v1465
    %v1974 = vlaneseq
    %v1975 = vshrl.u32 %v1974, 7
    %v1976 = vsub.s32 0, %v1975
    %v1977 = vrot.slane %v1973, %v1976
    %v1995 = vunpack.c.l.b16 %v1533
    %v1996 = vunpack.c.l.b16 %v1534
    %v1997 = vunpack.c.l.b16 %v1535
    %v1998 = vunpack.c.l.b16 %v1536
    %v1999 = vunpack.c.l.b16 %v1537
    %v2000 = vunpack.c.l.b16 %v1538
    %v2001 = vunpack.c.l.b16 %v1539
    %v2002 = vunpack.c.l.b16 %v1540
    %v2003 = vunpack.c.l.b16 %v1541
    %v2004 = vunpack.c.l.b16 %v1542
    %v2005 = vunpack.c.l.b16 %v1543
    %v2006 = vunpack.c.l.b16 %v1544
    %v2007 = vunpack.c.l.b16 %v1545
    %v2008 = vunpack.c.l.b16 %v1546
    %v2009 = vunpack.c.l.b16 %v1547
    %v2010 = vunpack.c.l.b16 %v1548
    %v2011 = vpack.c.b16 %v1996, %v1995
    %v2012 = vpack.c.b16 %v1998, %v1997
    %v2013 = vpack.c.b16 %v2000, %v1999
    %v2014 = vpack.c.b16 %v2002, %v2001
    %v2015 = vpack.c.b16 %v2004, %v2003
    %v2016 = vpack.c.b16 %v2006, %v2005
    %v2017 = vpack.c.b16 %v2008, %v2007
    %v2018 = vpack.c.b16 %v2010, %v2009
    %2027 = vmatprep.subr.bf16.mxu0 0
    %2028 = vmatpush1.bf16.msra.mxu0 %v2018
    %2029 = vmatprep.subr.bf16.mxu0 0
    %2030 = vmatpush1.bf16.msra.mxu0 %v2017
    %2031 = vmatprep.subr.bf16.mxu0 0
    %2032 = vmatpush1.bf16.msra.mxu0 %v2016
    %2033 = vmatprep.subr.bf16.mxu0 0
    %2034 = vmatpush1.bf16.msra.mxu0 %v2015
    %2035 = vmatprep.subr.bf16.mxu0 0
    %2036 = vmatpush1.bf16.msra.mxu0 %v2014
    %2037 = vmatprep.subr.bf16.mxu0 0
    %2038 = vmatpush1.bf16.msra.mxu0 %v2013
    %2039 = vmatprep.subr.bf16.mxu0 0
    %2040 = vmatpush1.bf16.msra.mxu0 %v2012
    %2041 = vmatprep.subr.bf16.mxu0 0
    %2042 = vmatpush1.bf16.msra.mxu0 %v2011
    %2043 = vmatprep.subr.bf16.mxu0 0
    %2044 = vmatpush2.bf16.msra.mxu0 0
    %2045 = vmatprep.subr.bf16.mxu0 0
    %2046 = vmatpush2.bf16.msra.mxu0 0
    %2047 = vmatprep.subr.bf16.mxu0 0
    %2048 = vmatpush2.bf16.msra.mxu0 0
    %2049 = vmatprep.subr.bf16.mxu0 0
    %2050 = vmatpush2.bf16.msra.mxu0 0
    %2051 = vmatprep.subr.bf16.mxu0 0
    %2052 = vmatpush2.bf16.msra.mxu0 0
    %2053 = vmatprep.subr.bf16.mxu0 0
    %2054 = vmatpush2.bf16.msra.mxu0 0
    %2055 = vmatprep.subr.bf16.mxu0 0
    %2056 = vmatpush2.bf16.msra.mxu0 0
    %2057 = vmatprep.subr.bf16.mxu0 0
    %2058 = vmatpush2.bf16.msra.mxu0 0
    %2059 = vmatprep.mubr.bf16.mxu0 0
    %2060 = vmatmul.mubr.bf16.gmra.mxu0 %v1977
    %v2061 = vpop.f32.mrf.mxu0
    %v2062 = vadd.f32 0.0, %v2061
    %v2063 = vpop.f32.mrf.mxu0
    %v2064 = vpop.f32.mrf.mxu0
    %v2065 = vpop.f32.mrf.mxu0
    %2066 = vdwg.mxu0
    %v2067 = vpack.i.b16 %v1466, %v1466
    %v2068 = vlaneseq
    %v2069 = vshrl.u32 %v2068, 7
    %v2070 = vsub.s32 0, %v2069
    %v2071 = vrot.slane %v2067, %v2070
    %v2089 = vunpack.c.l.b16 %v1549
    %v2090 = vunpack.c.l.b16 %v1550
    %v2091 = vunpack.c.l.b16 %v1551
    %v2092 = vunpack.c.l.b16 %v1552
    %v2093 = vunpack.c.l.b16 %v1553
    %v2094 = vunpack.c.l.b16 %v1554
    %v2095 = vunpack.c.l.b16 %v1555
    %v2096 = vunpack.c.l.b16 %v1556
    %v2097 = vunpack.c.l.b16 %v1557
    %v2098 = vunpack.c.l.b16 %v1558
    %v2099 = vunpack.c.l.b16 %v1559
    %v2100 = vunpack.c.l.b16 %v1560
    %v2101 = vunpack.c.l.b16 %v1561
    %v2102 = vunpack.c.l.b16 %v1562
    %v2103 = vunpack.c.l.b16 %v1563
    %v2104 = vunpack.c.l.b16 %v1564
    %v2105 = vpack.c.b16 %v2090, %v2089
    %v2106 = vpack.c.b16 %v2092, %v2091
    %v2107 = vpack.c.b16 %v2094, %v2093
    %v2108 = vpack.c.b16 %v2096, %v2095
    %v2109 = vpack.c.b16 %v2098, %v2097
    %v2110 = vpack.c.b16 %v2100, %v2099
    %v2111 = vpack.c.b16 %v2102, %v2101
    %v2112 = vpack.c.b16 %v2104, %v2103
    %2121 = vmatprep.subr.bf16.mxu0 0
    %2122 = vmatpush1.bf16.msra.mxu0 %v2112
    %2123 = vmatprep.subr.bf16.mxu0 0
    %2124 = vmatpush1.bf16.msra.mxu0 %v2111
    %2125 = vmatprep.subr.bf16.mxu0 0
    %2126 = vmatpush1.bf16.msra.mxu0 %v2110
    %2127 = vmatprep.subr.bf16.mxu0 0
    %2128 = vmatpush1.bf16.msra.mxu0 %v2109
    %2129 = vmatprep.subr.bf16.mxu0 0
    %2130 = vmatpush1.bf16.msra.mxu0 %v2108
    %2131 = vmatprep.subr.bf16.mxu0 0
    %2132 = vmatpush1.bf16.msra.mxu0 %v2107
    %2133 = vmatprep.subr.bf16.mxu0 0
    %2134 = vmatpush1.bf16.msra.mxu0 %v2106
    %2135 = vmatprep.subr.bf16.mxu0 0
    %2136 = vmatpush1.bf16.msra.mxu0 %v2105
    %2137 = vmatprep.subr.bf16.mxu0 0
    %2138 = vmatpush2.bf16.msra.mxu0 0
    %2139 = vmatprep.subr.bf16.mxu0 0
    %2140 = vmatpush2.bf16.msra.mxu0 0
    %2141 = vmatprep.subr.bf16.mxu0 0
    %2142 = vmatpush2.bf16.msra.mxu0 0
    %2143 = vmatprep.subr.bf16.mxu0 0
    %2144 = vmatpush2.bf16.msra.mxu0 0
    %2145 = vmatprep.subr.bf16.mxu0 0
    %2146 = vmatpush2.bf16.msra.mxu0 0
    %2147 = vmatprep.subr.bf16.mxu0 0
    %2148 = vmatpush2.bf16.msra.mxu0 0
    %2149 = vmatprep.subr.bf16.mxu0 0
    %2150 = vmatpush2.bf16.msra.mxu0 0
    %2151 = vmatprep.subr.bf16.mxu0 0
    %2152 = vmatpush2.bf16.msra.mxu0 0
    %2153 = vmatprep.mubr.bf16.mxu0 0
    %2154 = vmatmul.mubr.bf16.gmra.mxu0 %v2071
    %v2155 = vpop.f32.mrf.mxu0
    %v2156 = vadd.f32 0.0, %v2155
    %v2157 = vpop.f32.mrf.mxu0
    %v2158 = vpop.f32.mrf.mxu0
    %v2159 = vpop.f32.mrf.mxu0
    %2160 = vdwg.mxu0
    %v2161 = vpack.i.b16 %v1467, %v1467
    %v2162 = vlaneseq
    %v2163 = vshrl.u32 %v2162, 7
    %v2164 = vsub.s32 0, %v2163
    %v2165 = vrot.slane %v2161, %v2164
    %v2183 = vunpack.c.l.b16 %v1565
    %v2184 = vunpack.c.l.b16 %v1566
    %v2185 = vunpack.c.l.b16 %v1567
    %v2186 = vunpack.c.l.b16 %v1568
    %v2187 = vunpack.c.l.b16 %v1569
    %v2188 = vunpack.c.l.b16 %v1570
    %v2189 = vunpack.c.l.b16 %v1571
    %v2190 = vunpack.c.l.b16 %v1572
    %v2191 = vunpack.c.l.b16 %v1573
    %v2192 = vunpack.c.l.b16 %v1574
    %v2193 = vunpack.c.l.b16 %v1575
    %v2194 = vunpack.c.l.b16 %v1576
    %v2195 = vunpack.c.l.b16 %v1577
    %v2196 = vunpack.c.l.b16 %v1578
    %v2197 = vunpack.c.l.b16 %v1579
    %v2198 = vunpack.c.l.b16 %v1580
    %v2199 = vpack.c.b16 %v2184, %v2183
    %v2200 = vpack.c.b16 %v2186, %v2185
    %v2201 = vpack.c.b16 %v2188, %v2187
    %v2202 = vpack.c.b16 %v2190, %v2189
    %v2203 = vpack.c.b16 %v2192, %v2191
    %v2204 = vpack.c.b16 %v2194, %v2193
    %v2205 = vpack.c.b16 %v2196, %v2195
    %v2206 = vpack.c.b16 %v2198, %v2197
    %2215 = vmatprep.subr.bf16.mxu0 0
    %2216 = vmatpush1.bf16.msra.mxu0 %v2206
    %2217 = vmatprep.subr.bf16.mxu0 0
    %2218 = vmatpush1.bf16.msra.mxu0 %v2205
    %2219 = vmatprep.subr.bf16.mxu0 0
    %2220 = vmatpush1.bf16.msra.mxu0 %v2204
    %2221 = vmatprep.subr.bf16.mxu0 0
    %2222 = vmatpush1.bf16.msra.mxu0 %v2203
    %2223 = vmatprep.subr.bf16.mxu0 0
    %2224 = vmatpush1.bf16.msra.mxu0 %v2202
    %2225 = vmatprep.subr.bf16.mxu0 0
    %2226 = vmatpush1.bf16.msra.mxu0 %v2201
    %2227 = vmatprep.subr.bf16.mxu0 0
    %2228 = vmatpush1.bf16.msra.mxu0 %v2200
    %2229 = vmatprep.subr.bf16.mxu0 0
    %2230 = vmatpush1.bf16.msra.mxu0 %v2199
    %2231 = vmatprep.subr.bf16.mxu0 0
    %2232 = vmatpush2.bf16.msra.mxu0 0
    %2233 = vmatprep.subr.bf16.mxu0 0
    %2234 = vmatpush2.bf16.msra.mxu0 0
    %2235 = vmatprep.subr.bf16.mxu0 0
    %2236 = vmatpush2.bf16.msra.mxu0 0
    %2237 = vmatprep.subr.bf16.mxu0 0
    %2238 = vmatpush2.bf16.msra.mxu0 0
    %2239 = vmatprep.subr.bf16.mxu0 0
    %2240 = vmatpush2.bf16.msra.mxu0 0
    %2241 = vmatprep.subr.bf16.mxu0 0
    %2242 = vmatpush2.bf16.msra.mxu0 0
    %2243 = vmatprep.subr.bf16.mxu0 0
    %2244 = vmatpush2.bf16.msra.mxu0 0
    %2245 = vmatprep.subr.bf16.mxu0 0
    %2246 = vmatpush2.bf16.msra.mxu0 0
    %2247 = vmatprep.mubr.bf16.mxu0 0
    %2248 = vmatmul.mubr.bf16.gmra.mxu0 %v2165
    %v2249 = vpop.f32.mrf.mxu0
    %v2250 = vadd.f32 0.0, %v2249
    %v2251 = vpop.f32.mrf.mxu0
    %v2252 = vpop.f32.mrf.mxu0
    %v2253 = vpop.f32.mrf.mxu0
    %2254 = vdwg.mxu0
    %v2255 = vpack.i.b16 %v1468, %v1468
    %v2256 = vlaneseq
    %v2257 = vshrl.u32 %v2256, 7
    %v2258 = vsub.s32 0, %v2257
    %v2259 = vrot.slane %v2255, %v2258
    %v2277 = vunpack.c.l.b16 %v1581
    %v2278 = vunpack.c.l.b16 %v1582
    %v2279 = vunpack.c.l.b16 %v1583
    %v2280 = vunpack.c.l.b16 %v1584
    %v2281 = vunpack.c.l.b16 %v1585
    %v2282 = vunpack.c.l.b16 %v1586
    %v2283 = vunpack.c.l.b16 %v1587
    %v2284 = vunpack.c.l.b16 %v1588
    %v2285 = vunpack.c.l.b16 %v1589
    %v2286 = vunpack.c.l.b16 %v1590
    %v2287 = vunpack.c.l.b16 %v1591
    %v2288 = vunpack.c.l.b16 %v1592
    %v2289 = vunpack.c.l.b16 %v1593
    %v2290 = vunpack.c.l.b16 %v1594
    %v2291 = vunpack.c.l.b16 %v1595
    %v2292 = vunpack.c.l.b16 %v1596
    %v2293 = vpack.c.b16 %v2278, %v2277
    %v2294 = vpack.c.b16 %v2280, %v2279
    %v2295 = vpack.c.b16 %v2282, %v2281
    %v2296 = vpack.c.b16 %v2284, %v2283
    %v2297 = vpack.c.b16 %v2286, %v2285
    %v2298 = vpack.c.b16 %v2288, %v2287
    %v2299 = vpack.c.b16 %v2290, %v2289
    %v2300 = vpack.c.b16 %v2292, %v2291
    %2309 = vmatprep.subr.bf16.mxu0 0
    %2310 = vmatpush1.bf16.msra.mxu0 %v2300
    %2311 = vmatprep.subr.bf16.mxu0 0
    %2312 = vmatpush1.bf16.msra.mxu0 %v2299
    %2313 = vmatprep.subr.bf16.mxu0 0
    %2314 = vmatpush1.bf16.msra.mxu0 %v2298
    %2315 = vmatprep.subr.bf16.mxu0 0
    %2316 = vmatpush1.bf16.msra.mxu0 %v2297
    %2317 = vmatprep.subr.bf16.mxu0 0
    %2318 = vmatpush1.bf16.msra.mxu0 %v2296
    %2319 = vmatprep.subr.bf16.mxu0 0
    %2320 = vmatpush1.bf16.msra.mxu0 %v2295
    %2321 = vmatprep.subr.bf16.mxu0 0
    %2322 = vmatpush1.bf16.msra.mxu0 %v2294
    %2323 = vmatprep.subr.bf16.mxu0 0
    %2324 = vmatpush1.bf16.msra.mxu0 %v2293
    %2325 = vmatprep.subr.bf16.mxu0 0
    %2326 = vmatpush2.bf16.msra.mxu0 0
    %2327 = vmatprep.subr.bf16.mxu0 0
    %2328 = vmatpush2.bf16.msra.mxu0 0
    %2329 = vmatprep.subr.bf16.mxu0 0
    %2330 = vmatpush2.bf16.msra.mxu0 0
    %2331 = vmatprep.subr.bf16.mxu0 0
    %2332 = vmatpush2.bf16.msra.mxu0 0
    %2333 = vmatprep.subr.bf16.mxu0 0
    %2334 = vmatpush2.bf16.msra.mxu0 0
    %2335 = vmatprep.subr.bf16.mxu0 0
    %2336 = vmatpush2.bf16.msra.mxu0 0
    %2337 = vmatprep.subr.bf16.mxu0 0
    %2338 = vmatpush2.bf16.msra.mxu0 0
    %2339 = vmatprep.subr.bf16.mxu0 0
    %2340 = vmatpush2.bf16.msra.mxu0 0
    %2341 = vmatprep.mubr.bf16.mxu0 0
    %2342 = vmatmul.mubr.bf16.gmra.mxu0 %v2259
    %v2343 = vpop.f32.mrf.mxu0
    %v2344 = vadd.f32 0.0, %v2343
    %v2345 = vpop.f32.mrf.mxu0
    %v2346 = vpop.f32.mrf.mxu0
    %v2347 = vpop.f32.mrf.mxu0
    %2348 = vdwg.mxu0
    %vm2349 = vcmask 57344
    %v2350 = vsel %vm2349, %v1686, -inf
    %2351 = vmax.xlane.f32.xlu0 %v2350
    %v2352 = vpop.xlane.xlu0 %2351
    %v2353 = vsel %vm2349, %v1780, -inf
    %2354 = vmax.xlane.f32.xlu0 %v2353
    %v2355 = vpop.xlane.xlu0 %2354
    %v2356 = vsel %vm2349, %v1874, -inf
    %2357 = vmax.xlane.f32.xlu0 %v2356
    %v2358 = vpop.xlane.xlu0 %2357
    %v2359 = vsel %vm2349, %v1968, -inf
    %2360 = vmax.xlane.f32.xlu0 %v2359
    %v2361 = vpop.xlane.xlu0 %2360
    %v2362 = vsel %vm2349, %v2062, -inf
    %2363 = vmax.xlane.f32.xlu0 %v2362
    %v2364 = vpop.xlane.xlu0 %2363
    %v2365 = vsel %vm2349, %v2156, -inf
    %2366 = vmax.xlane.f32.xlu0 %v2365
    %v2367 = vpop.xlane.xlu0 %2366
    %v2368 = vsel %vm2349, %v2250, -inf
    %2369 = vmax.xlane.f32.xlu0 %v2368
    %v2370 = vpop.xlane.xlu0 %2369
    %v2371 = vsel %vm2349, %v2344, -inf
    %2372 = vmax.xlane.f32.xlu0 %v2371
    %v2373 = vpop.xlane.xlu0 %2372
    %v2374 = vsub.f32 %v1686, %v2352
    %v2375 = vsub.f32 %v1780, %v2355
    %v2376 = vsub.f32 %v1874, %v2358
    %v2377 = vsub.f32 %v1968, %v2361
    %v2378 = vsub.f32 %v2062, %v2364
    %v2379 = vsub.f32 %v2156, %v2367
    %v2380 = vsub.f32 %v2250, %v2370
    %v2381 = vsub.f32 %v2344, %v2373
    %v2382 = vmul.f32 %v2374, 1.442695
    %v2383 = vpow.pop %v2382
    %v2384 = vmul.f32 %v2375, 1.442695
    %v2385 = vpow.pop %v2384
    %v2386 = vmul.f32 %v2376, 1.442695
    %v2387 = vpow.pop %v2386
    %v2388 = vmul.f32 %v2377, 1.442695
    %v2389 = vpow.pop %v2388
    %v2390 = vmul.f32 %v2378, 1.442695
    %v2391 = vpow.pop %v2390
    %v2392 = vmul.f32 %v2379, 1.442695
    %v2393 = vpow.pop %v2392
    %v2394 = vmul.f32 %v2380, 1.442695
    %v2395 = vpow.pop %v2394
    %v2396 = vmul.f32 %v2381, 1.442695
    %v2397 = vpow.pop %v2396
    %v2398 = vsel %vm2349, %v2383, 0.0
    %2399 = vadd.xlane.f32.xlu0 %v2398
    %v2400 = vpop.xlane.xlu0 %2399
    %v2401 = vsel %vm2349, %v2385, 0.0
    %2402 = vadd.xlane.f32.xlu0 %v2401
    %v2403 = vpop.xlane.xlu0 %2402
    %v2404 = vsel %vm2349, %v2387, 0.0
    %2405 = vadd.xlane.f32.xlu0 %v2404
    %v2406 = vpop.xlane.xlu0 %2405
    %v2407 = vsel %vm2349, %v2389, 0.0
    %2408 = vadd.xlane.f32.xlu0 %v2407
    %v2409 = vpop.xlane.xlu0 %2408
    %v2410 = vsel %vm2349, %v2391, 0.0
    %2411 = vadd.xlane.f32.xlu0 %v2410
    %v2412 = vpop.xlane.xlu0 %2411
    %v2413 = vsel %vm2349, %v2393, 0.0
    %2414 = vadd.xlane.f32.xlu0 %v2413
    %v2415 = vpop.xlane.xlu0 %2414
    %v2416 = vsel %vm2349, %v2395, 0.0
    %2417 = vadd.xlane.f32.xlu0 %v2416
    %v2418 = vpop.xlane.xlu0 %2417
    %v2419 = vsel %vm2349, %v2397, 0.0
    %2420 = vadd.xlane.f32.xlu0 %v2419
    %v2421 = vpop.xlane.xlu0 %2420
    %v2422 = vrcp.pop %v2400
    %v2423 = vmul.f32 %v2383, %v2422
    %v2424 = vrcp.pop %v2403
    %v2425 = vmul.f32 %v2385, %v2424
    %v2426 = vrcp.pop %v2406
    %v2427 = vmul.f32 %v2387, %v2426
    %v2428 = vrcp.pop %v2409
    %v2429 = vmul.f32 %v2389, %v2428
    %v2430 = vrcp.pop %v2412
    %v2431 = vmul.f32 %v2391, %v2430
    %v2432 = vrcp.pop %v2415
    %v2433 = vmul.f32 %v2393, %v2432
    %v2434 = vrcp.pop %v2418
    %v2435 = vmul.f32 %v2395, %v2434
    %v2436 = vrcp.pop %v2421
    %v2437 = vmul.f32 %v2397, %v2436
    %v2438 = vpack.c.bf16 %v2423, %v2423
    %v2439 = vpack.c.bf16 %v2425, %v2425
    %v2440 = vpack.c.bf16 %v2427, %v2427
    %v2441 = vpack.c.bf16 %v2429, %v2429
    %v2442 = vpack.c.bf16 %v2431, %v2431
    %v2443 = vpack.c.bf16 %v2433, %v2433
    %v2444 = vpack.c.bf16 %v2435, %v2435
    %v2445 = vpack.c.bf16 %v2437, %v2437
    %v2446 = vld [vmem:[%s2] sm:$0xf]
    %v2447 = vld [vmem:[%s2 + $0x4] sm:$0xf]
    %v2448 = vld [vmem:[%s2 + $0x8] sm:$0xf]
    %v2449 = vld [vmem:[%s2 + $0xc] sm:$0xf]
    %v2450 = vld [vmem:[%s2 + $0x10] sm:$0xf]
    %v2451 = vld [vmem:[%s2 + $0x14] sm:$0xf]
    %v2452 = vld [vmem:[%s2 + $0x18] sm:$0xf]
    %v2453 = vld [vmem:[%s2 + $0x1c] sm:$0xf]
    %vm2454 = vcmask 64512
    %v2456 = vsel %vm2454, %v2438, 0
    %vm2458 = vcmask 1043456
    %v2460 = vsel %vm2458, %v2446, 0
    %2462 = vmatprep.subr.bf16.mxu0 0
    %2463 = vmatpush1.bf16.msra.mxu0 0
    %2464 = vmatprep.subr.bf16.mxu0 0
    %2465 = vmatpush1.bf16.msra.mxu0 0
    %2466 = vmatprep.subr.bf16.mxu0 0
    %2467 = vmatpush1.bf16.msra.mxu0 0
    %2468 = vmatprep.subr.bf16.mxu0 0
    %2469 = vmatpush1.bf16.msra.mxu0 0
    %2470 = vmatprep.subr.bf16.mxu0 0
    %2471 = vmatpush1.bf16.msra.mxu0 0
    %2472 = vmatprep.subr.bf16.mxu0 0
    %2473 = vmatpush1.bf16.msra.mxu0 0
    %2474 = vmatprep.subr.bf16.mxu0 0
    %2475 = vmatpush1.bf16.msra.mxu0 0
    %2476 = vmatprep.subr.bf16.mxu0 0
    %2477 = vmatpush1.bf16.msra.mxu0 %v2460
    %2478 = vmatprep.subr.bf16.mxu0 0
    %2479 = vmatpush2.bf16.msra.mxu0 0
    %2480 = vmatprep.subr.bf16.mxu0 0
    %2481 = vmatpush2.bf16.msra.mxu0 0
    %2482 = vmatprep.subr.bf16.mxu0 0
    %2483 = vmatpush2.bf16.msra.mxu0 0
    %2484 = vmatprep.subr.bf16.mxu0 0
    %2485 = vmatpush2.bf16.msra.mxu0 0
    %2486 = vmatprep.subr.bf16.mxu0 0
    %2487 = vmatpush2.bf16.msra.mxu0 0
    %2488 = vmatprep.subr.bf16.mxu0 0
    %2489 = vmatpush2.bf16.msra.mxu0 0
    %2490 = vmatprep.subr.bf16.mxu0 0
    %2491 = vmatpush2.bf16.msra.mxu0 0
    %2492 = vmatprep.subr.bf16.mxu0 0
    %2493 = vmatpush2.bf16.msra.mxu0 0
    %2494 = vmatprep.mubr.bf16.mxu0 0
    %2495 = vmatmul.mubr.bf16.gmra.mxu0 %v2456
    %v2496 = vpop.f32.mrf.mxu0
    %v2497 = vadd.f32 0.0, %v2496
    %v2498 = vpop.f32.mrf.mxu0
    %v2499 = vpop.f32.mrf.mxu0
    %v2500 = vpop.f32.mrf.mxu0
    %2501 = vdwg.mxu0
    %v2503 = vsel %vm2454, %v2439, 0
    %v2506 = vsel %vm2458, %v2447, 0
    %2508 = vmatprep.subr.bf16.mxu0 0
    %2509 = vmatpush1.bf16.msra.mxu0 0
    %2510 = vmatprep.subr.bf16.mxu0 0
    %2511 = vmatpush1.bf16.msra.mxu0 0
    %2512 = vmatprep.subr.bf16.mxu0 0
    %2513 = vmatpush1.bf16.msra.mxu0 0
    %2514 = vmatprep.subr.bf16.mxu0 0
    %2515 = vmatpush1.bf16.msra.mxu0 0
    %2516 = vmatprep.subr.bf16.mxu0 0
    %2517 = vmatpush1.bf16.msra.mxu0 0
    %2518 = vmatprep.subr.bf16.mxu0 0
    %2519 = vmatpush1.bf16.msra.mxu0 0
    %2520 = vmatprep.subr.bf16.mxu0 0
    %2521 = vmatpush1.bf16.msra.mxu0 0
    %2522 = vmatprep.subr.bf16.mxu0 0
    %2523 = vmatpush1.bf16.msra.mxu0 %v2506
    %2524 = vmatprep.subr.bf16.mxu0 0
    %2525 = vmatpush2.bf16.msra.mxu0 0
    %2526 = vmatprep.subr.bf16.mxu0 0
    %2527 = vmatpush2.bf16.msra.mxu0 0
    %2528 = vmatprep.subr.bf16.mxu0 0
    %2529 = vmatpush2.bf16.msra.mxu0 0
    %2530 = vmatprep.subr.bf16.mxu0 0
    %2531 = vmatpush2.bf16.msra.mxu0 0
    %2532 = vmatprep.subr.bf16.mxu0 0
    %2533 = vmatpush2.bf16.msra.mxu0 0
    %2534 = vmatprep.subr.bf16.mxu0 0
    %2535 = vmatpush2.bf16.msra.mxu0 0
    %2536 = vmatprep.subr.bf16.mxu0 0
    %2537 = vmatpush2.bf16.msra.mxu0 0
    %2538 = vmatprep.subr.bf16.mxu0 0
    %2539 = vmatpush2.bf16.msra.mxu0 0
    %2540 = vmatprep.mubr.bf16.mxu0 0
    %2541 = vmatmul.mubr.bf16.gmra.mxu0 %v2503
    %v2542 = vpop.f32.mrf.mxu0
    %v2543 = vadd.f32 0.0, %v2542
    %v2544 = vpop.f32.mrf.mxu0
    %v2545 = vpop.f32.mrf.mxu0
    %v2546 = vpop.f32.mrf.mxu0
    %2547 = vdwg.mxu0
    %v2549 = vsel %vm2454, %v2440, 0
    %v2552 = vsel %vm2458, %v2448, 0
    %2554 = vmatprep.subr.bf16.mxu0 0
    %2555 = vmatpush1.bf16.msra.mxu0 0
    %2556 = vmatprep.subr.bf16.mxu0 0
    %2557 = vmatpush1.bf16.msra.mxu0 0
    %2558 = vmatprep.subr.bf16.mxu0 0
    %2559 = vmatpush1.bf16.msra.mxu0 0
    %2560 = vmatprep.subr.bf16.mxu0 0
    %2561 = vmatpush1.bf16.msra.mxu0 0
    %2562 = vmatprep.subr.bf16.mxu0 0
    %2563 = vmatpush1.bf16.msra.mxu0 0
    %2564 = vmatprep.subr.bf16.mxu0 0
    %2565 = vmatpush1.bf16.msra.mxu0 0
    %2566 = vmatprep.subr.bf16.mxu0 0
    %2567 = vmatpush1.bf16.msra.mxu0 0
    %2568 = vmatprep.subr.bf16.mxu0 0
    %2569 = vmatpush1.bf16.msra.mxu0 %v2552
    %2570 = vmatprep.subr.bf16.mxu0 0
    %2571 = vmatpush2.bf16.msra.mxu0 0
    %2572 = vmatprep.subr.bf16.mxu0 0
    %2573 = vmatpush2.bf16.msra.mxu0 0
    %2574 = vmatprep.subr.bf16.mxu0 0
    %2575 = vmatpush2.bf16.msra.mxu0 0
    %2576 = vmatprep.subr.bf16.mxu0 0
    %2577 = vmatpush2.bf16.msra.mxu0 0
    %2578 = vmatprep.subr.bf16.mxu0 0
    %2579 = vmatpush2.bf16.msra.mxu0 0
    %2580 = vmatprep.subr.bf16.mxu0 0
    %2581 = vmatpush2.bf16.msra.mxu0 0
    %2582 = vmatprep.subr.bf16.mxu0 0
    %2583 = vmatpush2.bf16.msra.mxu0 0
    %2584 = vmatprep.subr.bf16.mxu0 0
    %2585 = vmatpush2.bf16.msra.mxu0 0
    %2586 = vmatprep.mubr.bf16.mxu0 0
    %2587 = vmatmul.mubr.bf16.gmra.mxu0 %v2549
    %v2588 = vpop.f32.mrf.mxu0
    %v2589 = vadd.f32 0.0, %v2588
    %v2590 = vpop.f32.mrf.mxu0
    %v2591 = vpop.f32.mrf.mxu0
    %v2592 = vpop.f32.mrf.mxu0
    %2593 = vdwg.mxu0
    %v2595 = vsel %vm2454, %v2441, 0
    %v2598 = vsel %vm2458, %v2449, 0
    %2600 = vmatprep.subr.bf16.mxu0 0
    %2601 = vmatpush1.bf16.msra.mxu0 0
    %2602 = vmatprep.subr.bf16.mxu0 0
    %2603 = vmatpush1.bf16.msra.mxu0 0
    %2604 = vmatprep.subr.bf16.mxu0 0
    %2605 = vmatpush1.bf16.msra.mxu0 0
    %2606 = vmatprep.subr.bf16.mxu0 0
    %2607 = vmatpush1.bf16.msra.mxu0 0
    %2608 = vmatprep.subr.bf16.mxu0 0
    %2609 = vmatpush1.bf16.msra.mxu0 0
    %2610 = vmatprep.subr.bf16.mxu0 0
    %2611 = vmatpush1.bf16.msra.mxu0 0
    %2612 = vmatprep.subr.bf16.mxu0 0
    %2613 = vmatpush1.bf16.msra.mxu0 0
    %2614 = vmatprep.subr.bf16.mxu0 0
    %2615 = vmatpush1.bf16.msra.mxu0 %v2598
    %2616 = vmatprep.subr.bf16.mxu0 0
    %2617 = vmatpush2.bf16.msra.mxu0 0
    %2618 = vmatprep.subr.bf16.mxu0 0
    %2619 = vmatpush2.bf16.msra.mxu0 0
    %2620 = vmatprep.subr.bf16.mxu0 0
    %2621 = vmatpush2.bf16.msra.mxu0 0
    %2622 = vmatprep.subr.bf16.mxu0 0
    %2623 = vmatpush2.bf16.msra.mxu0 0
    %2624 = vmatprep.subr.bf16.mxu0 0
    %2625 = vmatpush2.bf16.msra.mxu0 0
    %2626 = vmatprep.subr.bf16.mxu0 0
    %2627 = vmatpush2.bf16.msra.mxu0 0
    %2628 = vmatprep.subr.bf16.mxu0 0
    %2629 = vmatpush2.bf16.msra.mxu0 0
    %2630 = vmatprep.subr.bf16.mxu0 0
    %2631 = vmatpush2.bf16.msra.mxu0 0
    %2632 = vmatprep.mubr.bf16.mxu0 0
    %2633 = vmatmul.mubr.bf16.gmra.mxu0 %v2595
    %v2634 = vpop.f32.mrf.mxu0
    %v2635 = vadd.f32 0.0, %v2634
    %v2636 = vpop.f32.mrf.mxu0
    %v2637 = vpop.f32.mrf.mxu0
    %v2638 = vpop.f32.mrf.mxu0
    %2639 = vdwg.mxu0
    %v2641 = vsel %vm2454, %v2442, 0
    %v2644 = vsel %vm2458, %v2450, 0
    %2646 = vmatprep.subr.bf16.mxu0 0
    %2647 = vmatpush1.bf16.msra.mxu0 0
    %2648 = vmatprep.subr.bf16.mxu0 0
    %2649 = vmatpush1.bf16.msra.mxu0 0
    %2650 = vmatprep.subr.bf16.mxu0 0
    %2651 = vmatpush1.bf16.msra.mxu0 0
    %2652 = vmatprep.subr.bf16.mxu0 0
    %2653 = vmatpush1.bf16.msra.mxu0 0
    %2654 = vmatprep.subr.bf16.mxu0 0
    %2655 = vmatpush1.bf16.msra.mxu0 0
    %2656 = vmatprep.subr.bf16.mxu0 0
    %2657 = vmatpush1.bf16.msra.mxu0 0
    %2658 = vmatprep.subr.bf16.mxu0 0
    %2659 = vmatpush1.bf16.msra.mxu0 0
    %2660 = vmatprep.subr.bf16.mxu0 0
    %2661 = vmatpush1.bf16.msra.mxu0 %v2644
    %2662 = vmatprep.subr.bf16.mxu0 0
    %2663 = vmatpush2.bf16.msra.mxu0 0
    %2664 = vmatprep.subr.bf16.mxu0 0
    %2665 = vmatpush2.bf16.msra.mxu0 0
    %2666 = vmatprep.subr.bf16.mxu0 0
    %2667 = vmatpush2.bf16.msra.mxu0 0
    %2668 = vmatprep.subr.bf16.mxu0 0
    %2669 = vmatpush2.bf16.msra.mxu0 0
    %2670 = vmatprep.subr.bf16.mxu0 0
    %2671 = vmatpush2.bf16.msra.mxu0 0
    %2672 = vmatprep.subr.bf16.mxu0 0
    %2673 = vmatpush2.bf16.msra.mxu0 0
    %2674 = vmatprep.subr.bf16.mxu0 0
    %2675 = vmatpush2.bf16.msra.mxu0 0
    %2676 = vmatprep.subr.bf16.mxu0 0
    %2677 = vmatpush2.bf16.msra.mxu0 0
    %2678 = vmatprep.mubr.bf16.mxu0 0
    %2679 = vmatmul.mubr.bf16.gmra.mxu0 %v2641
    %v2680 = vpop.f32.mrf.mxu0
    %v2681 = vadd.f32 0.0, %v2680
    %v2682 = vpop.f32.mrf.mxu0
    %v2683 = vpop.f32.mrf.mxu0
    %v2684 = vpop.f32.mrf.mxu0
    %2685 = vdwg.mxu0
    %v2687 = vsel %vm2454, %v2443, 0
    %v2690 = vsel %vm2458, %v2451, 0
    %2692 = vmatprep.subr.bf16.mxu0 0
    %2693 = vmatpush1.bf16.msra.mxu0 0
    %2694 = vmatprep.subr.bf16.mxu0 0
    %2695 = vmatpush1.bf16.msra.mxu0 0
    %2696 = vmatprep.subr.bf16.mxu0 0
    %2697 = vmatpush1.bf16.msra.mxu0 0
    %2698 = vmatprep.subr.bf16.mxu0 0
    %2699 = vmatpush1.bf16.msra.mxu0 0
    %2700 = vmatprep.subr.bf16.mxu0 0
    %2701 = vmatpush1.bf16.msra.mxu0 0
    %2702 = vmatprep.subr.bf16.mxu0 0
    %2703 = vmatpush1.bf16.msra.mxu0 0
    %2704 = vmatprep.subr.bf16.mxu0 0
    %2705 = vmatpush1.bf16.msra.mxu0 0
    %2706 = vmatprep.subr.bf16.mxu0 0
    %2707 = vmatpush1.bf16.msra.mxu0 %v2690
    %2708 = vmatprep.subr.bf16.mxu0 0
    %2709 = vmatpush2.bf16.msra.mxu0 0
    %2710 = vmatprep.subr.bf16.mxu0 0
    %2711 = vmatpush2.bf16.msra.mxu0 0
    %2712 = vmatprep.subr.bf16.mxu0 0
    %2713 = vmatpush2.bf16.msra.mxu0 0
    %2714 = vmatprep.subr.bf16.mxu0 0
    %2715 = vmatpush2.bf16.msra.mxu0 0
    %2716 = vmatprep.subr.bf16.mxu0 0
    %2717 = vmatpush2.bf16.msra.mxu0 0
    %2718 = vmatprep.subr.bf16.mxu0 0
    %2719 = vmatpush2.bf16.msra.mxu0 0
    %2720 = vmatprep.subr.bf16.mxu0 0
    %2721 = vmatpush2.bf16.msra.mxu0 0
    %2722 = vmatprep.subr.bf16.mxu0 0
    %2723 = vmatpush2.bf16.msra.mxu0 0
    %2724 = vmatprep.mubr.bf16.mxu0 0
    %2725 = vmatmul.mubr.bf16.gmra.mxu0 %v2687
    %v2726 = vpop.f32.mrf.mxu0
    %v2727 = vadd.f32 0.0, %v2726
    %v2728 = vpop.f32.mrf.mxu0
    %v2729 = vpop.f32.mrf.mxu0
    %v2730 = vpop.f32.mrf.mxu0
    %2731 = vdwg.mxu0
    %v2733 = vsel %vm2454, %v2444, 0
    %v2736 = vsel %vm2458, %v2452, 0
    %2738 = vmatprep.subr.bf16.mxu0 0
    %2739 = vmatpush1.bf16.msra.mxu0 0
    %2740 = vmatprep.subr.bf16.mxu0 0
    %2741 = vmatpush1.bf16.msra.mxu0 0
    %2742 = vmatprep.subr.bf16.mxu0 0
    %2743 = vmatpush1.bf16.msra.mxu0 0
    %2744 = vmatprep.subr.bf16.mxu0 0
    %2745 = vmatpush1.bf16.msra.mxu0 0
    %2746 = vmatprep.subr.bf16.mxu0 0
    %2747 = vmatpush1.bf16.msra.mxu0 0
    %2748 = vmatprep.subr.bf16.mxu0 0
    %2749 = vmatpush1.bf16.msra.mxu0 0
    %2750 = vmatprep.subr.bf16.mxu0 0
    %2751 = vmatpush1.bf16.msra.mxu0 0
    %2752 = vmatprep.subr.bf16.mxu0 0
    %2753 = vmatpush1.bf16.msra.mxu0 %v2736
    %2754 = vmatprep.subr.bf16.mxu0 0
    %2755 = vmatpush2.bf16.msra.mxu0 0
    %2756 = vmatprep.subr.bf16.mxu0 0
    %2757 = vmatpush2.bf16.msra.mxu0 0
    %2758 = vmatprep.subr.bf16.mxu0 0
    %2759 = vmatpush2.bf16.msra.mxu0 0
    %2760 = vmatprep.subr.bf16.mxu0 0
    %2761 = vmatpush2.bf16.msra.mxu0 0
    %2762 = vmatprep.subr.bf16.mxu0 0
    %2763 = vmatpush2.bf16.msra.mxu0 0
    %2764 = vmatprep.subr.bf16.mxu0 0
    %2765 = vmatpush2.bf16.msra.mxu0 0
    %2766 = vmatprep.subr.bf16.mxu0 0
    %2767 = vmatpush2.bf16.msra.mxu0 0
    %2768 = vmatprep.subr.bf16.mxu0 0
    %2769 = vmatpush2.bf16.msra.mxu0 0
    %2770 = vmatprep.mubr.bf16.mxu0 0
    %2771 = vmatmul.mubr.bf16.gmra.mxu0 %v2733
    %v2772 = vpop.f32.mrf.mxu0
    %v2773 = vadd.f32 0.0, %v2772
    %v2774 = vpop.f32.mrf.mxu0
    %v2775 = vpop.f32.mrf.mxu0
    %v2776 = vpop.f32.mrf.mxu0
    %2777 = vdwg.mxu0
    %v2779 = vsel %vm2454, %v2445, 0
    %v2782 = vsel %vm2458, %v2453, 0
    %2784 = vmatprep.subr.bf16.mxu0 0
    %2785 = vmatpush1.bf16.msra.mxu0 0
    %2786 = vmatprep.subr.bf16.mxu0 0
    %2787 = vmatpush1.bf16.msra.mxu0 0
    %2788 = vmatprep.subr.bf16.mxu0 0
    %2789 = vmatpush1.bf16.msra.mxu0 0
    %2790 = vmatprep.subr.bf16.mxu0 0
    %2791 = vmatpush1.bf16.msra.mxu0 0
    %2792 = vmatprep.subr.bf16.mxu0 0
    %2793 = vmatpush1.bf16.msra.mxu0 0
    %2794 = vmatprep.subr.bf16.mxu0 0
    %2795 = vmatpush1.bf16.msra.mxu0 0
    %2796 = vmatprep.subr.bf16.mxu0 0
    %2797 = vmatpush1.bf16.msra.mxu0 0
    %2798 = vmatprep.subr.bf16.mxu0 0
    %2799 = vmatpush1.bf16.msra.mxu0 %v2782
    %2800 = vmatprep.subr.bf16.mxu0 0
    %2801 = vmatpush2.bf16.msra.mxu0 0
    %2802 = vmatprep.subr.bf16.mxu0 0
    %2803 = vmatpush2.bf16.msra.mxu0 0
    %2804 = vmatprep.subr.bf16.mxu0 0
    %2805 = vmatpush2.bf16.msra.mxu0 0
    %2806 = vmatprep.subr.bf16.mxu0 0
    %2807 = vmatpush2.bf16.msra.mxu0 0
    %2808 = vmatprep.subr.bf16.mxu0 0
    %2809 = vmatpush2.bf16.msra.mxu0 0
    %2810 = vmatprep.subr.bf16.mxu0 0
    %2811 = vmatpush2.bf16.msra.mxu0 0
    %2812 = vmatprep.subr.bf16.mxu0 0
    %2813 = vmatpush2.bf16.msra.mxu0 0
    %2814 = vmatprep.subr.bf16.mxu0 0
    %2815 = vmatpush2.bf16.msra.mxu0 0
    %2816 = vmatprep.mubr.bf16.mxu0 0
    %2817 = vmatmul.mubr.bf16.gmra.mxu0 %v2779
    %v2818 = vpop.f32.mrf.mxu0
    %v2819 = vadd.f32 0.0, %v2818
    %v2820 = vpop.f32.mrf.mxu0
    %v2821 = vpop.f32.mrf.mxu0
    %v2822 = vpop.f32.mrf.mxu0
    %2823 = vdwg.mxu0
    %v2824 = vld [vmem:[%s8] sm:$0xf]
    %v2825 = vld [vmem:[%s8 + $0x4] sm:$0xf]
    %v2826 = vld [vmem:[%s8 + $0x8] sm:$0xf]
    %v2827 = vld [vmem:[%s8 + $0xc] sm:$0xf]
    %v2828 = vld [vmem:[%s8 + $0x10] sm:$0xf]
    %v2829 = vld [vmem:[%s8 + $0x14] sm:$0xf]
    %v2830 = vld [vmem:[%s8 + $0x18] sm:$0xf]
    %v2831 = vld [vmem:[%s8 + $0x1c] sm:$0xf]
    %v2832 = vld [vmem:[%s8 + $0x20] sm:$0xf]
    %v2833 = vld [vmem:[%s8 + $0x24] sm:$0xf]
    %v2834 = vld [vmem:[%s8 + $0x28] sm:$0xf]
    %v2835 = vld [vmem:[%s8 + $0x2c] sm:$0xf]
    %v2836 = vld [vmem:[%s8 + $0x30] sm:$0xf]
    %v2837 = vld [vmem:[%s8 + $0x34] sm:$0xf]
    %v2838 = vld [vmem:[%s8 + $0x38] sm:$0xf]
    %v2839 = vld [vmem:[%s8 + $0x3c] sm:$0xf]
    %v2840 = vpack.c.bf16 %v2497, %v2497
    %v2841 = vpack.c.bf16 %v2543, %v2543
    %v2842 = vpack.c.bf16 %v2589, %v2589
    %v2843 = vpack.c.bf16 %v2635, %v2635
    %v2844 = vpack.c.bf16 %v2681, %v2681
    %v2845 = vpack.c.bf16 %v2727, %v2727
    %v2846 = vpack.c.bf16 %v2773, %v2773
    %v2847 = vpack.c.bf16 %v2819, %v2819
    %v2848 = vld [vmem:[%s9] sm:$0xf]
    %v2849 = vld [vmem:[%s9 + $0x4] sm:$0xf]
    %v2850 = vld [vmem:[%s9 + $0x8] sm:$0xf]
    %v2851 = vld [vmem:[%s9 + $0xc] sm:$0xf]
    %v2852 = vld [vmem:[%s9 + $0x10] sm:$0xf]
    %v2853 = vld [vmem:[%s9 + $0x14] sm:$0xf]
    %v2854 = vld [vmem:[%s9 + $0x18] sm:$0xf]
    %v2855 = vld [vmem:[%s9 + $0x1c] sm:$0xf]
    %v2856 = vld [vmem:[%s9 + $0x20] sm:$0xf]
    %v2857 = vld [vmem:[%s9 + $0x24] sm:$0xf]
    %v2858 = vld [vmem:[%s9 + $0x28] sm:$0xf]
    %v2859 = vld [vmem:[%s9 + $0x2c] sm:$0xf]
    %v2860 = vld [vmem:[%s9 + $0x30] sm:$0xf]
    %v2861 = vld [vmem:[%s9 + $0x34] sm:$0xf]
    %v2862 = vld [vmem:[%s9 + $0x38] sm:$0xf]
    %v2863 = vld [vmem:[%s9 + $0x3c] sm:$0xf]
    %v2872 = vunpack.c.l.b16 %v2840
    %v2873 = vunpack.c.l.b16 %v2841
    %v2874 = vunpack.c.l.b16 %v2842
    %v2875 = vunpack.c.l.b16 %v2843
    %v2876 = vunpack.c.l.b16 %v2844
    %v2877 = vunpack.c.l.b16 %v2845
    %v2878 = vunpack.c.l.b16 %v2846
    %v2879 = vunpack.c.l.b16 %v2847
    %v2880 = vrot.slane %v2873, 7
    %vm2881 = vcmask 1041409
    %v2882 = vsel %vm2881, %v2880, %v2872
    %v2883 = vrot.slane %v2874, 6
    %vm2884 = vcmask 1042434
    %v2885 = vsel %vm2884, %v2883, %v2882
    %v2886 = vrot.slane %v2875, 5
    %vm2887 = vcmask 1043459
    %v2888 = vsel %vm2887, %v2886, %v2885
    %v2889 = vrot.slane %v2876, 4
    %vm2890 = vcmask 1044484
    %v2891 = vsel %vm2890, %v2889, %v2888
    %v2892 = vrot.slane %v2877, 3
    %vm2893 = vcmask 1045509
    %v2894 = vsel %vm2893, %v2892, %v2891
    %v2895 = vrot.slane %v2878, 2
    %vm2896 = vcmask 1046534
    %v2897 = vsel %vm2896, %v2895, %v2894
    %v2898 = vrot.slane %v2879, 1
    %vm2899 = vcmask 1047559
    %v2900 = vsel %vm2899, %v2898, %v2897
    %v2901 = vpack.c.b16 %v2900, %v2900
    %v2919 = vunpack.c.l.b16 %v2848
    %v2920 = vunpack.c.l.b16 %v2849
    %v2921 = vunpack.c.l.b16 %v2850
    %v2922 = vunpack.c.l.b16 %v2851
    %v2923 = vunpack.c.l.b16 %v2852
    %v2924 = vunpack.c.l.b16 %v2853
    %v2925 = vunpack.c.l.b16 %v2854
    %v2926 = vunpack.c.l.b16 %v2855
    %v2927 = vunpack.c.l.b16 %v2856
    %v2928 = vunpack.c.l.b16 %v2857
    %v2929 = vunpack.c.l.b16 %v2858
    %v2930 = vunpack.c.l.b16 %v2859
    %v2931 = vunpack.c.l.b16 %v2860
    %v2932 = vunpack.c.l.b16 %v2861
    %v2933 = vunpack.c.l.b16 %v2862
    %v2934 = vunpack.c.l.b16 %v2863
    %v2935 = vpack.c.b16 %v2920, %v2919
    %v2936 = vpack.c.b16 %v2922, %v2921
    %v2937 = vpack.c.b16 %v2924, %v2923
    %v2938 = vpack.c.b16 %v2926, %v2925
    %v2939 = vpack.c.b16 %v2928, %v2927
    %v2940 = vpack.c.b16 %v2930, %v2929
    %v2941 = vpack.c.b16 %v2932, %v2931
    %v2942 = vpack.c.b16 %v2934, %v2933
    %2951 = vmatprep.subr.bf16.mxu0 0
    %2952 = vmatpush1.bf16.msra.mxu0 %v2942
    %2953 = vmatprep.subr.bf16.mxu0 0
    %2954 = vmatpush1.bf16.msra.mxu0 %v2941
    %2955 = vmatprep.subr.bf16.mxu0 0
    %2956 = vmatpush1.bf16.msra.mxu0 %v2940
    %2957 = vmatprep.subr.bf16.mxu0 0
    %2958 = vmatpush1.bf16.msra.mxu0 %v2939
    %2959 = vmatprep.subr.bf16.mxu0 0
    %2960 = vmatpush1.bf16.msra.mxu0 %v2938
    %2961 = vmatprep.subr.bf16.mxu0 0
    %2962 = vmatpush1.bf16.msra.mxu0 %v2937
    %2963 = vmatprep.subr.bf16.mxu0 0
    %2964 = vmatpush1.bf16.msra.mxu0 %v2936
    %2965 = vmatprep.subr.bf16.mxu0 0
    %2966 = vmatpush1.bf16.msra.mxu0 %v2935
    %2967 = vmatprep.subr.bf16.mxu0 0
    %2968 = vmatpush2.bf16.msra.mxu0 0
    %2969 = vmatprep.subr.bf16.mxu0 0
    %2970 = vmatpush2.bf16.msra.mxu0 0
    %2971 = vmatprep.subr.bf16.mxu0 0
    %2972 = vmatpush2.bf16.msra.mxu0 0
    %2973 = vmatprep.subr.bf16.mxu0 0
    %2974 = vmatpush2.bf16.msra.mxu0 0
    %2975 = vmatprep.subr.bf16.mxu0 0
    %2976 = vmatpush2.bf16.msra.mxu0 0
    %2977 = vmatprep.subr.bf16.mxu0 0
    %2978 = vmatpush2.bf16.msra.mxu0 0
    %2979 = vmatprep.subr.bf16.mxu0 0
    %2980 = vmatpush2.bf16.msra.mxu0 0
    %2981 = vmatprep.subr.bf16.mxu0 0
    %2982 = vmatpush2.bf16.msra.mxu0 0
    %2983 = vmatprep.mubr.bf16.mxu0 0
    %2984 = vmatmul.mubr.bf16.gmra.mxu0 %v2901
    %v2985 = vpop.f32.mrf.mxu0
    %v2986 = vadd.f32 0.0, %v2985
    %v2987 = vpop.f32.mrf.mxu0
    %v2988 = vpop.f32.mrf.mxu0
    %v2989 = vpop.f32.mrf.mxu0
    %2990 = vdwg.mxu0
    %v3007 = vunpack.c.l.b16 %v2824
    %v3008 = vunpack.c.l.b16 %v2825
    %v3009 = vunpack.c.l.b16 %v2826
    %v3010 = vunpack.c.l.b16 %v2827
    %v3011 = vunpack.c.l.b16 %v2828
    %v3012 = vunpack.c.l.b16 %v2829
    %v3013 = vunpack.c.l.b16 %v2830
    %v3014 = vunpack.c.l.b16 %v2831
    %v3015 = vunpack.c.l.b16 %v2832
    %v3016 = vunpack.c.l.b16 %v2833
    %v3017 = vunpack.c.l.b16 %v2834
    %v3018 = vunpack.c.l.b16 %v2835
    %v3019 = vunpack.c.l.b16 %v2836
    %v3020 = vunpack.c.l.b16 %v2837
    %v3021 = vunpack.c.l.b16 %v2838
    %v3022 = vunpack.c.l.b16 %v2839
    %v3023 = vpack.c.b16 %v3008, %v3007
    %v3024 = vpack.c.b16 %v3010, %v3009
    %v3025 = vpack.c.b16 %v3012, %v3011
    %v3026 = vpack.c.b16 %v3014, %v3013
    %v3027 = vpack.c.b16 %v3016, %v3015
    %v3028 = vpack.c.b16 %v3018, %v3017
    %v3029 = vpack.c.b16 %v3020, %v3019
    %v3030 = vpack.c.b16 %v3022, %v3021
    %3039 = vmatprep.subr.bf16.mxu0 0
    %3040 = vmatpush1.bf16.msra.mxu0 %v3030
    %3041 = vmatprep.subr.bf16.mxu0 0
    %3042 = vmatpush1.bf16.msra.mxu0 %v3029
    %3043 = vmatprep.subr.bf16.mxu0 0
    %3044 = vmatpush1.bf16.msra.mxu0 %v3028
    %3045 = vmatprep.subr.bf16.mxu0 0
    %3046 = vmatpush1.bf16.msra.mxu0 %v3027
    %3047 = vmatprep.subr.bf16.mxu0 0
    %3048 = vmatpush1.bf16.msra.mxu0 %v3026
    %3049 = vmatprep.subr.bf16.mxu0 0
    %3050 = vmatpush1.bf16.msra.mxu0 %v3025
    %3051 = vmatprep.subr.bf16.mxu0 0
    %3052 = vmatpush1.bf16.msra.mxu0 %v3024
    %3053 = vmatprep.subr.bf16.mxu0 0
    %3054 = vmatpush1.bf16.msra.mxu0 %v3023
    %3055 = vmatprep.subr.bf16.mxu0 0
    %3056 = vmatpush2.bf16.msra.mxu0 0
    %3057 = vmatprep.subr.bf16.mxu0 0
    %3058 = vmatpush2.bf16.msra.mxu0 0
    %3059 = vmatprep.subr.bf16.mxu0 0
    %3060 = vmatpush2.bf16.msra.mxu0 0
    %3061 = vmatprep.subr.bf16.mxu0 0
    %3062 = vmatpush2.bf16.msra.mxu0 0
    %3063 = vmatprep.subr.bf16.mxu0 0
    %3064 = vmatpush2.bf16.msra.mxu0 0
    %3065 = vmatprep.subr.bf16.mxu0 0
    %3066 = vmatpush2.bf16.msra.mxu0 0
    %3067 = vmatprep.subr.bf16.mxu0 0
    %3068 = vmatpush2.bf16.msra.mxu0 0
    %3069 = vmatprep.subr.bf16.mxu0 0
    %3070 = vmatpush2.bf16.msra.mxu0 0
    %3071 = vmatprep.mubr.bf16.mxu0 0
    %3072 = vmatmul.mubr.bf16.gmra.mxu0 %v1435
    %v3073 = vpop.f32.mrf.mxu0
    %v3074 = vadd.f32 %v2986, %v3073
    %v3075 = vpop.f32.mrf.mxu0
    %v3076 = vpop.f32.mrf.mxu0
    %v3077 = vpop.f32.mrf.mxu0
    %3078 = vdwg.mxu0
    %v3079 = vld [vmem:[%s10] sm:$0x1]
    %v3081 = vlaneseq
    %v3082 = vshrl.u32 %v3081, 7
    %v3083 = vsub.s32 0, %v3082
    %v3084 = vrot.slane %v3079, %v3083
    %v3086 = vadd.f32 %v3074, %v3084
    %v3087 = vtanh.pop %v3086
    %v3088 = vpack.c.bf16 %v3087, %v3087
    %3089 = vst [vmem:[%s11] sm:$0xf] %v3088
    // Predicated region
    $region50: #{decoder_forward.2} parent=1 // pred_check
      _
    $region51: #{decoder_forward.2} parent=1 // pred_check_branch
      %3091 = sbr.rel (0) target = $region53
    $region52: #{decoder_forward.2} parent=1 // pred_region
      _
    $region53: #{decoder_forward.2} parent=1 // pred_fallthru
      _
    // Predicated region
    $region54: #{decoder_forward.2} parent=1 // pred_check
      _
    $region55: #{decoder_forward.2} parent=1 // pred_check_branch
      %3093 = sbr.rel (0) target = $region57
    $region56: #{decoder_forward.2} parent=1 // pred_region
      _
    $region57: #{decoder_forward.2} parent=1 // pred_fallthru
      _
    // Predicated region
    $region58: #{decoder_forward.2} parent=1 // pred_check
      _
    $region59: #{decoder_forward.2} parent=1 // pred_check_branch
      %3095 = sbr.rel (0) target = $region61
    $region60: #{decoder_forward.2} parent=1 // pred_region
      _
    $region61: #{decoder_forward.2} parent=1 // pred_fallthru
      _
    // Predicated region
    $region62: #{decoder_forward.2} parent=1 // pred_check
      _
    $region63: #{decoder_forward.2} parent=1 // pred_check_branch
      %3097 = sbr.rel (0) target = $region65
    $region64: #{decoder_forward.2} parent=1 // pred_region
      _
    $region65: #{decoder_forward.2} parent=1 // pred_fallthru
      _
    %3098 = vsyncpa [#allocation3], 1

</llo_original>
